<compile_context>
chip_gen: v5e
topology: v5e:2x2
jax: 0.10.0
libtpu: 0.0.40
codegen_flags: <defaults>
</compile_context>

<pallas_src>
import jax
import jax.numpy as jnp
from jax import lax
from jax.experimental import pallas as pl
from jax.experimental.pallas import tpu as pltpu


# -----------------------------------------------------------------------------
# Fused kernel: depthwise conv 3x3 -> GELU -> BN(eval) -> depthwise conv 3x3
# -----------------------------------------------------------------------------
def dwconv_kernel(x_ref, p_ref, o_ref, pad_ref):
    # x_ref  : (1, H, W, C) input block (one batch element, channels-last)
    # p_ref  : (22, C) packed per-channel params:
    #          rows 0:9  conv1 taps (dy*3+dx), row 9  conv1 bias,
    #          row 10    BN scale,             row 11 BN shift,
    #          rows 12:21 conv2 taps,          row 21 conv2 bias
    # o_ref  : (1, H, W, C) output block
    # pad_ref: VMEM scratch (H+2, W+2, C) f32 zero-padded slab
    _, H, W, C = o_ref.shape
    p = p_ref[...].astype(jnp.float32)

    def prow(i):  # (1, 1, C): lane-aligned broadcast of one parameter row
        return p[i:i + 1, :].reshape(1, 1, C)

    # Zero-padded input slab in VMEM (borders zero, interior = x).
    pad_ref[...] = jnp.zeros((H + 2, W + 2, C), jnp.float32)
    pad_ref[1:H + 1, 1:W + 1, :] = x_ref[0].astype(jnp.float32)

    def dw3x3(src, tap0, bias_row):
        # 9 shifted multiply-adds on the VPU; channels stay on the lane axis.
        acc = jnp.zeros((H, W, C), jnp.float32)
        for dy in range(3):
            for dx in range(3):
                acc = acc + src[dy:dy + H, dx:dx + W, :] * prow(tap0 + dy * 3 + dx)
        return acc + prow(bias_row)

    # Depthwise conv #1 + bias.
    y = dw3x3(pad_ref[...], 0, 9)

    # Exact (erf) GELU, matching torch.nn.GELU(), then eval-mode BatchNorm
    # folded into a per-channel scale/shift.
    y = 0.5 * y * (1.0 + lax.erf(y * 0.7071067811865476))
    y = y * prow(10) + prow(11)

    # Reuse the scratch slab: interior <- BN output, borders stay zero.
    pad_ref[1:H + 1, 1:W + 1, :] = y

    # Depthwise conv #2 + bias.
    out = dw3x3(pad_ref[...], 12, 21)
    o_ref[0] = out.astype(o_ref.dtype)


def dwconv_forward(x, packed_params, H, W):
    """x: (B, N, C) with N == H*W; packed_params: (22, C). Returns (B, N, C)."""
    B, N, C = x.shape
    assert N == H * W
    x4 = x.reshape(B, H, W, C)  # pure reshape of the token layout, no transpose
    out4 = pl.pallas_call(
        dwconv_kernel,
        out_shape=jax.ShapeDtypeStruct((B, H, W, C), x.dtype),
        grid_spec=pltpu.PrefetchScalarGridSpec(
            num_scalar_prefetch=0,
            grid=(B,),
            in_specs=[
                pl.BlockSpec((1, H, W, C), lambda b: (b, 0, 0, 0)),
                pl.BlockSpec((22, C), lambda b: (0, 0)),
            ],
            out_specs=pl.BlockSpec((1, H, W, C), lambda b: (b, 0, 0, 0)),
            scratch_shapes=[pltpu.VMEM((H + 2, W + 2, C), jnp.float32)],
        ),
        compiler_params=pltpu.CompilerParams(
            dimension_semantics=("parallel",)),
    )(x4, packed_params)
    return out4.reshape(B, N, C)


# -----------------------------------------------------------------------------
# Module (parameters + forward glue), eval-mode semantics
# -----------------------------------------------------------------------------
class DWConv:
    def __init__(self, in_features, out_features=None, kernel_size=3,
                 eps=1e-5, key=None):
        out_features = out_features or in_features
        assert out_features == in_features, "depthwise path requires out == in"
        assert kernel_size == 3
        C = in_features
        self.C, self.eps = C, eps
        key = key if key is not None else jax.random.PRNGKey(0)
        ks = jax.random.split(key, 8)
        bound = 1.0 / (kernel_size * kernel_size) ** 0.5  # fan_in = 1*3*3
        u = lambda k, s: jax.random.uniform(k, s, jnp.float32, -bound, bound)
        self.w1, self.b1 = u(ks[0], (C, 3, 3)), u(ks[1], (C,))
        self.w2, self.b2 = u(ks[2], (C, 3, 3)), u(ks[3], (C,))
        # BatchNorm2d parameters / running statistics (eval mode).
        self.gamma = 1.0 + 0.1 * jax.random.normal(ks[4], (C,), jnp.float32)
        self.beta = 0.1 * jax.random.normal(ks[5], (C,), jnp.float32)
        self.mean = 0.1 * jax.random.normal(ks[6], (C,), jnp.float32)
        self.var = jax.random.uniform(ks[7], (C,), jnp.float32, 0.5, 1.5)
        # TODO(synk): training-mode BatchNorm (batch statistics) is not
        # implemented; running stats are folded into the scale/shift below.
        self.params = self._pack()

    def _pack(self):
        C = self.C
        s = self.gamma / jnp.sqrt(self.var + self.eps)
        t = self.beta - self.mean * s
        return jnp.concatenate([
            self.w1.reshape(C, 9).T,   # rows 0:9   conv1 taps (dy*3+dx, c)
            self.b1[None, :],          # row 9
            s[None, :],                # row 10
            t[None, :],                # row 11
            self.w2.reshape(C, 9).T,   # rows 12:21 conv2 taps
            self.b2[None, :],          # row 21
        ], axis=0)                     # (22, C)

    def __call__(self, x, H, W):
        return dwconv_forward(x, self.params, H, W)


# -----------------------------------------------------------------------------
# Reference (plain JAX / XLA) for verification
# -----------------------------------------------------------------------------
def reference_forward(mod, x, H, W):
    B, N, C = x.shape
    x4 = x.reshape(B, H, W, C)
    dn = lax.conv_dimension_numbers(x4.shape, (3, 3, 1, C),
                                    ("NHWC", "HWIO", "NHWC"))
    to_hwio = lambda w: jnp.transpose(w, (1, 2, 0))[:, :, None, :]  # (3,3,1,C)
    y = lax.conv_general_dilated(x4, to_hwio(mod.w1), (1, 1), "SAME",
                                 dimension_numbers=dn, feature_group_count=C)
    y = y + mod.b1
    y = jax.nn.gelu(y, approximate=False)
    s = mod.gamma / jnp.sqrt(mod.var + mod.eps)
    y = y * s + (mod.beta - mod.mean * s)
    y = lax.conv_general_dilated(y, to_hwio(mod.w2), (1, 1), "SAME",
                                 dimension_numbers=dn, feature_group_count=C)
    y = y + mod.b2
    return y.reshape(B, N, C)


if __name__ == "__main__":
    B, H, W = 2, 16, 16
    N = H * W            # 256 tokens
    C = 128              # channels -> one full 128-lane vreg row

    key = jax.random.PRNGKey(0)
    k_param, k_x = jax.random.split(key)
    x = jax.random.normal(k_x, (B, N, C), jnp.float32)

    mod = DWConv(C, key=k_param)
    out = jax.block_until_ready(mod(x, H, W))

    ref = reference_forward(mod, x, H, W)
    assert out.shape == (B, N, C)
    assert jnp.allclose(out, ref, atol=1e-4, rtol=1e-4), (
        float(jnp.max(jnp.abs(out - ref))))
    print("KERNEL_OK")
</pallas_src>

<mosaic_0001>
module attributes {stable_mosaic.version = 11 : i64} {
  func.func @dwconv_kernel(%arg0: i32, %arg1: memref<1x16x16x128xf32, #tpu.memory_space<vmem>>, %arg2: memref<22x128xf32, #tpu.memory_space<vmem>>, %arg3: memref<1x16x16x128xf32, #tpu.memory_space<vmem>>, %arg4: memref<18x18x128xf32, #tpu.memory_space<vmem>>) attributes {dimension_semantics = [#tpu.dimension_semantics<parallel>], iteration_bounds = array<i64: 2>, scalar_prefetch = 0 : i64, scratch_operands = 1 : i64, tpu.core_type = #tpu.core_type<tc>, window_params = [{transform_indices = @transform_0, window_bounds = array<i64: 1, 16, 16, 128>}, {pipeline_mode = #tpu.pipeline_mode<synchronous>, transform_indices = @transform_1, window_bounds = array<i64: 22, 128>}, {transform_indices = @transform_2, window_bounds = array<i64: 1, 16, 16, 128>}]} {
    %c0 = arith.constant 0 : index
    %c0_0 = arith.constant 0 : index
    %0 = vector.load %arg2[%c0, %c0_0] : memref<22x128xf32, #tpu.memory_space<vmem>>, vector<22x128xf32>
    %cst = arith.constant 0.000000e+00 : f32
    %1 = vector.broadcast %cst : f32 to vector<18x18x128xf32>
    %c0_1 = arith.constant 0 : index
    %c0_2 = arith.constant 0 : index
    %c0_3 = arith.constant 0 : index
    %2 = vector.load %arg4[%c0_1, %c0_2, %c0_3] : memref<18x18x128xf32, #tpu.memory_space<vmem>>, vector<18x18x128xf32>
    tpu.vector_store %arg4[%c0_1, %c0_2, %c0_3], %1 {strides = array<i32>} : memref<18x18x128xf32, #tpu.memory_space<vmem>>, vector<18x18x128xf32>,
    %c0_4 = arith.constant 0 : index
    %c0_5 = arith.constant 0 : index
    %c0_6 = arith.constant 0 : index
    %c0_7 = arith.constant 0 : index
    %3 = vector.load %arg1[%c0_4, %c0_5, %c0_6, %c0_7] : memref<1x16x16x128xf32, #tpu.memory_space<vmem>>, vector<1x16x16x128xf32>
    %4 = vector.shape_cast %3 : vector<1x16x16x128xf32> to vector<16x16x128xf32>
    %c1 = arith.constant 1 : index
    %c1_8 = arith.constant 1 : index
    %c0_9 = arith.constant 0 : index
    %5 = vector.load %arg4[%c1, %c1_8, %c0_9] : memref<18x18x128xf32, #tpu.memory_space<vmem>>, vector<16x16x128xf32>
    tpu.vector_store %arg4[%c1, %c1_8, %c0_9], %4 {strides = array<i32>} : memref<18x18x128xf32, #tpu.memory_space<vmem>>, vector<16x16x128xf32>,
    %c0_10 = arith.constant 0 : index
    %c0_11 = arith.constant 0 : index
    %c0_12 = arith.constant 0 : index
    %6 = vector.load %arg4[%c0_10, %c0_11, %c0_12] : memref<18x18x128xf32, #tpu.memory_space<vmem>>, vector<18x18x128xf32>
    %cst_13 = arith.constant 0.000000e+00 : f32
    %7 = vector.broadcast %cst_13 : f32 to vector<16x16x128xf32>
    %8 = vector.extract_strided_slice %6 {offsets = [0, 0, 0], sizes = [16, 16, 128], strides = [1, 1, 1]} : vector<18x18x128xf32> to vector<16x16x128xf32>
    %9 = vector.extract_strided_slice %0 {offsets = [0, 0], sizes = [1, 128], strides = [1, 1]} : vector<22x128xf32> to vector<1x128xf32>
    %10 = vector.shape_cast %9 : vector<1x128xf32> to vector<1x1x128xf32>
    %11 = vector.broadcast %10 : vector<1x1x128xf32> to vector<16x16x128xf32>
    %12 = arith.mulf %8, %11 : vector<16x16x128xf32>
    %13 = arith.addf %7, %12 : vector<16x16x128xf32>
    %14 = vector.extract_strided_slice %6 {offsets = [0, 1, 0], sizes = [16, 16, 128], strides = [1, 1, 1]} : vector<18x18x128xf32> to vector<16x16x128xf32>
    %15 = vector.extract_strided_slice %0 {offsets = [1, 0], sizes = [1, 128], strides = [1, 1]} : vector<22x128xf32> to vector<1x128xf32>
    %16 = vector.shape_cast %15 : vector<1x128xf32> to vector<1x1x128xf32>
    %17 = vector.broadcast %16 : vector<1x1x128xf32> to vector<16x16x128xf32>
    %18 = arith.mulf %14, %17 : vector<16x16x128xf32>
    %19 = arith.addf %13, %18 : vector<16x16x128xf32>
    %20 = vector.extract_strided_slice %6 {offsets = [0, 2, 0], sizes = [16, 16, 128], strides = [1, 1, 1]} : vector<18x18x128xf32> to vector<16x16x128xf32>
    %21 = vector.extract_strided_slice %0 {offsets = [2, 0], sizes = [1, 128], strides = [1, 1]} : vector<22x128xf32> to vector<1x128xf32>
    %22 = vector.shape_cast %21 : vector<1x128xf32> to vector<1x1x128xf32>
    %23 = vector.broadcast %22 : vector<1x1x128xf32> to vector<16x16x128xf32>
    %24 = arith.mulf %20, %23 : vector<16x16x128xf32>
    %25 = arith.addf %19, %24 : vector<16x16x128xf32>
    %26 = vector.extract_strided_slice %6 {offsets = [1, 0, 0], sizes = [16, 16, 128], strides = [1, 1, 1]} : vector<18x18x128xf32> to vector<16x16x128xf32>
    %27 = vector.extract_strided_slice %0 {offsets = [3, 0], sizes = [1, 128], strides = [1, 1]} : vector<22x128xf32> to vector<1x128xf32>
    %28 = vector.shape_cast %27 : vector<1x128xf32> to vector<1x1x128xf32>
    %29 = vector.broadcast %28 : vector<1x1x128xf32> to vector<16x16x128xf32>
    %30 = arith.mulf %26, %29 : vector<16x16x128xf32>
    %31 = arith.addf %25, %30 : vector<16x16x128xf32>
    %32 = vector.extract_strided_slice %6 {offsets = [1, 1, 0], sizes = [16, 16, 128], strides = [1, 1, 1]} : vector<18x18x128xf32> to vector<16x16x128xf32>
    %33 = vector.extract_strided_slice %0 {offsets = [4, 0], sizes = [1, 128], strides = [1, 1]} : vector<22x128xf32> to vector<1x128xf32>
    %34 = vector.shape_cast %33 : vector<1x128xf32> to vector<1x1x128xf32>
    %35 = vector.broadcast %34 : vector<1x1x128xf32> to vector<16x16x128xf32>
    %36 = arith.mulf %32, %35 : vector<16x16x128xf32>
    %37 = arith.addf %31, %36 : vector<16x16x128xf32>
    %38 = vector.extract_strided_slice %6 {offsets = [1, 2, 0], sizes = [16, 16, 128], strides = [1, 1, 1]} : vector<18x18x128xf32> to vector<16x16x128xf32>
    %39 = vector.extract_strided_slice %0 {offsets = [5, 0], sizes = [1, 128], strides = [1, 1]} : vector<22x128xf32> to vector<1x128xf32>
    %40 = vector.shape_cast %39 : vector<1x128xf32> to vector<1x1x128xf32>
    %41 = vector.broadcast %40 : vector<1x1x128xf32> to vector<16x16x128xf32>
    %42 = arith.mulf %38, %41 : vector<16x16x128xf32>
    %43 = arith.addf %37, %42 : vector<16x16x128xf32>
    %44 = vector.extract_strided_slice %6 {offsets = [2, 0, 0], sizes = [16, 16, 128], strides = [1, 1, 1]} : vector<18x18x128xf32> to vector<16x16x128xf32>
    %45 = vector.extract_strided_slice %0 {offsets = [6, 0], sizes = [1, 128], strides = [1, 1]} : vector<22x128xf32> to vector<1x128xf32>
    %46 = vector.shape_cast %45 : vector<1x128xf32> to vector<1x1x128xf32>
    %47 = vector.broadcast %46 : vector<1x1x128xf32> to vector<16x16x128xf32>
    %48 = arith.mulf %44, %47 : vector<16x16x128xf32>
    %49 = arith.addf %43, %48 : vector<16x16x128xf32>
    %50 = vector.extract_strided_slice %6 {offsets = [2, 1, 0], sizes = [16, 16, 128], strides = [1, 1, 1]} : vector<18x18x128xf32> to vector<16x16x128xf32>
    %51 = vector.extract_strided_slice %0 {offsets = [7, 0], sizes = [1, 128], strides = [1, 1]} : vector<22x128xf32> to vector<1x128xf32>
    %52 = vector.shape_cast %51 : vector<1x128xf32> to vector<1x1x128xf32>
    %53 = vector.broadcast %52 : vector<1x1x128xf32> to vector<16x16x128xf32>
    %54 = arith.mulf %50, %53 : vector<16x16x128xf32>
    %55 = arith.addf %49, %54 : vector<16x16x128xf32>
    %56 = vector.extract_strided_slice %6 {offsets = [2, 2, 0], sizes = [16, 16, 128], strides = [1, 1, 1]} : vector<18x18x128xf32> to vector<16x16x128xf32>
    %57 = vector.extract_strided_slice %0 {offsets = [8, 0], sizes = [1, 128], strides = [1, 1]} : vector<22x128xf32> to vector<1x128xf32>
    %58 = vector.shape_cast %57 : vector<1x128xf32> to vector<1x1x128xf32>
    %59 = vector.broadcast %58 : vector<1x1x128xf32> to vector<16x16x128xf32>
    %60 = arith.mulf %56, %59 : vector<16x16x128xf32>
    %61 = arith.addf %55, %60 : vector<16x16x128xf32>
    %62 = vector.extract_strided_slice %0 {offsets = [9, 0], sizes = [1, 128], strides = [1, 1]} : vector<22x128xf32> to vector<1x128xf32>
    %63 = vector.shape_cast %62 : vector<1x128xf32> to vector<1x1x128xf32>
    %64 = vector.broadcast %63 : vector<1x1x128xf32> to vector<16x16x128xf32>
    %65 = arith.addf %61, %64 : vector<16x16x128xf32>
    %cst_14 = arith.constant 5.000000e-01 : f32
    %66 = vector.broadcast %cst_14 : f32 to vector<16x16x128xf32>
    %67 = arith.mulf %66, %65 : vector<16x16x128xf32>
    %cst_15 = arith.constant 0.707106769 : f32
    %68 = vector.broadcast %cst_15 : f32 to vector<16x16x128xf32>
    %69 = arith.mulf %65, %68 : vector<16x16x128xf32>
    %70 = math.erf %69 : vector<16x16x128xf32>
    %cst_16 = arith.constant 1.000000e+00 : f32
    %71 = vector.broadcast %cst_16 : f32 to vector<16x16x128xf32>
    %72 = arith.addf %71, %70 : vector<16x16x128xf32>
    %73 = arith.mulf %67, %72 : vector<16x16x128xf32>
    %74 = vector.extract_strided_slice %0 {offsets = [10, 0], sizes = [1, 128], strides = [1, 1]} : vector<22x128xf32> to vector<1x128xf32>
    %75 = vector.shape_cast %74 : vector<1x128xf32> to vector<1x1x128xf32>
    %76 = vector.broadcast %75 : vector<1x1x128xf32> to vector<16x16x128xf32>
    %77 = arith.mulf %73, %76 : vector<16x16x128xf32>
    %78 = vector.extract_strided_slice %0 {offsets = [11, 0], sizes = [1, 128], strides = [1, 1]} : vector<22x128xf32> to vector<1x128xf32>
    %79 = vector.shape_cast %78 : vector<1x128xf32> to vector<1x1x128xf32>
    %80 = vector.broadcast %79 : vector<1x1x128xf32> to vector<16x16x128xf32>
    %81 = arith.addf %77, %80 : vector<16x16x128xf32>
    %c1_17 = arith.constant 1 : index
    %c1_18 = arith.constant 1 : index
    %c0_19 = arith.constant 0 : index
    %82 = vector.load %arg4[%c1_17, %c1_18, %c0_19] : memref<18x18x128xf32, #tpu.memory_space<vmem>>, vector<16x16x128xf32>
    tpu.vector_store %arg4[%c1_17, %c1_18, %c0_19], %81 {strides = array<i32>} : memref<18x18x128xf32, #tpu.memory_space<vmem>>, vector<16x16x128xf32>,
    %c0_20 = arith.constant 0 : index
    %c0_21 = arith.constant 0 : index
    %c0_22 = arith.constant 0 : index
    %83 = vector.load %arg4[%c0_20, %c0_21, %c0_22] : memref<18x18x128xf32, #tpu.memory_space<vmem>>, vector<18x18x128xf32>
    %cst_23 = arith.constant 0.000000e+00 : f32
    %84 = vector.broadcast %cst_23 : f32 to vector<16x16x128xf32>
    %85 = vector.extract_strided_slice %83 {offsets = [0, 0, 0], sizes = [16, 16, 128], strides = [1, 1, 1]} : vector<18x18x128xf32> to vector<16x16x128xf32>
    %86 = vector.extract_strided_slice %0 {offsets = [12, 0], sizes = [1, 128], strides = [1, 1]} : vector<22x128xf32> to vector<1x128xf32>
    %87 = vector.shape_cast %86 : vector<1x128xf32> to vector<1x1x128xf32>
    %88 = vector.broadcast %87 : vector<1x1x128xf32> to vector<16x16x128xf32>
    %89 = arith.mulf %85, %88 : vector<16x16x128xf32>
    %90 = arith.addf %84, %89 : vector<16x16x128xf32>
    %91 = vector.extract_strided_slice %83 {offsets = [0, 1, 0], sizes = [16, 16, 128], strides = [1, 1, 1]} : vector<18x18x128xf32> to vector<16x16x128xf32>
    %92 = vector.extract_strided_slice %0 {offsets = [13, 0], sizes = [1, 128], strides = [1, 1]} : vector<22x128xf32> to vector<1x128xf32>
    %93 = vector.shape_cast %92 : vector<1x128xf32> to vector<1x1x128xf32>
    %94 = vector.broadcast %93 : vector<1x1x128xf32> to vector<16x16x128xf32>
    %95 = arith.mulf %91, %94 : vector<16x16x128xf32>
    %96 = arith.addf %90, %95 : vector<16x16x128xf32>
    %97 = vector.extract_strided_slice %83 {offsets = [0, 2, 0], sizes = [16, 16, 128], strides = [1, 1, 1]} : vector<18x18x128xf32> to vector<16x16x128xf32>
    %98 = vector.extract_strided_slice %0 {offsets = [14, 0], sizes = [1, 128], strides = [1, 1]} : vector<22x128xf32> to vector<1x128xf32>
    %99 = vector.shape_cast %98 : vector<1x128xf32> to vector<1x1x128xf32>
    %100 = vector.broadcast %99 : vector<1x1x128xf32> to vector<16x16x128xf32>
    %101 = arith.mulf %97, %100 : vector<16x16x128xf32>
    %102 = arith.addf %96, %101 : vector<16x16x128xf32>
    %103 = vector.extract_strided_slice %83 {offsets = [1, 0, 0], sizes = [16, 16, 128], strides = [1, 1, 1]} : vector<18x18x128xf32> to vector<16x16x128xf32>
    %104 = vector.extract_strided_slice %0 {offsets = [15, 0], sizes = [1, 128], strides = [1, 1]} : vector<22x128xf32> to vector<1x128xf32>
    %105 = vector.shape_cast %104 : vector<1x128xf32> to vector<1x1x128xf32>
    %106 = vector.broadcast %105 : vector<1x1x128xf32> to vector<16x16x128xf32>
    %107 = arith.mulf %103, %106 : vector<16x16x128xf32>
    %108 = arith.addf %102, %107 : vector<16x16x128xf32>
    %109 = vector.extract_strided_slice %83 {offsets = [1, 1, 0], sizes = [16, 16, 128], strides = [1, 1, 1]} : vector<18x18x128xf32> to vector<16x16x128xf32>
    %110 = vector.extract_strided_slice %0 {offsets = [16, 0], sizes = [1, 128], strides = [1, 1]} : vector<22x128xf32> to vector<1x128xf32>
    %111 = vector.shape_cast %110 : vector<1x128xf32> to vector<1x1x128xf32>
    %112 = vector.broadcast %111 : vector<1x1x128xf32> to vector<16x16x128xf32>
    %113 = arith.mulf %109, %112 : vector<16x16x128xf32>
    %114 = arith.addf %108, %113 : vector<16x16x128xf32>
    %115 = vector.extract_strided_slice %83 {offsets = [1, 2, 0], sizes = [16, 16, 128], strides = [1, 1, 1]} : vector<18x18x128xf32> to vector<16x16x128xf32>
    %116 = vector.extract_strided_slice %0 {offsets = [17, 0], sizes = [1, 128], strides = [1, 1]} : vector<22x128xf32> to vector<1x128xf32>
    %117 = vector.shape_cast %116 : vector<1x128xf32> to vector<1x1x128xf32>
    %118 = vector.broadcast %117 : vector<1x1x128xf32> to vector<16x16x128xf32>
    %119 = arith.mulf %115, %118 : vector<16x16x128xf32>
    %120 = arith.addf %114, %119 : vector<16x16x128xf32>
    %121 = vector.extract_strided_slice %83 {offsets = [2, 0, 0], sizes = [16, 16, 128], strides = [1, 1, 1]} : vector<18x18x128xf32> to vector<16x16x128xf32>
    %122 = vector.extract_strided_slice %0 {offsets = [18, 0], sizes = [1, 128], strides = [1, 1]} : vector<22x128xf32> to vector<1x128xf32>
    %123 = vector.shape_cast %122 : vector<1x128xf32> to vector<1x1x128xf32>
    %124 = vector.broadcast %123 : vector<1x1x128xf32> to vector<16x16x128xf32>
    %125 = arith.mulf %121, %124 : vector<16x16x128xf32>
    %126 = arith.addf %120, %125 : vector<16x16x128xf32>
    %127 = vector.extract_strided_slice %83 {offsets = [2, 1, 0], sizes = [16, 16, 128], strides = [1, 1, 1]} : vector<18x18x128xf32> to vector<16x16x128xf32>
    %128 = vector.extract_strided_slice %0 {offsets = [19, 0], sizes = [1, 128], strides = [1, 1]} : vector<22x128xf32> to vector<1x128xf32>
    %129 = vector.shape_cast %128 : vector<1x128xf32> to vector<1x1x128xf32>
    %130 = vector.broadcast %129 : vector<1x1x128xf32> to vector<16x16x128xf32>
    %131 = arith.mulf %127, %130 : vector<16x16x128xf32>
    %132 = arith.addf %126, %131 : vector<16x16x128xf32>
    %133 = vector.extract_strided_slice %83 {offsets = [2, 2, 0], sizes = [16, 16, 128], strides = [1, 1, 1]} : vector<18x18x128xf32> to vector<16x16x128xf32>
    %134 = vector.extract_strided_slice %0 {offsets = [20, 0], sizes = [1, 128], strides = [1, 1]} : vector<22x128xf32> to vector<1x128xf32>
    %135 = vector.shape_cast %134 : vector<1x128xf32> to vector<1x1x128xf32>
    %136 = vector.broadcast %135 : vector<1x1x128xf32> to vector<16x16x128xf32>
    %137 = arith.mulf %133, %136 : vector<16x16x128xf32>
    %138 = arith.addf %132, %137 : vector<16x16x128xf32>
    %139 = vector.extract_strided_slice %0 {offsets = [21, 0], sizes = [1, 128], strides = [1, 1]} : vector<22x128xf32> to vector<1x128xf32>
    %140 = vector.shape_cast %139 : vector<1x128xf32> to vector<1x1x128xf32>
    %141 = vector.broadcast %140 : vector<1x1x128xf32> to vector<16x16x128xf32>
    %142 = arith.addf %138, %141 : vector<16x16x128xf32>
    %c0_24 = arith.constant 0 : index
    %c0_25 = arith.constant 0 : index
    %c0_26 = arith.constant 0 : index
    %c0_27 = arith.constant 0 : index
    %143 = vector.load %arg3[%c0_24, %c0_25, %c0_26, %c0_27] : memref<1x16x16x128xf32, #tpu.memory_space<vmem>>, vector<1x16x16x128xf32>
    %144 = vector.shape_cast %143 : vector<1x16x16x128xf32> to vector<16x16x128xf32>
    %145 = vector.shape_cast %142 : vector<16x16x128xf32> to vector<1x16x16x128xf32>
    tpu.vector_store %arg3[%c0_24, %c0_25, %c0_26, %c0_27], %145 {strides = array<i32>} : memref<1x16x16x128xf32, #tpu.memory_space<vmem>>, vector<1x16x16x128xf32>,
    return
  }
  func.func @transform_0(%arg0: i32) -> (i32, i32, i32, i32) {
    %c0_i32 = arith.constant 0 : i32
    %c0_i32_0 = arith.constant 0 : i32
    %c0_i32_1 = arith.constant 0 : i32
    %c0_i32_2 = arith.constant 0 : i32
    return %arg0, %c0_i32, %c0_i32_0, %c0_i32_1 : i32, i32, i32, i32
  }
  func.func @transform_1(%arg0: i32) -> (i32, i32) {
    %c0_i32 = arith.constant 0 : i32
    %c0_i32_0 = arith.constant 0 : i32
    %c0_i32_1 = arith.constant 0 : i32
    return %c0_i32, %c0_i32_0 : i32, i32
  }
  func.func @transform_2(%arg0: i32) -> (i32, i32, i32, i32) {
    %c0_i32 = arith.constant 0 : i32
    %c0_i32_0 = arith.constant 0 : i32
    %c0_i32_1 = arith.constant 0 : i32
    %c0_i32_2 = arith.constant 0 : i32
    return %arg0, %c0_i32, %c0_i32_0, %c0_i32_1 : i32, i32, i32, i32
  }
}

</mosaic_0001>

<llo_original>
// kernel: tpu_custom_call.1
$region0: #{tpu_custom_call.1}
  #allocation0 [shape = 'u32[]', space=smem, size = 0x4, offset = 0x4, fixed_abs, tag = 'smem constant byte address 0x4 - core index']
  #allocation1 [shape = 'u32[72,128]{1,0:T(1,128)}', space=vmem, size = 0x9000, scoped, tag = 'internal scratch']
  #allocation2 [shape = 'f32[18,18,128]{2,1,0:T(8,128)}', space=vmem, size = 0x36000, scoped, tag = 'scratch operand']
  %s0 = inlined_call_operand.hbm [shape: f32[2,16,16,128], index: 0, kind: input, shape index: {}]
  %s1 = inlined_call_operand.hbm [shape: f32[22,128], index: 1, kind: input, shape index: {}]
  %s2 = inlined_call_operand.hbm [shape: f32[2,16,16,128], index: 2, kind: output, shape index: {}]
  %s3 = sld [smem:[#allocation0]]
  $region49: #{tpu_custom_call.1} parent=0
    _
  %s5 = ssub.s32 1, %s3
  %s6 = scalar_select 0, %s5, %s3
  $region1: #{tpu_custom_call.1} parent=0
    #allocation3 [shape = 'u8[262144]{0}', space=vmem, size = 0x40000, scoped, tag = 'input window, operand 0']
    #allocation4 [shape = 's32[2]{0}', space=sflag, size = 0x8, scoped, tag = 'scoped memory for tpu_custom_call.1']
    #allocation5 [shape = 's32[2]{0}', space=sflag, size = 0x8, scoped, tag = 'scoped memory for tpu_custom_call.1']
    #allocation6 [shape = 'u8[12288]{0}', space=vmem, size = 0x3000, scoped, tag = 'input window, operand 1, single buffered']
    #allocation7 [shape = 's32[1]{0}', space=sflag, size = 0x4, scoped, tag = 'scoped memory for tpu_custom_call.1']
    #allocation8 [shape = 'u8[262144]{0}', space=vmem, size = 0x40000, scoped, tag = 'output window, operand 0']
    %7 = vsyncpa [#allocation4], 0
    %s8 = scalar_lea.sflag [#allocation4], 1
    %9 = vsyncpa %s8, 0
    %10 = vsyncpa [#allocation7], 0
    %11 = vsyncpa [#allocation5], 0
    %s12 = scalar_lea.sflag [#allocation5], 1
    %13 = vsyncpa %s12, 0
    loop: start=0, step=1, limit=4
    $region2: #{tpu_custom_call.1} parent=1 // loop_pre_header
      _
    $region3: #{tpu_custom_call.1} parent=1 // loop_header
      %s15 = sphi 0, %s19
      %p16 = scmp.ge.s32.totalorder %s15, 4
      %s25 = sphi 0, %s27
      %s28 = sphi 0, %s25
      %s29 = sphi 0, %s28
      %s45 = sphi 0, %s29
      %s49 = sphi 0, %s49
      %s51 = sphi 0, %s49
      %s52 = sphi 0, %s51
      %s66 = sphi 0, %s52
      %s72 = sphi 0, %s74
      %s75 = sphi 0, %s72
      %s76 = sphi 0, %s75
      %s92 = sphi 0, %s76
    $region4: #{tpu_custom_call.1} parent=1 // loop_header_branch
      %18 = sbr.rel (%p16) target = $region8
    $region5: #{tpu_custom_call.1} parent=1 // loop_body
      %s20 = ssub.s32 %s15, 1
      %s21 = ssub.s32 %s15, 2
      %s22 = sadd.s32 %s15, 1
      %s23 = ssub.s32 %s15, %s22
      %p24 = scmp.eq.s32.totalorder %s23, 0
      %s26 = sadd.s32 %s25, 1
      %s27 = scalar_select %p24, %s25, %s26
      %p30 = pneg %p24
      %p31 = scmp.eq.s32.totalorder %s15, 1
      %p32 = por %p30, %p31
      %p33 = scmp.ne.s32.totalorder %s25, %s28
      %p34 = scmp.eq.s32.totalorder %s15, 0
      %p35 = por %p33, %p34
      %p36 = scmp.ne.s32.totalorder %s25, %s28
      %p37 = scmp.eq.s32.totalorder %s20, 1
      %p38 = por %p36, %p37
      %p39 = scmp.ne.s32.totalorder %s28, %s29
      %p40 = scmp.eq.s32.totalorder %s20, 0
      %p41 = por %p39, %p40
      %p42 = scmp.ne.s32.totalorder %s28, %s29
      %p43 = scmp.eq.s32.totalorder %s21, 1
      %p44 = por %p42, %p43
      %p46 = scmp.ne.s32.totalorder %s29, %s45
      %p47 = scmp.eq.s32.totalorder %s21, 0
      %p48 = por %p46, %p47
      %s50 = sadd.s32 %s49, 1
      %p53 = scmp.eq.s32.totalorder %s15, 1
      %p54 = scmp.ne.s32.totalorder %s49, %s51
      %p55 = scmp.eq.s32.totalorder %s15, 0
      %p56 = por %p54, %p55
      %p57 = scmp.ne.s32.totalorder %s49, %s51
      %p58 = scmp.eq.s32.totalorder %s20, 1
      %p59 = por %p57, %p58
      %p60 = scmp.ne.s32.totalorder %s51, %s52
      %p61 = scmp.eq.s32.totalorder %s20, 0
      %p62 = por %p60, %p61
      %p63 = scmp.ne.s32.totalorder %s51, %s52
      %p64 = scmp.eq.s32.totalorder %s21, 1
      %p65 = por %p63, %p64
      %p67 = scmp.ne.s32.totalorder %s52, %s66
      %p68 = scmp.eq.s32.totalorder %s21, 0
      %p69 = por %p67, %p68
      %s70 = ssub.s32 %s15, %s22
      %p71 = scmp.eq.s32.totalorder %s70, 0
      %s73 = sadd.s32 %s72, 1
      %s74 = scalar_select %p71, %s72, %s73
      %p77 = pneg %p71
      %p78 = scmp.eq.s32.totalorder %s15, 1
      %p79 = por %p77, %p78
      %p80 = scmp.ne.s32.totalorder %s72, %s75
      %p81 = scmp.eq.s32.totalorder %s15, 0
      %p82 = por %p80, %p81
      %p83 = scmp.ne.s32.totalorder %s72, %s75
      %p84 = scmp.eq.s32.totalorder %s20, 1
      %p85 = por %p83, %p84
      %p86 = scmp.ne.s32.totalorder %s75, %s76
      %p87 = scmp.eq.s32.totalorder %s20, 0
      %p88 = por %p86, %p87
      %p89 = scmp.ne.s32.totalorder %s75, %s76
      %p90 = scmp.eq.s32.totalorder %s21, 1
      %p91 = por %p89, %p90
      %p93 = scmp.ne.s32.totalorder %s76, %s92
      %p94 = scmp.eq.s32.totalorder %s21, 0
      %p95 = por %p93, %p94
      %p96 = scmp.le.s32.totalorder 1, %s15
      %p97 = scmp.lt.s32.totalorder %s15, 3
      %p98 = pnand %p96, %p97
      %p99 = pneg %p98
      // Predicated region
      $region9: #{tpu_custom_call.1} parent=5 // pred_check
        _
      $region10: #{tpu_custom_call.1} parent=5 // pred_check_branch
        %101 = sbr.rel (%p98) target = $region12
      $region11: #{tpu_custom_call.1} parent=5 // pred_region
        %s102 = ssub.s32 %s15, 1
        // Predicated region
        $region13: #{tpu_custom_call.1} parent=11 // pred_check
          %p103 = pneg %p62
        $region14: #{tpu_custom_call.1} parent=11 // pred_check_branch
          %105 = sbr.rel (%p103) target = $region16
        $region15: #{tpu_custom_call.1} parent=11 // pred_region
          %107 = vsyncadd [#allocation7], 0
          %s108 = sshll.u32 %s1, 4
          %s109 = int_to_ptr.hbm [resolvable:$true] %s108
          %s110 = sshll.u32 [#allocation6], 4
          %s111 = int_to_ptr.vmem [resolvable:$true] %s110
          %116 = dma.hbm_to_vmem [thread:$0]  %s109, 384, %s111, [#allocation7], 128, 128, 8
        $region16: #{tpu_custom_call.1} parent=11 // pred_fallthru
          _
      $region12: #{tpu_custom_call.1} parent=5 // pred_fallthru
        _
      %p117 = scmp.lt.s32.totalorder %s15, 2
      // Predicated region
      $region17: #{tpu_custom_call.1} parent=5 // pred_check
        %p118 = pneg %p117
      $region18: #{tpu_custom_call.1} parent=5 // pred_check_branch
        %120 = sbr.rel (%p118) target = $region20
      $region19: #{tpu_custom_call.1} parent=5 // pred_region
        // Predicated region
        $region21: #{tpu_custom_call.1} parent=19 // pred_check
          %p121 = pneg %p35
        $region22: #{tpu_custom_call.1} parent=19 // pred_check_branch
          %123 = sbr.rel (%p121) target = $region24
        $region23: #{tpu_custom_call.1} parent=19 // pred_region
          %s124 = sand.u32 %s25, 1
          %s125 = scalar_lea.sflag [#allocation4], %s124
          %s126 = sand.u32 %s25, 1
          %s127 = smul.addr %s126, 256
          %s128 = scalar_lea.vmem [#allocation3], %s127
          %130 = vsyncadd %s125, 0
          %s131 = smul.addr %s15, 32
          %s132 = smul.addr %s131, 8
          %s133 = scalar_lea.hbm %s0, %s132
          %s134 = sshll.u32 %s133, 4
          %s135 = int_to_ptr.hbm [resolvable:$true] %s134
          %s136 = sshll.u32 %s128, 4
          %s137 = int_to_ptr.vmem [resolvable:$true] %s136
          %142 = dma.hbm_to_vmem [thread:$0]  %s135, 4096, %s137, %s125, 128, 128, 8
        $region24: #{tpu_custom_call.1} parent=19 // pred_fallthru
          _
      $region20: #{tpu_custom_call.1} parent=5 // pred_fallthru
        _
      %p143 = scmp.le.s32.totalorder 1, %s15
      %p144 = scmp.lt.s32.totalorder %s15, 3
      %p145 = pnand %p143, %p144
      %p146 = pneg %p145
      // Predicated region
      $region25: #{tpu_custom_call.1} parent=5 // pred_check
        _
      $region26: #{tpu_custom_call.1} parent=5 // pred_check_branch
        %148 = sbr.rel (%p145) target = $region28
      $region27: #{tpu_custom_call.1} parent=5 // pred_region
        %s149 = ssub.s32 %s15, 1
        %s150 = sand.u32 %s28, 1
        %s151 = scalar_lea.sflag [#allocation4], %s150
        %s152 = sand.u32 %s28, 1
        %s153 = smul.addr %s152, 256
        %s154 = scalar_lea.vmem [#allocation3], %s153
        // Predicated region
        $region29: #{tpu_custom_call.1} parent=27 // pred_check
          %p155 = pneg %p41
        $region30: #{tpu_custom_call.1} parent=27 // pred_check_branch
          %157 = sbr.rel (%p155) target = $region32
        $region31: #{tpu_custom_call.1} parent=27 // pred_region
          %159 = dma.done %s151, 4096
        $region32: #{tpu_custom_call.1} parent=27 // pred_fallthru
          _
        // Predicated region
        $region33: #{tpu_custom_call.1} parent=27 // pred_check
          %p160 = pneg %p62
        $region34: #{tpu_custom_call.1} parent=27 // pred_check_branch
          %162 = sbr.rel (%p160) target = $region36
        $region35: #{tpu_custom_call.1} parent=27 // pred_region
          %164 = dma.done [#allocation7], 384
        $region36: #{tpu_custom_call.1} parent=27 // pred_fallthru
          _
        %s165 = sand.u32 %s28, 1
        %s166 = scalar_lea.sflag [#allocation4], %s165
        %s167 = sand.u32 %s28, 1
        %s168 = smul.addr %s167, 256
        %s169 = scalar_lea.vmem [#allocation3], %s168
        %p170 = pneg %p41
        %p171 = pneg %p38
        %p172 = pneg %p62
        %p173 = pneg %p59
        %p174 = pneg %p88
        %p175 = pneg %p85
        %s176 = sand.u32 %s75, 1
        %s177 = scalar_lea.sflag [#allocation5], %s176
        %s178 = sand.u32 %s75, 1
        %s179 = smul.addr %s178, 256
        %s180 = scalar_lea.vmem [#allocation8], %s179
        %v181 = vld [vmem:[#allocation6] sm:$0xff]
        %v182 = vld [vmem:[#allocation6 + $0x8] sm:$0xff]
        %v183 = vld [vmem:[#allocation6 + $0x10] sm:$0x3f]
        %184 = vst [vmem:[#allocation2] sm:$0xff] 0.0
        %185 = vst [vmem:[#allocation2 + $0x8] sm:$0xff] 0.0
        %186 = vst [vmem:[#allocation2 + $0x10] sm:$0x3] 0.0
        %187 = vst [vmem:[#allocation2 + $0x18] sm:$0xff] 0.0
        %188 = vst [vmem:[#allocation2 + $0x20] sm:$0xff] 0.0
        %189 = vst [vmem:[#allocation2 + $0x28] sm:$0x3] 0.0
        %190 = vst [vmem:[#allocation2 + $0x30] sm:$0xff] 0.0
        %191 = vst [vmem:[#allocation2 + $0x38] sm:$0xff] 0.0
        %192 = vst [vmem:[#allocation2 + $0x40] sm:$0x3] 0.0
        %193 = vst [vmem:[#allocation2 + $0x48] sm:$0xff] 0.0
        %194 = vst [vmem:[#allocation2 + $0x50] sm:$0xff] 0.0
        %195 = vst [vmem:[#allocation2 + $0x58] sm:$0x3] 0.0
        %196 = vst [vmem:[#allocation2 + $0x60] sm:$0xff] 0.0
        %197 = vst [vmem:[#allocation2 + $0x68] sm:$0xff] 0.0
        %198 = vst [vmem:[#allocation2 + $0x70] sm:$0x3] 0.0
        %199 = vst [vmem:[#allocation2 + $0x78] sm:$0xff] 0.0
        %200 = vst [vmem:[#allocation2 + $0x80] sm:$0xff] 0.0
        %201 = vst [vmem:[#allocation2 + $0x88] sm:$0x3] 0.0
        %202 = vst [vmem:[#allocation2 + $0x90] sm:$0xff] 0.0
        %203 = vst [vmem:[#allocation2 + $0x98] sm:$0xff] 0.0
        %204 = vst [vmem:[#allocation2 + $0xa0] sm:$0x3] 0.0
        %205 = vst [vmem:[#allocation2 + $0xa8] sm:$0xff] 0.0
        %206 = vst [vmem:[#allocation2 + $0xb0] sm:$0xff] 0.0
        %207 = vst [vmem:[#allocation2 + $0xb8] sm:$0x3] 0.0
        %208 = vst [vmem:[#allocation2 + $0xc0] sm:$0xff] 0.0
        %209 = vst [vmem:[#allocation2 + $0xc8] sm:$0xff] 0.0
        %210 = vst [vmem:[#allocation2 + $0xd0] sm:$0x3] 0.0
        %211 = vst [vmem:[#allocation2 + $0xd8] sm:$0xff] 0.0
        %212 = vst [vmem:[#allocation2 + $0xe0] sm:$0xff] 0.0
        %213 = vst [vmem:[#allocation2 + $0xe8] sm:$0x3] 0.0
        %214 = vst [vmem:[#allocation2 + $0xf0] sm:$0xff] 0.0
        %215 = vst [vmem:[#allocation2 + $0xf8] sm:$0xff] 0.0
        %216 = vst [vmem:[#allocation2 + $0x100] sm:$0x3] 0.0
        %217 = vst [vmem:[#allocation2 + $0x108] sm:$0xff] 0.0
        %218 = vst [vmem:[#allocation2 + $0x110] sm:$0xff] 0.0
        %219 = vst [vmem:[#allocation2 + $0x118] sm:$0x3] 0.0
        %220 = vst [vmem:[#allocation2 + $0x120] sm:$0xff] 0.0
        %221 = vst [vmem:[#allocation2 + $0x128] sm:$0xff] 0.0
        %222 = vst [vmem:[#allocation2 + $0x130] sm:$0x3] 0.0
        %223 = vst [vmem:[#allocation2 + $0x138] sm:$0xff] 0.0
        %224 = vst [vmem:[#allocation2 + $0x140] sm:$0xff] 0.0
        %225 = vst [vmem:[#allocation2 + $0x148] sm:$0x3] 0.0
        %226 = vst [vmem:[#allocation2 + $0x150] sm:$0xff] 0.0
        %227 = vst [vmem:[#allocation2 + $0x158] sm:$0xff] 0.0
        %228 = vst [vmem:[#allocation2 + $0x160] sm:$0x3] 0.0
        %229 = vst [vmem:[#allocation2 + $0x168] sm:$0xff] 0.0
        %230 = vst [vmem:[#allocation2 + $0x170] sm:$0xff] 0.0
        %231 = vst [vmem:[#allocation2 + $0x178] sm:$0x3] 0.0
        %232 = vst [vmem:[#allocation2 + $0x180] sm:$0xff] 0.0
        %233 = vst [vmem:[#allocation2 + $0x188] sm:$0xff] 0.0
        %234 = vst [vmem:[#allocation2 + $0x190] sm:$0x3] 0.0
        %235 = vst [vmem:[#allocation2 + $0x198] sm:$0xff] 0.0
        %236 = vst [vmem:[#allocation2 + $0x1a0] sm:$0xff] 0.0
        %237 = vst [vmem:[#allocation2 + $0x1a8] sm:$0x3] 0.0
        %v238 = vld [vmem:[%s154] sm:$0xff]
        %v239 = vld [vmem:[%s154 + $0x8] sm:$0xff]
        %v240 = vld [vmem:[%s154 + $0x10] sm:$0xff]
        %v241 = vld [vmem:[%s154 + $0x18] sm:$0xff]
        %v242 = vld [vmem:[%s154 + $0x20] sm:$0xff]
        %v243 = vld [vmem:[%s154 + $0x28] sm:$0xff]
        %v244 = vld [vmem:[%s154 + $0x30] sm:$0xff]
        %v245 = vld [vmem:[%s154 + $0x38] sm:$0xff]
        %v246 = vld [vmem:[%s154 + $0x40] sm:$0xff]
        %v247 = vld [vmem:[%s154 + $0x48] sm:$0xff]
        %v248 = vld [vmem:[%s154 + $0x50] sm:$0xff]
        %v249 = vld [vmem:[%s154 + $0x58] sm:$0xff]
        %v250 = vld [vmem:[%s154 + $0x60] sm:$0xff]
        %v251 = vld [vmem:[%s154 + $0x68] sm:$0xff]
        %v252 = vld [vmem:[%s154 + $0x70] sm:$0xff]
        %v253 = vld [vmem:[%s154 + $0x78] sm:$0xff]
        %v254 = vld [vmem:[%s154 + $0x80] sm:$0xff]
        %v255 = vld [vmem:[%s154 + $0x88] sm:$0xff]
        %v256 = vld [vmem:[%s154 + $0x90] sm:$0xff]
        %v257 = vld [vmem:[%s154 + $0x98] sm:$0xff]
        %v258 = vld [vmem:[%s154 + $0xa0] sm:$0xff]
        %v259 = vld [vmem:[%s154 + $0xa8] sm:$0xff]
        %v260 = vld [vmem:[%s154 + $0xb0] sm:$0xff]
        %v261 = vld [vmem:[%s154 + $0xb8] sm:$0xff]
        %v262 = vld [vmem:[%s154 + $0xc0] sm:$0xff]
        %v263 = vld [vmem:[%s154 + $0xc8] sm:$0xff]
        %v264 = vld [vmem:[%s154 + $0xd0] sm:$0xff]
        %v265 = vld [vmem:[%s154 + $0xd8] sm:$0xff]
        %v266 = vld [vmem:[%s154 + $0xe0] sm:$0xff]
        %v267 = vld [vmem:[%s154 + $0xe8] sm:$0xff]
        %v268 = vld [vmem:[%s154 + $0xf0] sm:$0xff]
        %v269 = vld [vmem:[%s154 + $0xf8] sm:$0xff]
        %s270 = scalar_lea.vmem [#allocation2], 24
        %271 = vst [vmem:[%s270 + $0x1] sm:$0xff] %v238
        %272 = vst [vmem:[%s270 + $0x9] sm:$0xff] %v239
        %273 = vst [vmem:[%s270 + $0x19] sm:$0xff] %v240
        %274 = vst [vmem:[%s270 + $0x21] sm:$0xff] %v241
        %275 = vst [vmem:[%s270 + $0x31] sm:$0xff] %v242
        %276 = vst [vmem:[%s270 + $0x39] sm:$0xff] %v243
        %277 = vst [vmem:[%s270 + $0x49] sm:$0xff] %v244
        %278 = vst [vmem:[%s270 + $0x51] sm:$0xff] %v245
        %279 = vst [vmem:[%s270 + $0x61] sm:$0xff] %v246
        %280 = vst [vmem:[%s270 + $0x69] sm:$0xff] %v247
        %281 = vst [vmem:[%s270 + $0x79] sm:$0xff] %v248
        %282 = vst [vmem:[%s270 + $0x81] sm:$0xff] %v249
        %283 = vst [vmem:[%s270 + $0x91] sm:$0xff] %v250
        %284 = vst [vmem:[%s270 + $0x99] sm:$0xff] %v251
        %285 = vst [vmem:[%s270 + $0xa9] sm:$0xff] %v252
        %286 = vst [vmem:[%s270 + $0xb1] sm:$0xff] %v253
        %287 = vst [vmem:[%s270 + $0xc1] sm:$0xff] %v254
        %288 = vst [vmem:[%s270 + $0xc9] sm:$0xff] %v255
        %289 = vst [vmem:[%s270 + $0xd9] sm:$0xff] %v256
        %290 = vst [vmem:[%s270 + $0xe1] sm:$0xff] %v257
        %291 = vst [vmem:[%s270 + $0xf1] sm:$0xff] %v258
        %292 = vst [vmem:[%s270 + $0xf9] sm:$0xff] %v259
        %293 = vst [vmem:[%s270 + $0x109] sm:$0xff] %v260
        %294 = vst [vmem:[%s270 + $0x111] sm:$0xff] %v261
        %295 = vst [vmem:[%s270 + $0x121] sm:$0xff] %v262
        %296 = vst [vmem:[%s270 + $0x129] sm:$0xff] %v263
        %297 = vst [vmem:[%s270 + $0x139] sm:$0xff] %v264
        %298 = vst [vmem:[%s270 + $0x141] sm:$0xff] %v265
        %299 = vst [vmem:[%s270 + $0x151] sm:$0xff] %v266
        %300 = vst [vmem:[%s270 + $0x159] sm:$0xff] %v267
        %301 = vst [vmem:[%s270 + $0x169] sm:$0xff] %v268
        %302 = vst [vmem:[%s270 + $0x171] sm:$0xff] %v269
        %v303 = vld [vmem:[#allocation2] sm:$0xff]
        %v304 = vld [vmem:[#allocation2 + $0x8] sm:$0xff]
        %v305 = vld [vmem:[#allocation2 + $0x10] sm:$0x3]
        %v306 = vld [vmem:[#allocation2 + $0x18] sm:$0xff]
        %v307 = vld [vmem:[#allocation2 + $0x20] sm:$0xff]
        %v308 = vld [vmem:[#allocation2 + $0x28] sm:$0x3]
        %v309 = vld [vmem:[#allocation2 + $0x30] sm:$0xff]
        %v310 = vld [vmem:[#allocation2 + $0x38] sm:$0xff]
        %v311 = vld [vmem:[#allocation2 + $0x40] sm:$0x3]
        %v312 = vld [vmem:[#allocation2 + $0x48] sm:$0xff]
        %v313 = vld [vmem:[#allocation2 + $0x50] sm:$0xff]
        %v314 = vld [vmem:[#allocation2 + $0x58] sm:$0x3]
        %v315 = vld [vmem:[#allocation2 + $0x60] sm:$0xff]
        %v316 = vld [vmem:[#allocation2 + $0x68] sm:$0xff]
        %v317 = vld [vmem:[#allocation2 + $0x70] sm:$0x3]
        %v318 = vld [vmem:[#allocation2 + $0x78] sm:$0xff]
        %v319 = vld [vmem:[#allocation2 + $0x80] sm:$0xff]
        %v320 = vld [vmem:[#allocation2 + $0x88] sm:$0x3]
        %v321 = vld [vmem:[#allocation2 + $0x90] sm:$0xff]
        %v322 = vld [vmem:[#allocation2 + $0x98] sm:$0xff]
        %v323 = vld [vmem:[#allocation2 + $0xa0] sm:$0x3]
        %v324 = vld [vmem:[#allocation2 + $0xa8] sm:$0xff]
        %v325 = vld [vmem:[#allocation2 + $0xb0] sm:$0xff]
        %v326 = vld [vmem:[#allocation2 + $0xb8] sm:$0x3]
        %v327 = vld [vmem:[#allocation2 + $0xc0] sm:$0xff]
        %v328 = vld [vmem:[#allocation2 + $0xc8] sm:$0xff]
        %v329 = vld [vmem:[#allocation2 + $0xd0] sm:$0x3]
        %v330 = vld [vmem:[#allocation2 + $0xd8] sm:$0xff]
        %v331 = vld [vmem:[#allocation2 + $0xe0] sm:$0xff]
        %v332 = vld [vmem:[#allocation2 + $0xe8] sm:$0x3]
        %v333 = vld [vmem:[#allocation2 + $0xf0] sm:$0xff]
        %v334 = vld [vmem:[#allocation2 + $0xf8] sm:$0xff]
        %v335 = vld [vmem:[#allocation2 + $0x100] sm:$0x3]
        %v336 = vld [vmem:[#allocation2 + $0x108] sm:$0xff]
        %v337 = vld [vmem:[#allocation2 + $0x110] sm:$0xff]
        %v338 = vld [vmem:[#allocation2 + $0x118] sm:$0x3]
        %v339 = vld [vmem:[#allocation2 + $0x120] sm:$0xff]
        %v340 = vld [vmem:[#allocation2 + $0x128] sm:$0xff]
        %v341 = vld [vmem:[#allocation2 + $0x130] sm:$0x3]
        %v342 = vld [vmem:[#allocation2 + $0x138] sm:$0xff]
        %v343 = vld [vmem:[#allocation2 + $0x140] sm:$0xff]
        %v344 = vld [vmem:[#allocation2 + $0x148] sm:$0x3]
        %v345 = vld [vmem:[#allocation2 + $0x150] sm:$0xff]
        %v346 = vld [vmem:[#allocation2 + $0x158] sm:$0xff]
        %v347 = vld [vmem:[#allocation2 + $0x160] sm:$0x3]
        %v348 = vld [vmem:[#allocation2 + $0x168] sm:$0xff]
        %v349 = vld [vmem:[#allocation2 + $0x170] sm:$0xff]
        %v350 = vld [vmem:[#allocation2 + $0x178] sm:$0x3]
        %v351 = vld [vmem:[#allocation2 + $0x180] sm:$0xff]
        %v352 = vld [vmem:[#allocation2 + $0x188] sm:$0xff]
        %v353 = vld [vmem:[#allocation2 + $0x190] sm:$0x3]
        %v354 = vld [vmem:[#allocation2 + $0x198] sm:$0xff]
        %v355 = vld [vmem:[#allocation2 + $0x1a0] sm:$0xff]
        %v356 = vld [vmem:[#allocation2 + $0x1a8] sm:$0x3]
        %v357 = vperm.slane %v181, 0
        %v358 = vmul.f32 %v303, %v357
        %v359 = vmul.f32 %v304, %v357
        %v360 = vmul.f32 %v306, %v357
        %v361 = vmul.f32 %v307, %v357
        %v362 = vmul.f32 %v309, %v357
        %v363 = vmul.f32 %v310, %v357
        %v364 = vmul.f32 %v312, %v357
        %v365 = vmul.f32 %v313, %v357
        %v366 = vmul.f32 %v315, %v357
        %v367 = vmul.f32 %v316, %v357
        %v368 = vmul.f32 %v318, %v357
        %v369 = vmul.f32 %v319, %v357
        %v370 = vmul.f32 %v321, %v357
        %v371 = vmul.f32 %v322, %v357
        %v372 = vmul.f32 %v324, %v357
        %v373 = vmul.f32 %v325, %v357
        %v374 = vmul.f32 %v327, %v357
        %v375 = vmul.f32 %v328, %v357
        %v376 = vmul.f32 %v330, %v357
        %v377 = vmul.f32 %v331, %v357
        %v378 = vmul.f32 %v333, %v357
        %v379 = vmul.f32 %v334, %v357
        %v380 = vmul.f32 %v336, %v357
        %v381 = vmul.f32 %v337, %v357
        %v382 = vmul.f32 %v339, %v357
        %v383 = vmul.f32 %v340, %v357
        %v384 = vmul.f32 %v342, %v357
        %v385 = vmul.f32 %v343, %v357
        %v386 = vmul.f32 %v345, %v357
        %v387 = vmul.f32 %v346, %v357
        %v388 = vmul.f32 %v348, %v357
        %v389 = vmul.f32 %v349, %v357
        %v390 = vadd.f32 %v358, 0.0
        %v391 = vadd.f32 %v359, 0.0
        %v392 = vadd.f32 %v360, 0.0
        %v393 = vadd.f32 %v361, 0.0
        %v394 = vadd.f32 %v362, 0.0
        %v395 = vadd.f32 %v363, 0.0
        %v396 = vadd.f32 %v364, 0.0
        %v397 = vadd.f32 %v365, 0.0
        %v398 = vadd.f32 %v366, 0.0
        %v399 = vadd.f32 %v367, 0.0
        %v400 = vadd.f32 %v368, 0.0
        %v401 = vadd.f32 %v369, 0.0
        %v402 = vadd.f32 %v370, 0.0
        %v403 = vadd.f32 %v371, 0.0
        %v404 = vadd.f32 %v372, 0.0
        %v405 = vadd.f32 %v373, 0.0
        %v406 = vadd.f32 %v374, 0.0
        %v407 = vadd.f32 %v375, 0.0
        %v408 = vadd.f32 %v376, 0.0
        %v409 = vadd.f32 %v377, 0.0
        %v410 = vadd.f32 %v378, 0.0
        %v411 = vadd.f32 %v379, 0.0
        %v412 = vadd.f32 %v380, 0.0
        %v413 = vadd.f32 %v381, 0.0
        %v414 = vadd.f32 %v382, 0.0
        %v415 = vadd.f32 %v383, 0.0
        %v416 = vadd.f32 %v384, 0.0
        %v417 = vadd.f32 %v385, 0.0
        %v418 = vadd.f32 %v386, 0.0
        %v419 = vadd.f32 %v387, 0.0
        %v420 = vadd.f32 %v388, 0.0
        %v421 = vadd.f32 %v389, 0.0
        %v422 = vperm.slane %v181, 1
        %v423 = vmul.f32 %v303, %v422
        %v424 = vmul.f32 %v304, %v422
        %v425 = vmul.f32 %v305, %v422
        %v426 = vmul.f32 %v306, %v422
        %v427 = vmul.f32 %v307, %v422
        %v428 = vmul.f32 %v308, %v422
        %v429 = vmul.f32 %v309, %v422
        %v430 = vmul.f32 %v310, %v422
        %v431 = vmul.f32 %v311, %v422
        %v432 = vmul.f32 %v312, %v422
        %v433 = vmul.f32 %v313, %v422
        %v434 = vmul.f32 %v314, %v422
        %v435 = vmul.f32 %v315, %v422
        %v436 = vmul.f32 %v316, %v422
        %v437 = vmul.f32 %v317, %v422
        %v438 = vmul.f32 %v318, %v422
        %v439 = vmul.f32 %v319, %v422
        %v440 = vmul.f32 %v320, %v422
        %v441 = vmul.f32 %v321, %v422
        %v442 = vmul.f32 %v322, %v422
        %v443 = vmul.f32 %v323, %v422
        %v444 = vmul.f32 %v324, %v422
        %v445 = vmul.f32 %v325, %v422
        %v446 = vmul.f32 %v326, %v422
        %v447 = vmul.f32 %v327, %v422
        %v448 = vmul.f32 %v328, %v422
        %v449 = vmul.f32 %v329, %v422
        %v450 = vmul.f32 %v330, %v422
        %v451 = vmul.f32 %v331, %v422
        %v452 = vmul.f32 %v332, %v422
        %v453 = vmul.f32 %v333, %v422
        %v454 = vmul.f32 %v334, %v422
        %v455 = vmul.f32 %v335, %v422
        %v456 = vmul.f32 %v336, %v422
        %v457 = vmul.f32 %v337, %v422
        %v458 = vmul.f32 %v338, %v422
        %v459 = vmul.f32 %v339, %v422
        %v460 = vmul.f32 %v340, %v422
        %v461 = vmul.f32 %v341, %v422
        %v462 = vmul.f32 %v342, %v422
        %v463 = vmul.f32 %v343, %v422
        %v464 = vmul.f32 %v344, %v422
        %v465 = vmul.f32 %v345, %v422
        %v466 = vmul.f32 %v346, %v422
        %v467 = vmul.f32 %v347, %v422
        %v468 = vmul.f32 %v348, %v422
        %v469 = vmul.f32 %v349, %v422
        %v470 = vmul.f32 %v350, %v422
        %vm519 = vcmask 1046528
        %v520 = vrot.slane %v423, 1
        %v521 = vrot.slane %v424, 1
        %v522 = vsel %vm519, %v520, %v521
        %v523 = vrot.slane %v425, 1
        %v524 = vsel %vm519, %v521, %v523
        %v525 = vrot.slane %v426, 1
        %v526 = vrot.slane %v427, 1
        %v527 = vsel %vm519, %v525, %v526
        %v528 = vrot.slane %v428, 1
        %v529 = vsel %vm519, %v526, %v528
        %v530 = vrot.slane %v429, 1
        %v531 = vrot.slane %v430, 1
        %v532 = vsel %vm519, %v530, %v531
        %v533 = vrot.slane %v431, 1
        %v534 = vsel %vm519, %v531, %v533
        %v535 = vrot.slane %v432, 1
        %v536 = vrot.slane %v433, 1
        %v537 = vsel %vm519, %v535, %v536
        %v538 = vrot.slane %v434, 1
        %v539 = vsel %vm519, %v536, %v538
        %v540 = vrot.slane %v435, 1
        %v541 = vrot.slane %v436, 1
        %v542 = vsel %vm519, %v540, %v541
        %v543 = vrot.slane %v437, 1
        %v544 = vsel %vm519, %v541, %v543
        %v545 = vrot.slane %v438, 1
        %v546 = vrot.slane %v439, 1
        %v547 = vsel %vm519, %v545, %v546
        %v548 = vrot.slane %v440, 1
        %v549 = vsel %vm519, %v546, %v548
        %v550 = vrot.slane %v441, 1
        %v551 = vrot.slane %v442, 1
        %v552 = vsel %vm519, %v550, %v551
        %v553 = vrot.slane %v443, 1
        %v554 = vsel %vm519, %v551, %v553
        %v555 = vrot.slane %v444, 1
        %v556 = vrot.slane %v445, 1
        %v557 = vsel %vm519, %v555, %v556
        %v558 = vrot.slane %v446, 1
        %v559 = vsel %vm519, %v556, %v558
        %v560 = vrot.slane %v447, 1
        %v561 = vrot.slane %v448, 1
        %v562 = vsel %vm519, %v560, %v561
        %v563 = vrot.slane %v449, 1
        %v564 = vsel %vm519, %v561, %v563
        %v565 = vrot.slane %v450, 1
        %v566 = vrot.slane %v451, 1
        %v567 = vsel %vm519, %v565, %v566
        %v568 = vrot.slane %v452, 1
        %v569 = vsel %vm519, %v566, %v568
        %v570 = vrot.slane %v453, 1
        %v571 = vrot.slane %v454, 1
        %v572 = vsel %vm519, %v570, %v571
        %v573 = vrot.slane %v455, 1
        %v574 = vsel %vm519, %v571, %v573
        %v575 = vrot.slane %v456, 1
        %v576 = vrot.slane %v457, 1
        %v577 = vsel %vm519, %v575, %v576
        %v578 = vrot.slane %v458, 1
        %v579 = vsel %vm519, %v576, %v578
        %v580 = vrot.slane %v459, 1
        %v581 = vrot.slane %v460, 1
        %v582 = vsel %vm519, %v580, %v581
        %v583 = vrot.slane %v461, 1
        %v584 = vsel %vm519, %v581, %v583
        %v585 = vrot.slane %v462, 1
        %v586 = vrot.slane %v463, 1
        %v587 = vsel %vm519, %v585, %v586
        %v588 = vrot.slane %v464, 1
        %v589 = vsel %vm519, %v586, %v588
        %v590 = vrot.slane %v465, 1
        %v591 = vrot.slane %v466, 1
        %v592 = vsel %vm519, %v590, %v591
        %v593 = vrot.slane %v467, 1
        %v594 = vsel %vm519, %v591, %v593
        %v595 = vrot.slane %v468, 1
        %v596 = vrot.slane %v469, 1
        %v597 = vsel %vm519, %v595, %v596
        %v598 = vrot.slane %v470, 1
        %v599 = vsel %vm519, %v596, %v598
        %v632 = vadd.f32 %v390, %v522
        %v633 = vadd.f32 %v391, %v524
        %v634 = vadd.f32 %v392, %v527
        %v635 = vadd.f32 %v393, %v529
        %v636 = vadd.f32 %v394, %v532
        %v637 = vadd.f32 %v395, %v534
        %v638 = vadd.f32 %v396, %v537
        %v639 = vadd.f32 %v397, %v539
        %v640 = vadd.f32 %v398, %v542
        %v641 = vadd.f32 %v399, %v544
        %v642 = vadd.f32 %v400, %v547
        %v643 = vadd.f32 %v401, %v549
        %v644 = vadd.f32 %v402, %v552
        %v645 = vadd.f32 %v403, %v554
        %v646 = vadd.f32 %v404, %v557
        %v647 = vadd.f32 %v405, %v559
        %v648 = vadd.f32 %v406, %v562
        %v649 = vadd.f32 %v407, %v564
        %v650 = vadd.f32 %v408, %v567
        %v651 = vadd.f32 %v409, %v569
        %v652 = vadd.f32 %v410, %v572
        %v653 = vadd.f32 %v411, %v574
        %v654 = vadd.f32 %v412, %v577
        %v655 = vadd.f32 %v413, %v579
        %v656 = vadd.f32 %v414, %v582
        %v657 = vadd.f32 %v415, %v584
        %v658 = vadd.f32 %v416, %v587
        %v659 = vadd.f32 %v417, %v589
        %v660 = vadd.f32 %v418, %v592
        %v661 = vadd.f32 %v419, %v594
        %v662 = vadd.f32 %v420, %v597
        %v663 = vadd.f32 %v421, %v599
        %v664 = vperm.slane %v181, 2
        %v665 = vmul.f32 %v303, %v664
        %v666 = vmul.f32 %v304, %v664
        %v667 = vmul.f32 %v305, %v664
        %v668 = vmul.f32 %v306, %v664
        %v669 = vmul.f32 %v307, %v664
        %v670 = vmul.f32 %v308, %v664
        %v671 = vmul.f32 %v309, %v664
        %v672 = vmul.f32 %v310, %v664
        %v673 = vmul.f32 %v311, %v664
        %v674 = vmul.f32 %v312, %v664
        %v675 = vmul.f32 %v313, %v664
        %v676 = vmul.f32 %v314, %v664
        %v677 = vmul.f32 %v315, %v664
        %v678 = vmul.f32 %v316, %v664
        %v679 = vmul.f32 %v317, %v664
        %v680 = vmul.f32 %v318, %v664
        %v681 = vmul.f32 %v319, %v664
        %v682 = vmul.f32 %v320, %v664
        %v683 = vmul.f32 %v321, %v664
        %v684 = vmul.f32 %v322, %v664
        %v685 = vmul.f32 %v323, %v664
        %v686 = vmul.f32 %v324, %v664
        %v687 = vmul.f32 %v325, %v664
        %v688 = vmul.f32 %v326, %v664
        %v689 = vmul.f32 %v327, %v664
        %v690 = vmul.f32 %v328, %v664
        %v691 = vmul.f32 %v329, %v664
        %v692 = vmul.f32 %v330, %v664
        %v693 = vmul.f32 %v331, %v664
        %v694 = vmul.f32 %v332, %v664
        %v695 = vmul.f32 %v333, %v664
        %v696 = vmul.f32 %v334, %v664
        %v697 = vmul.f32 %v335, %v664
        %v698 = vmul.f32 %v336, %v664
        %v699 = vmul.f32 %v337, %v664
        %v700 = vmul.f32 %v338, %v664
        %v701 = vmul.f32 %v339, %v664
        %v702 = vmul.f32 %v340, %v664
        %v703 = vmul.f32 %v341, %v664
        %v704 = vmul.f32 %v342, %v664
        %v705 = vmul.f32 %v343, %v664
        %v706 = vmul.f32 %v344, %v664
        %v707 = vmul.f32 %v345, %v664
        %v708 = vmul.f32 %v346, %v664
        %v709 = vmul.f32 %v347, %v664
        %v710 = vmul.f32 %v348, %v664
        %v711 = vmul.f32 %v349, %v664
        %v712 = vmul.f32 %v350, %v664
        %vm761 = vcmask 1045504
        %v762 = vrot.slane %v665, 2
        %v763 = vrot.slane %v666, 2
        %v764 = vsel %vm761, %v762, %v763
        %v765 = vrot.slane %v667, 2
        %v766 = vsel %vm761, %v763, %v765
        %v767 = vrot.slane %v668, 2
        %v768 = vrot.slane %v669, 2
        %v769 = vsel %vm761, %v767, %v768
        %v770 = vrot.slane %v670, 2
        %v771 = vsel %vm761, %v768, %v770
        %v772 = vrot.slane %v671, 2
        %v773 = vrot.slane %v672, 2
        %v774 = vsel %vm761, %v772, %v773
        %v775 = vrot.slane %v673, 2
        %v776 = vsel %vm761, %v773, %v775
        %v777 = vrot.slane %v674, 2
        %v778 = vrot.slane %v675, 2
        %v779 = vsel %vm761, %v777, %v778
        %v780 = vrot.slane %v676, 2
        %v781 = vsel %vm761, %v778, %v780
        %v782 = vrot.slane %v677, 2
        %v783 = vrot.slane %v678, 2
        %v784 = vsel %vm761, %v782, %v783
        %v785 = vrot.slane %v679, 2
        %v786 = vsel %vm761, %v783, %v785
        %v787 = vrot.slane %v680, 2
        %v788 = vrot.slane %v681, 2
        %v789 = vsel %vm761, %v787, %v788
        %v790 = vrot.slane %v682, 2
        %v791 = vsel %vm761, %v788, %v790
        %v792 = vrot.slane %v683, 2
        %v793 = vrot.slane %v684, 2
        %v794 = vsel %vm761, %v792, %v793
        %v795 = vrot.slane %v685, 2
        %v796 = vsel %vm761, %v793, %v795
        %v797 = vrot.slane %v686, 2
        %v798 = vrot.slane %v687, 2
        %v799 = vsel %vm761, %v797, %v798
        %v800 = vrot.slane %v688, 2
        %v801 = vsel %vm761, %v798, %v800
        %v802 = vrot.slane %v689, 2
        %v803 = vrot.slane %v690, 2
        %v804 = vsel %vm761, %v802, %v803
        %v805 = vrot.slane %v691, 2
        %v806 = vsel %vm761, %v803, %v805
        %v807 = vrot.slane %v692, 2
        %v808 = vrot.slane %v693, 2
        %v809 = vsel %vm761, %v807, %v808
        %v810 = vrot.slane %v694, 2
        %v811 = vsel %vm761, %v808, %v810
        %v812 = vrot.slane %v695, 2
        %v813 = vrot.slane %v696, 2
        %v814 = vsel %vm761, %v812, %v813
        %v815 = vrot.slane %v697, 2
        %v816 = vsel %vm761, %v813, %v815
        %v817 = vrot.slane %v698, 2
        %v818 = vrot.slane %v699, 2
        %v819 = vsel %vm761, %v817, %v818
        %v820 = vrot.slane %v700, 2
        %v821 = vsel %vm761, %v818, %v820
        %v822 = vrot.slane %v701, 2
        %v823 = vrot.slane %v702, 2
        %v824 = vsel %vm761, %v822, %v823
        %v825 = vrot.slane %v703, 2
        %v826 = vsel %vm761, %v823, %v825
        %v827 = vrot.slane %v704, 2
        %v828 = vrot.slane %v705, 2
        %v829 = vsel %vm761, %v827, %v828
        %v830 = vrot.slane %v706, 2
        %v831 = vsel %vm761, %v828, %v830
        %v832 = vrot.slane %v707, 2
        %v833 = vrot.slane %v708, 2
        %v834 = vsel %vm761, %v832, %v833
        %v835 = vrot.slane %v709, 2
        %v836 = vsel %vm761, %v833, %v835
        %v837 = vrot.slane %v710, 2
        %v838 = vrot.slane %v711, 2
        %v839 = vsel %vm761, %v837, %v838
        %v840 = vrot.slane %v712, 2
        %v841 = vsel %vm761, %v838, %v840
        %v874 = vadd.f32 %v632, %v764
        %v875 = vadd.f32 %v633, %v766
        %v876 = vadd.f32 %v634, %v769
        %v877 = vadd.f32 %v635, %v771
        %v878 = vadd.f32 %v636, %v774
        %v879 = vadd.f32 %v637, %v776
        %v880 = vadd.f32 %v638, %v779
        %v881 = vadd.f32 %v639, %v781
        %v882 = vadd.f32 %v640, %v784
        %v883 = vadd.f32 %v641, %v786
        %v884 = vadd.f32 %v642, %v789
        %v885 = vadd.f32 %v643, %v791
        %v886 = vadd.f32 %v644, %v794
        %v887 = vadd.f32 %v645, %v796
        %v888 = vadd.f32 %v646, %v799
        %v889 = vadd.f32 %v647, %v801
        %v890 = vadd.f32 %v648, %v804
        %v891 = vadd.f32 %v649, %v806
        %v892 = vadd.f32 %v650, %v809
        %v893 = vadd.f32 %v651, %v811
        %v894 = vadd.f32 %v652, %v814
        %v895 = vadd.f32 %v653, %v816
        %v896 = vadd.f32 %v654, %v819
        %v897 = vadd.f32 %v655, %v821
        %v898 = vadd.f32 %v656, %v824
        %v899 = vadd.f32 %v657, %v826
        %v900 = vadd.f32 %v658, %v829
        %v901 = vadd.f32 %v659, %v831
        %v902 = vadd.f32 %v660, %v834
        %v903 = vadd.f32 %v661, %v836
        %v904 = vadd.f32 %v662, %v839
        %v905 = vadd.f32 %v663, %v841
        %v906 = vperm.slane %v181, 3
        %v907 = vmul.f32 %v306, %v906
        %v908 = vmul.f32 %v307, %v906
        %v909 = vmul.f32 %v309, %v906
        %v910 = vmul.f32 %v310, %v906
        %v911 = vmul.f32 %v312, %v906
        %v912 = vmul.f32 %v313, %v906
        %v913 = vmul.f32 %v315, %v906
        %v914 = vmul.f32 %v316, %v906
        %v915 = vmul.f32 %v318, %v906
        %v916 = vmul.f32 %v319, %v906
        %v917 = vmul.f32 %v321, %v906
        %v918 = vmul.f32 %v322, %v906
        %v919 = vmul.f32 %v324, %v906
        %v920 = vmul.f32 %v325, %v906
        %v921 = vmul.f32 %v327, %v906
        %v922 = vmul.f32 %v328, %v906
        %v923 = vmul.f32 %v330, %v906
        %v924 = vmul.f32 %v331, %v906
        %v925 = vmul.f32 %v333, %v906
        %v926 = vmul.f32 %v334, %v906
        %v927 = vmul.f32 %v336, %v906
        %v928 = vmul.f32 %v337, %v906
        %v929 = vmul.f32 %v339, %v906
        %v930 = vmul.f32 %v340, %v906
        %v931 = vmul.f32 %v342, %v906
        %v932 = vmul.f32 %v343, %v906
        %v933 = vmul.f32 %v345, %v906
        %v934 = vmul.f32 %v346, %v906
        %v935 = vmul.f32 %v348, %v906
        %v936 = vmul.f32 %v349, %v906
        %v937 = vmul.f32 %v351, %v906
        %v938 = vmul.f32 %v352, %v906
        %v939 = vadd.f32 %v874, %v907
        %v940 = vadd.f32 %v875, %v908
        %v941 = vadd.f32 %v876, %v909
        %v942 = vadd.f32 %v877, %v910
        %v943 = vadd.f32 %v878, %v911
        %v944 = vadd.f32 %v879, %v912
        %v945 = vadd.f32 %v880, %v913
        %v946 = vadd.f32 %v881, %v914
        %v947 = vadd.f32 %v882, %v915
        %v948 = vadd.f32 %v883, %v916
        %v949 = vadd.f32 %v884, %v917
        %v950 = vadd.f32 %v885, %v918
        %v951 = vadd.f32 %v886, %v919
        %v952 = vadd.f32 %v887, %v920
        %v953 = vadd.f32 %v888, %v921
        %v954 = vadd.f32 %v889, %v922
        %v955 = vadd.f32 %v890, %v923
        %v956 = vadd.f32 %v891, %v924
        %v957 = vadd.f32 %v892, %v925
        %v958 = vadd.f32 %v893, %v926
        %v959 = vadd.f32 %v894, %v927
        %v960 = vadd.f32 %v895, %v928
        %v961 = vadd.f32 %v896, %v929
        %v962 = vadd.f32 %v897, %v930
        %v963 = vadd.f32 %v898, %v931
        %v964 = vadd.f32 %v899, %v932
        %v965 = vadd.f32 %v900, %v933
        %v966 = vadd.f32 %v901, %v934
        %v967 = vadd.f32 %v902, %v935
        %v968 = vadd.f32 %v903, %v936
        %v969 = vadd.f32 %v904, %v937
        %v970 = vadd.f32 %v905, %v938
        %v971 = vperm.slane %v181, 4
        %v972 = vmul.f32 %v306, %v971
        %v973 = vmul.f32 %v307, %v971
        %v974 = vmul.f32 %v308, %v971
        %v975 = vmul.f32 %v309, %v971
        %v976 = vmul.f32 %v310, %v971
        %v977 = vmul.f32 %v311, %v971
        %v978 = vmul.f32 %v312, %v971
        %v979 = vmul.f32 %v313, %v971
        %v980 = vmul.f32 %v314, %v971
        %v981 = vmul.f32 %v315, %v971
        %v982 = vmul.f32 %v316, %v971
        %v983 = vmul.f32 %v317, %v971
        %v984 = vmul.f32 %v318, %v971
        %v985 = vmul.f32 %v319, %v971
        %v986 = vmul.f32 %v320, %v971
        %v987 = vmul.f32 %v321, %v971
        %v988 = vmul.f32 %v322, %v971
        %v989 = vmul.f32 %v323, %v971
        %v990 = vmul.f32 %v324, %v971
        %v991 = vmul.f32 %v325, %v971
        %v992 = vmul.f32 %v326, %v971
        %v993 = vmul.f32 %v327, %v971
        %v994 = vmul.f32 %v328, %v971
        %v995 = vmul.f32 %v329, %v971
        %v996 = vmul.f32 %v330, %v971
        %v997 = vmul.f32 %v331, %v971
        %v998 = vmul.f32 %v332, %v971
        %v999 = vmul.f32 %v333, %v971
        %v1000 = vmul.f32 %v334, %v971
        %v1001 = vmul.f32 %v335, %v971
        %v1002 = vmul.f32 %v336, %v971
        %v1003 = vmul.f32 %v337, %v971
        %v1004 = vmul.f32 %v338, %v971
        %v1005 = vmul.f32 %v339, %v971
        %v1006 = vmul.f32 %v340, %v971
        %v1007 = vmul.f32 %v341, %v971
        %v1008 = vmul.f32 %v342, %v971
        %v1009 = vmul.f32 %v343, %v971
        %v1010 = vmul.f32 %v344, %v971
        %v1011 = vmul.f32 %v345, %v971
        %v1012 = vmul.f32 %v346, %v971
        %v1013 = vmul.f32 %v347, %v971
        %v1014 = vmul.f32 %v348, %v971
        %v1015 = vmul.f32 %v349, %v971
        %v1016 = vmul.f32 %v350, %v971
        %v1017 = vmul.f32 %v351, %v971
        %v1018 = vmul.f32 %v352, %v971
        %v1019 = vmul.f32 %v353, %v971
        %v1068 = vrot.slane %v972, 1
        %v1069 = vrot.slane %v973, 1
        %v1070 = vsel %vm519, %v1068, %v1069
        %v1071 = vrot.slane %v974, 1
        %v1072 = vsel %vm519, %v1069, %v1071
        %v1073 = vrot.slane %v975, 1
        %v1074 = vrot.slane %v976, 1
        %v1075 = vsel %vm519, %v1073, %v1074
        %v1076 = vrot.slane %v977, 1
        %v1077 = vsel %vm519, %v1074, %v1076
        %v1078 = vrot.slane %v978, 1
        %v1079 = vrot.slane %v979, 1
        %v1080 = vsel %vm519, %v1078, %v1079
        %v1081 = vrot.slane %v980, 1
        %v1082 = vsel %vm519, %v1079, %v1081
        %v1083 = vrot.slane %v981, 1
        %v1084 = vrot.slane %v982, 1
        %v1085 = vsel %vm519, %v1083, %v1084
        %v1086 = vrot.slane %v983, 1
        %v1087 = vsel %vm519, %v1084, %v1086
        %v1088 = vrot.slane %v984, 1
        %v1089 = vrot.slane %v985, 1
        %v1090 = vsel %vm519, %v1088, %v1089
        %v1091 = vrot.slane %v986, 1
        %v1092 = vsel %vm519, %v1089, %v1091
        %v1093 = vrot.slane %v987, 1
        %v1094 = vrot.slane %v988, 1
        %v1095 = vsel %vm519, %v1093, %v1094
        %v1096 = vrot.slane %v989, 1
        %v1097 = vsel %vm519, %v1094, %v1096
        %v1098 = vrot.slane %v990, 1
        %v1099 = vrot.slane %v991, 1
        %v1100 = vsel %vm519, %v1098, %v1099
        %v1101 = vrot.slane %v992, 1
        %v1102 = vsel %vm519, %v1099, %v1101
        %v1103 = vrot.slane %v993, 1
        %v1104 = vrot.slane %v994, 1
        %v1105 = vsel %vm519, %v1103, %v1104
        %v1106 = vrot.slane %v995, 1
        %v1107 = vsel %vm519, %v1104, %v1106
        %v1108 = vrot.slane %v996, 1
        %v1109 = vrot.slane %v997, 1
        %v1110 = vsel %vm519, %v1108, %v1109
        %v1111 = vrot.slane %v998, 1
        %v1112 = vsel %vm519, %v1109, %v1111
        %v1113 = vrot.slane %v999, 1
        %v1114 = vrot.slane %v1000, 1
        %v1115 = vsel %vm519, %v1113, %v1114
        %v1116 = vrot.slane %v1001, 1
        %v1117 = vsel %vm519, %v1114, %v1116
        %v1118 = vrot.slane %v1002, 1
        %v1119 = vrot.slane %v1003, 1
        %v1120 = vsel %vm519, %v1118, %v1119
        %v1121 = vrot.slane %v1004, 1
        %v1122 = vsel %vm519, %v1119, %v1121
        %v1123 = vrot.slane %v1005, 1
        %v1124 = vrot.slane %v1006, 1
        %v1125 = vsel %vm519, %v1123, %v1124
        %v1126 = vrot.slane %v1007, 1
        %v1127 = vsel %vm519, %v1124, %v1126
        %v1128 = vrot.slane %v1008, 1
        %v1129 = vrot.slane %v1009, 1
        %v1130 = vsel %vm519, %v1128, %v1129
        %v1131 = vrot.slane %v1010, 1
        %v1132 = vsel %vm519, %v1129, %v1131
        %v1133 = vrot.slane %v1011, 1
        %v1134 = vrot.slane %v1012, 1
        %v1135 = vsel %vm519, %v1133, %v1134
        %v1136 = vrot.slane %v1013, 1
        %v1137 = vsel %vm519, %v1134, %v1136
        %v1138 = vrot.slane %v1014, 1
        %v1139 = vrot.slane %v1015, 1
        %v1140 = vsel %vm519, %v1138, %v1139
        %v1141 = vrot.slane %v1016, 1
        %v1142 = vsel %vm519, %v1139, %v1141
        %v1143 = vrot.slane %v1017, 1
        %v1144 = vrot.slane %v1018, 1
        %v1145 = vsel %vm519, %v1143, %v1144
        %v1146 = vrot.slane %v1019, 1
        %v1147 = vsel %vm519, %v1144, %v1146
        %v1180 = vadd.f32 %v939, %v1070
        %v1181 = vadd.f32 %v940, %v1072
        %v1182 = vadd.f32 %v941, %v1075
        %v1183 = vadd.f32 %v942, %v1077
        %v1184 = vadd.f32 %v943, %v1080
        %v1185 = vadd.f32 %v944, %v1082
        %v1186 = vadd.f32 %v945, %v1085
        %v1187 = vadd.f32 %v946, %v1087
        %v1188 = vadd.f32 %v947, %v1090
        %v1189 = vadd.f32 %v948, %v1092
        %v1190 = vadd.f32 %v949, %v1095
        %v1191 = vadd.f32 %v950, %v1097
        %v1192 = vadd.f32 %v951, %v1100
        %v1193 = vadd.f32 %v952, %v1102
        %v1194 = vadd.f32 %v953, %v1105
        %v1195 = vadd.f32 %v954, %v1107
        %v1196 = vadd.f32 %v955, %v1110
        %v1197 = vadd.f32 %v956, %v1112
        %v1198 = vadd.f32 %v957, %v1115
        %v1199 = vadd.f32 %v958, %v1117
        %v1200 = vadd.f32 %v959, %v1120
        %v1201 = vadd.f32 %v960, %v1122
        %v1202 = vadd.f32 %v961, %v1125
        %v1203 = vadd.f32 %v962, %v1127
        %v1204 = vadd.f32 %v963, %v1130
        %v1205 = vadd.f32 %v964, %v1132
        %v1206 = vadd.f32 %v965, %v1135
        %v1207 = vadd.f32 %v966, %v1137
        %v1208 = vadd.f32 %v967, %v1140
        %v1209 = vadd.f32 %v968, %v1142
        %v1210 = vadd.f32 %v969, %v1145
        %v1211 = vadd.f32 %v970, %v1147
        %v1212 = vperm.slane %v181, 5
        %v1213 = vmul.f32 %v306, %v1212
        %v1214 = vmul.f32 %v307, %v1212
        %v1215 = vmul.f32 %v308, %v1212
        %v1216 = vmul.f32 %v309, %v1212
        %v1217 = vmul.f32 %v310, %v1212
        %v1218 = vmul.f32 %v311, %v1212
        %v1219 = vmul.f32 %v312, %v1212
        %v1220 = vmul.f32 %v313, %v1212
        %v1221 = vmul.f32 %v314, %v1212
        %v1222 = vmul.f32 %v315, %v1212
        %v1223 = vmul.f32 %v316, %v1212
        %v1224 = vmul.f32 %v317, %v1212
        %v1225 = vmul.f32 %v318, %v1212
        %v1226 = vmul.f32 %v319, %v1212
        %v1227 = vmul.f32 %v320, %v1212
        %v1228 = vmul.f32 %v321, %v1212
        %v1229 = vmul.f32 %v322, %v1212
        %v1230 = vmul.f32 %v323, %v1212
        %v1231 = vmul.f32 %v324, %v1212
        %v1232 = vmul.f32 %v325, %v1212
        %v1233 = vmul.f32 %v326, %v1212
        %v1234 = vmul.f32 %v327, %v1212
        %v1235 = vmul.f32 %v328, %v1212
        %v1236 = vmul.f32 %v329, %v1212
        %v1237 = vmul.f32 %v330, %v1212
        %v1238 = vmul.f32 %v331, %v1212
        %v1239 = vmul.f32 %v332, %v1212
        %v1240 = vmul.f32 %v333, %v1212
        %v1241 = vmul.f32 %v334, %v1212
        %v1242 = vmul.f32 %v335, %v1212
        %v1243 = vmul.f32 %v336, %v1212
        %v1244 = vmul.f32 %v337, %v1212
        %v1245 = vmul.f32 %v338, %v1212
        %v1246 = vmul.f32 %v339, %v1212
        %v1247 = vmul.f32 %v340, %v1212
        %v1248 = vmul.f32 %v341, %v1212
        %v1249 = vmul.f32 %v342, %v1212
        %v1250 = vmul.f32 %v343, %v1212
        %v1251 = vmul.f32 %v344, %v1212
        %v1252 = vmul.f32 %v345, %v1212
        %v1253 = vmul.f32 %v346, %v1212
        %v1254 = vmul.f32 %v347, %v1212
        %v1255 = vmul.f32 %v348, %v1212
        %v1256 = vmul.f32 %v349, %v1212
        %v1257 = vmul.f32 %v350, %v1212
        %v1258 = vmul.f32 %v351, %v1212
        %v1259 = vmul.f32 %v352, %v1212
        %v1260 = vmul.f32 %v353, %v1212
        %v1309 = vrot.slane %v1213, 2
        %v1310 = vrot.slane %v1214, 2
        %v1311 = vsel %vm761, %v1309, %v1310
        %v1312 = vrot.slane %v1215, 2
        %v1313 = vsel %vm761, %v1310, %v1312
        %v1314 = vrot.slane %v1216, 2
        %v1315 = vrot.slane %v1217, 2
        %v1316 = vsel %vm761, %v1314, %v1315
        %v1317 = vrot.slane %v1218, 2
        %v1318 = vsel %vm761, %v1315, %v1317
        %v1319 = vrot.slane %v1219, 2
        %v1320 = vrot.slane %v1220, 2
        %v1321 = vsel %vm761, %v1319, %v1320
        %v1322 = vrot.slane %v1221, 2
        %v1323 = vsel %vm761, %v1320, %v1322
        %v1324 = vrot.slane %v1222, 2
        %v1325 = vrot.slane %v1223, 2
        %v1326 = vsel %vm761, %v1324, %v1325
        %v1327 = vrot.slane %v1224, 2
        %v1328 = vsel %vm761, %v1325, %v1327
        %v1329 = vrot.slane %v1225, 2
        %v1330 = vrot.slane %v1226, 2
        %v1331 = vsel %vm761, %v1329, %v1330
        %v1332 = vrot.slane %v1227, 2
        %v1333 = vsel %vm761, %v1330, %v1332
        %v1334 = vrot.slane %v1228, 2
        %v1335 = vrot.slane %v1229, 2
        %v1336 = vsel %vm761, %v1334, %v1335
        %v1337 = vrot.slane %v1230, 2
        %v1338 = vsel %vm761, %v1335, %v1337
        %v1339 = vrot.slane %v1231, 2
        %v1340 = vrot.slane %v1232, 2
        %v1341 = vsel %vm761, %v1339, %v1340
        %v1342 = vrot.slane %v1233, 2
        %v1343 = vsel %vm761, %v1340, %v1342
        %v1344 = vrot.slane %v1234, 2
        %v1345 = vrot.slane %v1235, 2
        %v1346 = vsel %vm761, %v1344, %v1345
        %v1347 = vrot.slane %v1236, 2
        %v1348 = vsel %vm761, %v1345, %v1347
        %v1349 = vrot.slane %v1237, 2
        %v1350 = vrot.slane %v1238, 2
        %v1351 = vsel %vm761, %v1349, %v1350
        %v1352 = vrot.slane %v1239, 2
        %v1353 = vsel %vm761, %v1350, %v1352
        %v1354 = vrot.slane %v1240, 2
        %v1355 = vrot.slane %v1241, 2
        %v1356 = vsel %vm761, %v1354, %v1355
        %v1357 = vrot.slane %v1242, 2
        %v1358 = vsel %vm761, %v1355, %v1357
        %v1359 = vrot.slane %v1243, 2
        %v1360 = vrot.slane %v1244, 2
        %v1361 = vsel %vm761, %v1359, %v1360
        %v1362 = vrot.slane %v1245, 2
        %v1363 = vsel %vm761, %v1360, %v1362
        %v1364 = vrot.slane %v1246, 2
        %v1365 = vrot.slane %v1247, 2
        %v1366 = vsel %vm761, %v1364, %v1365
        %v1367 = vrot.slane %v1248, 2
        %v1368 = vsel %vm761, %v1365, %v1367
        %v1369 = vrot.slane %v1249, 2
        %v1370 = vrot.slane %v1250, 2
        %v1371 = vsel %vm761, %v1369, %v1370
        %v1372 = vrot.slane %v1251, 2
        %v1373 = vsel %vm761, %v1370, %v1372
        %v1374 = vrot.slane %v1252, 2
        %v1375 = vrot.slane %v1253, 2
        %v1376 = vsel %vm761, %v1374, %v1375
        %v1377 = vrot.slane %v1254, 2
        %v1378 = vsel %vm761, %v1375, %v1377
        %v1379 = vrot.slane %v1255, 2
        %v1380 = vrot.slane %v1256, 2
        %v1381 = vsel %vm761, %v1379, %v1380
        %v1382 = vrot.slane %v1257, 2
        %v1383 = vsel %vm761, %v1380, %v1382
        %v1384 = vrot.slane %v1258, 2
        %v1385 = vrot.slane %v1259, 2
        %v1386 = vsel %vm761, %v1384, %v1385
        %v1387 = vrot.slane %v1260, 2
        %v1388 = vsel %vm761, %v1385, %v1387
        %v1421 = vadd.f32 %v1180, %v1311
        %v1422 = vadd.f32 %v1181, %v1313
        %v1423 = vadd.f32 %v1182, %v1316
        %v1424 = vadd.f32 %v1183, %v1318
        %v1425 = vadd.f32 %v1184, %v1321
        %v1426 = vadd.f32 %v1185, %v1323
        %v1427 = vadd.f32 %v1186, %v1326
        %v1428 = vadd.f32 %v1187, %v1328
        %v1429 = vadd.f32 %v1188, %v1331
        %v1430 = vadd.f32 %v1189, %v1333
        %v1431 = vadd.f32 %v1190, %v1336
        %v1432 = vadd.f32 %v1191, %v1338
        %v1433 = vadd.f32 %v1192, %v1341
        %v1434 = vadd.f32 %v1193, %v1343
        %v1435 = vadd.f32 %v1194, %v1346
        %v1436 = vadd.f32 %v1195, %v1348
        %v1437 = vadd.f32 %v1196, %v1351
        %v1438 = vadd.f32 %v1197, %v1353
        %v1439 = vadd.f32 %v1198, %v1356
        %v1440 = vadd.f32 %v1199, %v1358
        %v1441 = vadd.f32 %v1200, %v1361
        %v1442 = vadd.f32 %v1201, %v1363
        %v1443 = vadd.f32 %v1202, %v1366
        %v1444 = vadd.f32 %v1203, %v1368
        %v1445 = vadd.f32 %v1204, %v1371
        %v1446 = vadd.f32 %v1205, %v1373
        %v1447 = vadd.f32 %v1206, %v1376
        %v1448 = vadd.f32 %v1207, %v1378
        %v1449 = vadd.f32 %v1208, %v1381
        %v1450 = vadd.f32 %v1209, %v1383
        %v1451 = vadd.f32 %v1210, %v1386
        %v1452 = vadd.f32 %v1211, %v1388
        %v1453 = vperm.slane %v181, 6
        %v1454 = vmul.f32 %v309, %v1453
        %v1455 = vmul.f32 %v310, %v1453
        %v1456 = vmul.f32 %v312, %v1453
        %v1457 = vmul.f32 %v313, %v1453
        %v1458 = vmul.f32 %v315, %v1453
        %v1459 = vmul.f32 %v316, %v1453
        %v1460 = vmul.f32 %v318, %v1453
        %v1461 = vmul.f32 %v319, %v1453
        %v1462 = vmul.f32 %v321, %v1453
        %v1463 = vmul.f32 %v322, %v1453
        %v1464 = vmul.f32 %v324, %v1453
        %v1465 = vmul.f32 %v325, %v1453
        %v1466 = vmul.f32 %v327, %v1453
        %v1467 = vmul.f32 %v328, %v1453
        %v1468 = vmul.f32 %v330, %v1453
        %v1469 = vmul.f32 %v331, %v1453
        %v1470 = vmul.f32 %v333, %v1453
        %v1471 = vmul.f32 %v334, %v1453
        %v1472 = vmul.f32 %v336, %v1453
        %v1473 = vmul.f32 %v337, %v1453
        %v1474 = vmul.f32 %v339, %v1453
        %v1475 = vmul.f32 %v340, %v1453
        %v1476 = vmul.f32 %v342, %v1453
        %v1477 = vmul.f32 %v343, %v1453
        %v1478 = vmul.f32 %v345, %v1453
        %v1479 = vmul.f32 %v346, %v1453
        %v1480 = vmul.f32 %v348, %v1453
        %v1481 = vmul.f32 %v349, %v1453
        %v1482 = vmul.f32 %v351, %v1453
        %v1483 = vmul.f32 %v352, %v1453
        %v1484 = vmul.f32 %v354, %v1453
        %v1485 = vmul.f32 %v355, %v1453
        %v1486 = vadd.f32 %v1421, %v1454
        %v1487 = vadd.f32 %v1422, %v1455
        %v1488 = vadd.f32 %v1423, %v1456
        %v1489 = vadd.f32 %v1424, %v1457
        %v1490 = vadd.f32 %v1425, %v1458
        %v1491 = vadd.f32 %v1426, %v1459
        %v1492 = vadd.f32 %v1427, %v1460
        %v1493 = vadd.f32 %v1428, %v1461
        %v1494 = vadd.f32 %v1429, %v1462
        %v1495 = vadd.f32 %v1430, %v1463
        %v1496 = vadd.f32 %v1431, %v1464
        %v1497 = vadd.f32 %v1432, %v1465
        %v1498 = vadd.f32 %v1433, %v1466
        %v1499 = vadd.f32 %v1434, %v1467
        %v1500 = vadd.f32 %v1435, %v1468
        %v1501 = vadd.f32 %v1436, %v1469
        %v1502 = vadd.f32 %v1437, %v1470
        %v1503 = vadd.f32 %v1438, %v1471
        %v1504 = vadd.f32 %v1439, %v1472
        %v1505 = vadd.f32 %v1440, %v1473
        %v1506 = vadd.f32 %v1441, %v1474
        %v1507 = vadd.f32 %v1442, %v1475
        %v1508 = vadd.f32 %v1443, %v1476
        %v1509 = vadd.f32 %v1444, %v1477
        %v1510 = vadd.f32 %v1445, %v1478
        %v1511 = vadd.f32 %v1446, %v1479
        %v1512 = vadd.f32 %v1447, %v1480
        %v1513 = vadd.f32 %v1448, %v1481
        %v1514 = vadd.f32 %v1449, %v1482
        %v1515 = vadd.f32 %v1450, %v1483
        %v1516 = vadd.f32 %v1451, %v1484
        %v1517 = vadd.f32 %v1452, %v1485
        %v1518 = vperm.slane %v181, 7
        %v1519 = vmul.f32 %v309, %v1518
        %v1520 = vmul.f32 %v310, %v1518
        %v1521 = vmul.f32 %v311, %v1518
        %v1522 = vmul.f32 %v312, %v1518
        %v1523 = vmul.f32 %v313, %v1518
        %v1524 = vmul.f32 %v314, %v1518
        %v1525 = vmul.f32 %v315, %v1518
        %v1526 = vmul.f32 %v316, %v1518
        %v1527 = vmul.f32 %v317, %v1518
        %v1528 = vmul.f32 %v318, %v1518
        %v1529 = vmul.f32 %v319, %v1518
        %v1530 = vmul.f32 %v320, %v1518
        %v1531 = vmul.f32 %v321, %v1518
        %v1532 = vmul.f32 %v322, %v1518
        %v1533 = vmul.f32 %v323, %v1518
        %v1534 = vmul.f32 %v324, %v1518
        %v1535 = vmul.f32 %v325, %v1518
        %v1536 = vmul.f32 %v326, %v1518
        %v1537 = vmul.f32 %v327, %v1518
        %v1538 = vmul.f32 %v328, %v1518
        %v1539 = vmul.f32 %v329, %v1518
        %v1540 = vmul.f32 %v330, %v1518
        %v1541 = vmul.f32 %v331, %v1518
        %v1542 = vmul.f32 %v332, %v1518
        %v1543 = vmul.f32 %v333, %v1518
        %v1544 = vmul.f32 %v334, %v1518
        %v1545 = vmul.f32 %v335, %v1518
        %v1546 = vmul.f32 %v336, %v1518
        %v1547 = vmul.f32 %v337, %v1518
        %v1548 = vmul.f32 %v338, %v1518
        %v1549 = vmul.f32 %v339, %v1518
        %v1550 = vmul.f32 %v340, %v1518
        %v1551 = vmul.f32 %v341, %v1518
        %v1552 = vmul.f32 %v342, %v1518
        %v1553 = vmul.f32 %v343, %v1518
        %v1554 = vmul.f32 %v344, %v1518
        %v1555 = vmul.f32 %v345, %v1518
        %v1556 = vmul.f32 %v346, %v1518
        %v1557 = vmul.f32 %v347, %v1518
        %v1558 = vmul.f32 %v348, %v1518
        %v1559 = vmul.f32 %v349, %v1518
        %v1560 = vmul.f32 %v350, %v1518
        %v1561 = vmul.f32 %v351, %v1518
        %v1562 = vmul.f32 %v352, %v1518
        %v1563 = vmul.f32 %v353, %v1518
        %v1564 = vmul.f32 %v354, %v1518
        %v1565 = vmul.f32 %v355, %v1518
        %v1566 = vmul.f32 %v356, %v1518
        %v1615 = vrot.slane %v1519, 1
        %v1616 = vrot.slane %v1520, 1
        %v1617 = vsel %vm519, %v1615, %v1616
        %v1618 = vrot.slane %v1521, 1
        %v1619 = vsel %vm519, %v1616, %v1618
        %v1620 = vrot.slane %v1522, 1
        %v1621 = vrot.slane %v1523, 1
        %v1622 = vsel %vm519, %v1620, %v1621
        %v1623 = vrot.slane %v1524, 1
        %v1624 = vsel %vm519, %v1621, %v1623
        %v1625 = vrot.slane %v1525, 1
        %v1626 = vrot.slane %v1526, 1
        %v1627 = vsel %vm519, %v1625, %v1626
        %v1628 = vrot.slane %v1527, 1
        %v1629 = vsel %vm519, %v1626, %v1628
        %v1630 = vrot.slane %v1528, 1
        %v1631 = vrot.slane %v1529, 1
        %v1632 = vsel %vm519, %v1630, %v1631
        %v1633 = vrot.slane %v1530, 1
        %v1634 = vsel %vm519, %v1631, %v1633
        %v1635 = vrot.slane %v1531, 1
        %v1636 = vrot.slane %v1532, 1
        %v1637 = vsel %vm519, %v1635, %v1636
        %v1638 = vrot.slane %v1533, 1
        %v1639 = vsel %vm519, %v1636, %v1638
        %v1640 = vrot.slane %v1534, 1
        %v1641 = vrot.slane %v1535, 1
        %v1642 = vsel %vm519, %v1640, %v1641
        %v1643 = vrot.slane %v1536, 1
        %v1644 = vsel %vm519, %v1641, %v1643
        %v1645 = vrot.slane %v1537, 1
        %v1646 = vrot.slane %v1538, 1
        %v1647 = vsel %vm519, %v1645, %v1646
        %v1648 = vrot.slane %v1539, 1
        %v1649 = vsel %vm519, %v1646, %v1648
        %v1650 = vrot.slane %v1540, 1
        %v1651 = vrot.slane %v1541, 1
        %v1652 = vsel %vm519, %v1650, %v1651
        %v1653 = vrot.slane %v1542, 1
        %v1654 = vsel %vm519, %v1651, %v1653
        %v1655 = vrot.slane %v1543, 1
        %v1656 = vrot.slane %v1544, 1
        %v1657 = vsel %vm519, %v1655, %v1656
        %v1658 = vrot.slane %v1545, 1
        %v1659 = vsel %vm519, %v1656, %v1658
        %v1660 = vrot.slane %v1546, 1
        %v1661 = vrot.slane %v1547, 1
        %v1662 = vsel %vm519, %v1660, %v1661
        %v1663 = vrot.slane %v1548, 1
        %v1664 = vsel %vm519, %v1661, %v1663
        %v1665 = vrot.slane %v1549, 1
        %v1666 = vrot.slane %v1550, 1
        %v1667 = vsel %vm519, %v1665, %v1666
        %v1668 = vrot.slane %v1551, 1
        %v1669 = vsel %vm519, %v1666, %v1668
        %v1670 = vrot.slane %v1552, 1
        %v1671 = vrot.slane %v1553, 1
        %v1672 = vsel %vm519, %v1670, %v1671
        %v1673 = vrot.slane %v1554, 1
        %v1674 = vsel %vm519, %v1671, %v1673
        %v1675 = vrot.slane %v1555, 1
        %v1676 = vrot.slane %v1556, 1
        %v1677 = vsel %vm519, %v1675, %v1676
        %v1678 = vrot.slane %v1557, 1
        %v1679 = vsel %vm519, %v1676, %v1678
        %v1680 = vrot.slane %v1558, 1
        %v1681 = vrot.slane %v1559, 1
        %v1682 = vsel %vm519, %v1680, %v1681
        %v1683 = vrot.slane %v1560, 1
        %v1684 = vsel %vm519, %v1681, %v1683
        %v1685 = vrot.slane %v1561, 1
        %v1686 = vrot.slane %v1562, 1
        %v1687 = vsel %vm519, %v1685, %v1686
        %v1688 = vrot.slane %v1563, 1
        %v1689 = vsel %vm519, %v1686, %v1688
        %v1690 = vrot.slane %v1564, 1
        %v1691 = vrot.slane %v1565, 1
        %v1692 = vsel %vm519, %v1690, %v1691
        %v1693 = vrot.slane %v1566, 1
        %v1694 = vsel %vm519, %v1691, %v1693
        %v1727 = vadd.f32 %v1486, %v1617
        %v1728 = vadd.f32 %v1487, %v1619
        %v1729 = vadd.f32 %v1488, %v1622
        %v1730 = vadd.f32 %v1489, %v1624
        %v1731 = vadd.f32 %v1490, %v1627
        %v1732 = vadd.f32 %v1491, %v1629
        %v1733 = vadd.f32 %v1492, %v1632
        %v1734 = vadd.f32 %v1493, %v1634
        %v1735 = vadd.f32 %v1494, %v1637
        %v1736 = vadd.f32 %v1495, %v1639
        %v1737 = vadd.f32 %v1496, %v1642
        %v1738 = vadd.f32 %v1497, %v1644
        %v1739 = vadd.f32 %v1498, %v1647
        %v1740 = vadd.f32 %v1499, %v1649
        %v1741 = vadd.f32 %v1500, %v1652
        %v1742 = vadd.f32 %v1501, %v1654
        %v1743 = vadd.f32 %v1502, %v1657
        %v1744 = vadd.f32 %v1503, %v1659
        %v1745 = vadd.f32 %v1504, %v1662
        %v1746 = vadd.f32 %v1505, %v1664
        %v1747 = vadd.f32 %v1506, %v1667
        %v1748 = vadd.f32 %v1507, %v1669
        %v1749 = vadd.f32 %v1508, %v1672
        %v1750 = vadd.f32 %v1509, %v1674
        %v1751 = vadd.f32 %v1510, %v1677
        %v1752 = vadd.f32 %v1511, %v1679
        %v1753 = vadd.f32 %v1512, %v1682
        %v1754 = vadd.f32 %v1513, %v1684
        %v1755 = vadd.f32 %v1514, %v1687
        %v1756 = vadd.f32 %v1515, %v1689
        %v1757 = vadd.f32 %v1516, %v1692
        %v1758 = vadd.f32 %v1517, %v1694
        %v1759 = vperm.slane %v182, 0
        %v1760 = vmul.f32 %v309, %v1759
        %v1761 = vmul.f32 %v310, %v1759
        %v1762 = vmul.f32 %v311, %v1759
        %v1763 = vmul.f32 %v312, %v1759
        %v1764 = vmul.f32 %v313, %v1759
        %v1765 = vmul.f32 %v314, %v1759
        %v1766 = vmul.f32 %v315, %v1759
        %v1767 = vmul.f32 %v316, %v1759
        %v1768 = vmul.f32 %v317, %v1759
        %v1769 = vmul.f32 %v318, %v1759
        %v1770 = vmul.f32 %v319, %v1759
        %v1771 = vmul.f32 %v320, %v1759
        %v1772 = vmul.f32 %v321, %v1759
        %v1773 = vmul.f32 %v322, %v1759
        %v1774 = vmul.f32 %v323, %v1759
        %v1775 = vmul.f32 %v324, %v1759
        %v1776 = vmul.f32 %v325, %v1759
        %v1777 = vmul.f32 %v326, %v1759
        %v1778 = vmul.f32 %v327, %v1759
        %v1779 = vmul.f32 %v328, %v1759
        %v1780 = vmul.f32 %v329, %v1759
        %v1781 = vmul.f32 %v330, %v1759
        %v1782 = vmul.f32 %v331, %v1759
        %v1783 = vmul.f32 %v332, %v1759
        %v1784 = vmul.f32 %v333, %v1759
        %v1785 = vmul.f32 %v334, %v1759
        %v1786 = vmul.f32 %v335, %v1759
        %v1787 = vmul.f32 %v336, %v1759
        %v1788 = vmul.f32 %v337, %v1759
        %v1789 = vmul.f32 %v338, %v1759
        %v1790 = vmul.f32 %v339, %v1759
        %v1791 = vmul.f32 %v340, %v1759
        %v1792 = vmul.f32 %v341, %v1759
        %v1793 = vmul.f32 %v342, %v1759
        %v1794 = vmul.f32 %v343, %v1759
        %v1795 = vmul.f32 %v344, %v1759
        %v1796 = vmul.f32 %v345, %v1759
        %v1797 = vmul.f32 %v346, %v1759
        %v1798 = vmul.f32 %v347, %v1759
        %v1799 = vmul.f32 %v348, %v1759
        %v1800 = vmul.f32 %v349, %v1759
        %v1801 = vmul.f32 %v350, %v1759
        %v1802 = vmul.f32 %v351, %v1759
        %v1803 = vmul.f32 %v352, %v1759
        %v1804 = vmul.f32 %v353, %v1759
        %v1805 = vmul.f32 %v354, %v1759
        %v1806 = vmul.f32 %v355, %v1759
        %v1807 = vmul.f32 %v356, %v1759
        %v1856 = vrot.slane %v1760, 2
        %v1857 = vrot.slane %v1761, 2
        %v1858 = vsel %vm761, %v1856, %v1857
        %v1859 = vrot.slane %v1762, 2
        %v1860 = vsel %vm761, %v1857, %v1859
        %v1861 = vrot.slane %v1763, 2
        %v1862 = vrot.slane %v1764, 2
        %v1863 = vsel %vm761, %v1861, %v1862
        %v1864 = vrot.slane %v1765, 2
        %v1865 = vsel %vm761, %v1862, %v1864
        %v1866 = vrot.slane %v1766, 2
        %v1867 = vrot.slane %v1767, 2
        %v1868 = vsel %vm761, %v1866, %v1867
        %v1869 = vrot.slane %v1768, 2
        %v1870 = vsel %vm761, %v1867, %v1869
        %v1871 = vrot.slane %v1769, 2
        %v1872 = vrot.slane %v1770, 2
        %v1873 = vsel %vm761, %v1871, %v1872
        %v1874 = vrot.slane %v1771, 2
        %v1875 = vsel %vm761, %v1872, %v1874
        %v1876 = vrot.slane %v1772, 2
        %v1877 = vrot.slane %v1773, 2
        %v1878 = vsel %vm761, %v1876, %v1877
        %v1879 = vrot.slane %v1774, 2
        %v1880 = vsel %vm761, %v1877, %v1879
        %v1881 = vrot.slane %v1775, 2
        %v1882 = vrot.slane %v1776, 2
        %v1883 = vsel %vm761, %v1881, %v1882
        %v1884 = vrot.slane %v1777, 2
        %v1885 = vsel %vm761, %v1882, %v1884
        %v1886 = vrot.slane %v1778, 2
        %v1887 = vrot.slane %v1779, 2
        %v1888 = vsel %vm761, %v1886, %v1887
        %v1889 = vrot.slane %v1780, 2
        %v1890 = vsel %vm761, %v1887, %v1889
        %v1891 = vrot.slane %v1781, 2
        %v1892 = vrot.slane %v1782, 2
        %v1893 = vsel %vm761, %v1891, %v1892
        %v1894 = vrot.slane %v1783, 2
        %v1895 = vsel %vm761, %v1892, %v1894
        %v1896 = vrot.slane %v1784, 2
        %v1897 = vrot.slane %v1785, 2
        %v1898 = vsel %vm761, %v1896, %v1897
        %v1899 = vrot.slane %v1786, 2
        %v1900 = vsel %vm761, %v1897, %v1899
        %v1901 = vrot.slane %v1787, 2
        %v1902 = vrot.slane %v1788, 2
        %v1903 = vsel %vm761, %v1901, %v1902
        %v1904 = vrot.slane %v1789, 2
        %v1905 = vsel %vm761, %v1902, %v1904
        %v1906 = vrot.slane %v1790, 2
        %v1907 = vrot.slane %v1791, 2
        %v1908 = vsel %vm761, %v1906, %v1907
        %v1909 = vrot.slane %v1792, 2
        %v1910 = vsel %vm761, %v1907, %v1909
        %v1911 = vrot.slane %v1793, 2
        %v1912 = vrot.slane %v1794, 2
        %v1913 = vsel %vm761, %v1911, %v1912
        %v1914 = vrot.slane %v1795, 2
        %v1915 = vsel %vm761, %v1912, %v1914
        %v1916 = vrot.slane %v1796, 2
        %v1917 = vrot.slane %v1797, 2
        %v1918 = vsel %vm761, %v1916, %v1917
        %v1919 = vrot.slane %v1798, 2
        %v1920 = vsel %vm761, %v1917, %v1919
        %v1921 = vrot.slane %v1799, 2
        %v1922 = vrot.slane %v1800, 2
        %v1923 = vsel %vm761, %v1921, %v1922
        %v1924 = vrot.slane %v1801, 2
        %v1925 = vsel %vm761, %v1922, %v1924
        %v1926 = vrot.slane %v1802, 2
        %v1927 = vrot.slane %v1803, 2
        %v1928 = vsel %vm761, %v1926, %v1927
        %v1929 = vrot.slane %v1804, 2
        %v1930 = vsel %vm761, %v1927, %v1929
        %v1931 = vrot.slane %v1805, 2
        %v1932 = vrot.slane %v1806, 2
        %v1933 = vsel %vm761, %v1931, %v1932
        %v1934 = vrot.slane %v1807, 2
        %v1935 = vsel %vm761, %v1932, %v1934
        %v1968 = vadd.f32 %v1727, %v1858
        %v1969 = vadd.f32 %v1728, %v1860
        %v1970 = vadd.f32 %v1729, %v1863
        %v1971 = vadd.f32 %v1730, %v1865
        %v1972 = vadd.f32 %v1731, %v1868
        %v1973 = vadd.f32 %v1732, %v1870
        %v1974 = vadd.f32 %v1733, %v1873
        %v1975 = vadd.f32 %v1734, %v1875
        %v1976 = vadd.f32 %v1735, %v1878
        %v1977 = vadd.f32 %v1736, %v1880
        %v1978 = vadd.f32 %v1737, %v1883
        %v1979 = vadd.f32 %v1738, %v1885
        %v1980 = vadd.f32 %v1739, %v1888
        %v1981 = vadd.f32 %v1740, %v1890
        %v1982 = vadd.f32 %v1741, %v1893
        %v1983 = vadd.f32 %v1742, %v1895
        %v1984 = vadd.f32 %v1743, %v1898
        %v1985 = vadd.f32 %v1744, %v1900
        %v1986 = vadd.f32 %v1745, %v1903
        %v1987 = vadd.f32 %v1746, %v1905
        %v1988 = vadd.f32 %v1747, %v1908
        %v1989 = vadd.f32 %v1748, %v1910
        %v1990 = vadd.f32 %v1749, %v1913
        %v1991 = vadd.f32 %v1750, %v1915
        %v1992 = vadd.f32 %v1751, %v1918
        %v1993 = vadd.f32 %v1752, %v1920
        %v1994 = vadd.f32 %v1753, %v1923
        %v1995 = vadd.f32 %v1754, %v1925
        %v1996 = vadd.f32 %v1755, %v1928
        %v1997 = vadd.f32 %v1756, %v1930
        %v1998 = vadd.f32 %v1757, %v1933
        %v1999 = vadd.f32 %v1758, %v1935
        %v2000 = vperm.slane %v182, 1
        %v2001 = vadd.f32 %v1968, %v2000
        %v2002 = vadd.f32 %v1969, %v2000
        %v2003 = vadd.f32 %v1970, %v2000
        %v2004 = vadd.f32 %v1971, %v2000
        %v2005 = vadd.f32 %v1972, %v2000
        %v2006 = vadd.f32 %v1973, %v2000
        %v2007 = vadd.f32 %v1974, %v2000
        %v2008 = vadd.f32 %v1975, %v2000
        %v2009 = vadd.f32 %v1976, %v2000
        %v2010 = vadd.f32 %v1977, %v2000
        %v2011 = vadd.f32 %v1978, %v2000
        %v2012 = vadd.f32 %v1979, %v2000
        %v2013 = vadd.f32 %v1980, %v2000
        %v2014 = vadd.f32 %v1981, %v2000
        %v2015 = vadd.f32 %v1982, %v2000
        %v2016 = vadd.f32 %v1983, %v2000
        %v2017 = vadd.f32 %v1984, %v2000
        %v2018 = vadd.f32 %v1985, %v2000
        %v2019 = vadd.f32 %v1986, %v2000
        %v2020 = vadd.f32 %v1987, %v2000
        %v2021 = vadd.f32 %v1988, %v2000
        %v2022 = vadd.f32 %v1989, %v2000
        %v2023 = vadd.f32 %v1990, %v2000
        %v2024 = vadd.f32 %v1991, %v2000
        %v2025 = vadd.f32 %v1992, %v2000
        %v2026 = vadd.f32 %v1993, %v2000
        %v2027 = vadd.f32 %v1994, %v2000
        %v2028 = vadd.f32 %v1995, %v2000
        %v2029 = vadd.f32 %v1996, %v2000
        %v2030 = vadd.f32 %v1997, %v2000
        %v2031 = vadd.f32 %v1998, %v2000
        %v2032 = vadd.f32 %v1999, %v2000
        %v2033 = vmul.f32 %v2001, 0.5
        %v2034 = vmul.f32 %v2002, 0.5
        %v2035 = vmul.f32 %v2003, 0.5
        %v2036 = vmul.f32 %v2004, 0.5
        %v2037 = vmul.f32 %v2005, 0.5
        %v2038 = vmul.f32 %v2006, 0.5
        %v2039 = vmul.f32 %v2007, 0.5
        %v2040 = vmul.f32 %v2008, 0.5
        %v2041 = vmul.f32 %v2009, 0.5
        %v2042 = vmul.f32 %v2010, 0.5
        %v2043 = vmul.f32 %v2011, 0.5
        %v2044 = vmul.f32 %v2012, 0.5
        %v2045 = vmul.f32 %v2013, 0.5
        %v2046 = vmul.f32 %v2014, 0.5
        %v2047 = vmul.f32 %v2015, 0.5
        %v2048 = vmul.f32 %v2016, 0.5
        %v2049 = vmul.f32 %v2017, 0.5
        %v2050 = vmul.f32 %v2018, 0.5
        %v2051 = vmul.f32 %v2019, 0.5
        %v2052 = vmul.f32 %v2020, 0.5
        %v2053 = vmul.f32 %v2021, 0.5
        %v2054 = vmul.f32 %v2022, 0.5
        %v2055 = vmul.f32 %v2023, 0.5
        %v2056 = vmul.f32 %v2024, 0.5
        %v2057 = vmul.f32 %v2025, 0.5
        %v2058 = vmul.f32 %v2026, 0.5
        %v2059 = vmul.f32 %v2027, 0.5
        %v2060 = vmul.f32 %v2028, 0.5
        %v2061 = vmul.f32 %v2029, 0.5
        %v2062 = vmul.f32 %v2030, 0.5
        %v2063 = vmul.f32 %v2031, 0.5
        %v2064 = vmul.f32 %v2032, 0.5
        %v2065 = vmul.f32 %v2001, 0.70710677
        %v2066 = vmul.f32 %v2002, 0.70710677
        %v2067 = vmul.f32 %v2003, 0.70710677
        %v2068 = vmul.f32 %v2004, 0.70710677
        %v2069 = vmul.f32 %v2005, 0.70710677
        %v2070 = vmul.f32 %v2006, 0.70710677
        %v2071 = vmul.f32 %v2007, 0.70710677
        %v2072 = vmul.f32 %v2008, 0.70710677
        %v2073 = vmul.f32 %v2009, 0.70710677
        %v2074 = vmul.f32 %v2010, 0.70710677
        %v2075 = vmul.f32 %v2011, 0.70710677
        %v2076 = vmul.f32 %v2012, 0.70710677
        %v2077 = vmul.f32 %v2013, 0.70710677
        %v2078 = vmul.f32 %v2014, 0.70710677
        %v2079 = vmul.f32 %v2015, 0.70710677
        %v2080 = vmul.f32 %v2016, 0.70710677
        %v2081 = vmul.f32 %v2017, 0.70710677
        %v2082 = vmul.f32 %v2018, 0.70710677
        %v2083 = vmul.f32 %v2019, 0.70710677
        %v2084 = vmul.f32 %v2020, 0.70710677
        %v2085 = vmul.f32 %v2021, 0.70710677
        %v2086 = vmul.f32 %v2022, 0.70710677
        %v2087 = vmul.f32 %v2023, 0.70710677
        %v2088 = vmul.f32 %v2024, 0.70710677
        %v2089 = vmul.f32 %v2025, 0.70710677
        %v2090 = vmul.f32 %v2026, 0.70710677
        %v2091 = vmul.f32 %v2027, 0.70710677
        %v2092 = vmul.f32 %v2028, 0.70710677
        %v2093 = vmul.f32 %v2029, 0.70710677
        %v2094 = vmul.f32 %v2030, 0.70710677
        %v2095 = vmul.f32 %v2031, 0.70710677
        %v2096 = vmul.f32 %v2032, 0.70710677
        %v2097 = vmul.f32 %v2065, %v2065
        %v2098 = vmin.f32 16.0, %v2097
        %v2099 = vmul.f32 %v2098, 2.1237322e-06
        %v2100 = vadd.f32 %v2099, 0.00028619796
        %v2101 = vmul.f32 %v2098, %v2100
        %v2102 = vadd.f32 %v2101, 0.0036580483
        %v2103 = vmul.f32 %v2098, %v2102
        %v2104 = vadd.f32 %v2103, 0.05243302
        %v2105 = vmul.f32 %v2098, %v2104
        %v2106 = vadd.f32 %v2105, 0.18741608
        %v2107 = vmul.f32 %v2098, %v2106
        %v2108 = vadd.f32 %v2107, 1.1283791
        %v2109 = vmul.f32 %v2065, %v2108
        %v2110 = vmul.f32 %v2098, 3.8918573e-05
        %v2111 = vadd.f32 %v2110, 0.001143296
        %v2112 = vmul.f32 %v2098, %v2111
        %v2113 = vadd.f32 %v2112, 0.014752088
        %v2114 = vmul.f32 %v2098, %v2113
        %v2115 = vadd.f32 %v2114, 0.112945676
        %v2116 = vmul.f32 %v2098, %v2115
        %v2117 = vadd.f32 %v2116, 0.4994258
        %v2118 = vmul.f32 %v2098, %v2117
        %v2119 = vadd.f32 %v2118, 1.0
        %v2120 = vrcp.pop %v2119
        %v2121 = vmul.f32 %v2119, %v2120
        %v2122 = vsub.f32 1.0, %v2121
        %v2123 = vmul.f32 %v2120, %v2122
        %v2124 = vadd.f32 %v2120, %v2123
        %vm2125 = vweird.f32 %v2119
        %vm2126 = vweird.f32 %v2120
        %vm2127 = vmor %vm2125, %vm2126
        %v2128 = vsel %vm2127, %v2120, %v2124
        %v2129 = vand.u32 2147483647, %v2119
        %vm2130 = vcmp.eq.f32.partialorder %v2129, 8.507059e+37
        %v2131 = vand.u32 %v2119, 2147483648
        %v2132 = vor.u32 1.1754944e-38, %v2131
        %v2133 = vsel %vm2130, %v2132, %v2128
        %v2134 = vmul.f32 %v2109, %v2133
        %v2135 = vmin.f32 %v2134, 1.0
        %v2136 = vmax.f32 %v2135, -1.0
        %v2137 = vmul.f32 %v2066, %v2066
        %v2138 = vmin.f32 16.0, %v2137
        %v2139 = vmul.f32 %v2138, 2.1237322e-06
        %v2140 = vadd.f32 %v2139, 0.00028619796
        %v2141 = vmul.f32 %v2138, %v2140
        %v2142 = vadd.f32 %v2141, 0.0036580483
        %v2143 = vmul.f32 %v2138, %v2142
        %v2144 = vadd.f32 %v2143, 0.05243302
        %v2145 = vmul.f32 %v2138, %v2144
        %v2146 = vadd.f32 %v2145, 0.18741608
        %v2147 = vmul.f32 %v2138, %v2146
        %v2148 = vadd.f32 %v2147, 1.1283791
        %v2149 = vmul.f32 %v2066, %v2148
        %v2150 = vmul.f32 %v2138, 3.8918573e-05
        %v2151 = vadd.f32 %v2150, 0.001143296
        %v2152 = vmul.f32 %v2138, %v2151
        %v2153 = vadd.f32 %v2152, 0.014752088
        %v2154 = vmul.f32 %v2138, %v2153
        %v2155 = vadd.f32 %v2154, 0.112945676
        %v2156 = vmul.f32 %v2138, %v2155
        %v2157 = vadd.f32 %v2156, 0.4994258
        %v2158 = vmul.f32 %v2138, %v2157
        %v2159 = vadd.f32 %v2158, 1.0
        %v2160 = vrcp.pop %v2159
        %v2161 = vmul.f32 %v2159, %v2160
        %v2162 = vsub.f32 1.0, %v2161
        %v2163 = vmul.f32 %v2160, %v2162
        %v2164 = vadd.f32 %v2160, %v2163
        %vm2165 = vweird.f32 %v2159
        %vm2166 = vweird.f32 %v2160
        %vm2167 = vmor %vm2165, %vm2166
        %v2168 = vsel %vm2167, %v2160, %v2164
        %v2169 = vand.u32 2147483647, %v2159
        %vm2170 = vcmp.eq.f32.partialorder %v2169, 8.507059e+37
        %v2171 = vand.u32 %v2159, 2147483648
        %v2172 = vor.u32 1.1754944e-38, %v2171
        %v2173 = vsel %vm2170, %v2172, %v2168
        %v2174 = vmul.f32 %v2149, %v2173
        %v2175 = vmin.f32 %v2174, 1.0
        %v2176 = vmax.f32 %v2175, -1.0
        %v2177 = vmul.f32 %v2067, %v2067
        %v2178 = vmin.f32 16.0, %v2177
        %v2179 = vmul.f32 %v2178, 2.1237322e-06
        %v2180 = vadd.f32 %v2179, 0.00028619796
        %v2181 = vmul.f32 %v2178, %v2180
        %v2182 = vadd.f32 %v2181, 0.0036580483
        %v2183 = vmul.f32 %v2178, %v2182
        %v2184 = vadd.f32 %v2183, 0.05243302
        %v2185 = vmul.f32 %v2178, %v2184
        %v2186 = vadd.f32 %v2185, 0.18741608
        %v2187 = vmul.f32 %v2178, %v2186
        %v2188 = vadd.f32 %v2187, 1.1283791
        %v2189 = vmul.f32 %v2067, %v2188
        %v2190 = vmul.f32 %v2178, 3.8918573e-05
        %v2191 = vadd.f32 %v2190, 0.001143296
        %v2192 = vmul.f32 %v2178, %v2191
        %v2193 = vadd.f32 %v2192, 0.014752088
        %v2194 = vmul.f32 %v2178, %v2193
        %v2195 = vadd.f32 %v2194, 0.112945676
        %v2196 = vmul.f32 %v2178, %v2195
        %v2197 = vadd.f32 %v2196, 0.4994258
        %v2198 = vmul.f32 %v2178, %v2197
        %v2199 = vadd.f32 %v2198, 1.0
        %v2200 = vrcp.pop %v2199
        %v2201 = vmul.f32 %v2199, %v2200
        %v2202 = vsub.f32 1.0, %v2201
        %v2203 = vmul.f32 %v2200, %v2202
        %v2204 = vadd.f32 %v2200, %v2203
        %vm2205 = vweird.f32 %v2199
        %vm2206 = vweird.f32 %v2200
        %vm2207 = vmor %vm2205, %vm2206
        %v2208 = vsel %vm2207, %v2200, %v2204
        %v2209 = vand.u32 2147483647, %v2199
        %vm2210 = vcmp.eq.f32.partialorder %v2209, 8.507059e+37
        %v2211 = vand.u32 %v2199, 2147483648
        %v2212 = vor.u32 1.1754944e-38, %v2211
        %v2213 = vsel %vm2210, %v2212, %v2208
        %v2214 = vmul.f32 %v2189, %v2213
        %v2215 = vmin.f32 %v2214, 1.0
        %v2216 = vmax.f32 %v2215, -1.0
        %v2217 = vmul.f32 %v2068, %v2068
        %v2218 = vmin.f32 16.0, %v2217
        %v2219 = vmul.f32 %v2218, 2.1237322e-06
        %v2220 = vadd.f32 %v2219, 0.00028619796
        %v2221 = vmul.f32 %v2218, %v2220
        %v2222 = vadd.f32 %v2221, 0.0036580483
        %v2223 = vmul.f32 %v2218, %v2222
        %v2224 = vadd.f32 %v2223, 0.05243302
        %v2225 = vmul.f32 %v2218, %v2224
        %v2226 = vadd.f32 %v2225, 0.18741608
        %v2227 = vmul.f32 %v2218, %v2226
        %v2228 = vadd.f32 %v2227, 1.1283791
        %v2229 = vmul.f32 %v2068, %v2228
        %v2230 = vmul.f32 %v2218, 3.8918573e-05
        %v2231 = vadd.f32 %v2230, 0.001143296
        %v2232 = vmul.f32 %v2218, %v2231
        %v2233 = vadd.f32 %v2232, 0.014752088
        %v2234 = vmul.f32 %v2218, %v2233
        %v2235 = vadd.f32 %v2234, 0.112945676
        %v2236 = vmul.f32 %v2218, %v2235
        %v2237 = vadd.f32 %v2236, 0.4994258
        %v2238 = vmul.f32 %v2218, %v2237
        %v2239 = vadd.f32 %v2238, 1.0
        %v2240 = vrcp.pop %v2239
        %v2241 = vmul.f32 %v2239, %v2240
        %v2242 = vsub.f32 1.0, %v2241
        %v2243 = vmul.f32 %v2240, %v2242
        %v2244 = vadd.f32 %v2240, %v2243
        %vm2245 = vweird.f32 %v2239
        %vm2246 = vweird.f32 %v2240
        %vm2247 = vmor %vm2245, %vm2246
        %v2248 = vsel %vm2247, %v2240, %v2244
        %v2249 = vand.u32 2147483647, %v2239
        %vm2250 = vcmp.eq.f32.partialorder %v2249, 8.507059e+37
        %v2251 = vand.u32 %v2239, 2147483648
        %v2252 = vor.u32 1.1754944e-38, %v2251
        %v2253 = vsel %vm2250, %v2252, %v2248
        %v2254 = vmul.f32 %v2229, %v2253
        %v2255 = vmin.f32 %v2254, 1.0
        %v2256 = vmax.f32 %v2255, -1.0
        %v2257 = vmul.f32 %v2069, %v2069
        %v2258 = vmin.f32 16.0, %v2257
        %v2259 = vmul.f32 %v2258, 2.1237322e-06
        %v2260 = vadd.f32 %v2259, 0.00028619796
        %v2261 = vmul.f32 %v2258, %v2260
        %v2262 = vadd.f32 %v2261, 0.0036580483
        %v2263 = vmul.f32 %v2258, %v2262
        %v2264 = vadd.f32 %v2263, 0.05243302
        %v2265 = vmul.f32 %v2258, %v2264
        %v2266 = vadd.f32 %v2265, 0.18741608
        %v2267 = vmul.f32 %v2258, %v2266
        %v2268 = vadd.f32 %v2267, 1.1283791
        %v2269 = vmul.f32 %v2069, %v2268
        %v2270 = vmul.f32 %v2258, 3.8918573e-05
        %v2271 = vadd.f32 %v2270, 0.001143296
        %v2272 = vmul.f32 %v2258, %v2271
        %v2273 = vadd.f32 %v2272, 0.014752088
        %v2274 = vmul.f32 %v2258, %v2273
        %v2275 = vadd.f32 %v2274, 0.112945676
        %v2276 = vmul.f32 %v2258, %v2275
        %v2277 = vadd.f32 %v2276, 0.4994258
        %v2278 = vmul.f32 %v2258, %v2277
        %v2279 = vadd.f32 %v2278, 1.0
        %v2280 = vrcp.pop %v2279
        %v2281 = vmul.f32 %v2279, %v2280
        %v2282 = vsub.f32 1.0, %v2281
        %v2283 = vmul.f32 %v2280, %v2282
        %v2284 = vadd.f32 %v2280, %v2283
        %vm2285 = vweird.f32 %v2279
        %vm2286 = vweird.f32 %v2280
        %vm2287 = vmor %vm2285, %vm2286
        %v2288 = vsel %vm2287, %v2280, %v2284
        %v2289 = vand.u32 2147483647, %v2279
        %vm2290 = vcmp.eq.f32.partialorder %v2289, 8.507059e+37
        %v2291 = vand.u32 %v2279, 2147483648
        %v2292 = vor.u32 1.1754944e-38, %v2291
        %v2293 = vsel %vm2290, %v2292, %v2288
        %v2294 = vmul.f32 %v2269, %v2293
        %v2295 = vmin.f32 %v2294, 1.0
        %v2296 = vmax.f32 %v2295, -1.0
        %v2297 = vmul.f32 %v2070, %v2070
        %v2298 = vmin.f32 16.0, %v2297
        %v2299 = vmul.f32 %v2298, 2.1237322e-06
        %v2300 = vadd.f32 %v2299, 0.00028619796
        %v2301 = vmul.f32 %v2298, %v2300
        %v2302 = vadd.f32 %v2301, 0.0036580483
        %v2303 = vmul.f32 %v2298, %v2302
        %v2304 = vadd.f32 %v2303, 0.05243302
        %v2305 = vmul.f32 %v2298, %v2304
        %v2306 = vadd.f32 %v2305, 0.18741608
        %v2307 = vmul.f32 %v2298, %v2306
        %v2308 = vadd.f32 %v2307, 1.1283791
        %v2309 = vmul.f32 %v2070, %v2308
        %v2310 = vmul.f32 %v2298, 3.8918573e-05
        %v2311 = vadd.f32 %v2310, 0.001143296
        %v2312 = vmul.f32 %v2298, %v2311
        %v2313 = vadd.f32 %v2312, 0.014752088
        %v2314 = vmul.f32 %v2298, %v2313
        %v2315 = vadd.f32 %v2314, 0.112945676
        %v2316 = vmul.f32 %v2298, %v2315
        %v2317 = vadd.f32 %v2316, 0.4994258
        %v2318 = vmul.f32 %v2298, %v2317
        %v2319 = vadd.f32 %v2318, 1.0
        %v2320 = vrcp.pop %v2319
        %v2321 = vmul.f32 %v2319, %v2320
        %v2322 = vsub.f32 1.0, %v2321
        %v2323 = vmul.f32 %v2320, %v2322
        %v2324 = vadd.f32 %v2320, %v2323
        %vm2325 = vweird.f32 %v2319
        %vm2326 = vweird.f32 %v2320
        %vm2327 = vmor %vm2325, %vm2326
        %v2328 = vsel %vm2327, %v2320, %v2324
        %v2329 = vand.u32 2147483647, %v2319
        %vm2330 = vcmp.eq.f32.partialorder %v2329, 8.507059e+37
        %v2331 = vand.u32 %v2319, 2147483648
        %v2332 = vor.u32 1.1754944e-38, %v2331
        %v2333 = vsel %vm2330, %v2332, %v2328
        %v2334 = vmul.f32 %v2309, %v2333
        %v2335 = vmin.f32 %v2334, 1.0
        %v2336 = vmax.f32 %v2335, -1.0
        %v2337 = vmul.f32 %v2071, %v2071
        %v2338 = vmin.f32 16.0, %v2337
        %v2339 = vmul.f32 %v2338, 2.1237322e-06
        %v2340 = vadd.f32 %v2339, 0.00028619796
        %v2341 = vmul.f32 %v2338, %v2340
        %v2342 = vadd.f32 %v2341, 0.0036580483
        %v2343 = vmul.f32 %v2338, %v2342
        %v2344 = vadd.f32 %v2343, 0.05243302
        %v2345 = vmul.f32 %v2338, %v2344
        %v2346 = vadd.f32 %v2345, 0.18741608
        %v2347 = vmul.f32 %v2338, %v2346
        %v2348 = vadd.f32 %v2347, 1.1283791
        %v2349 = vmul.f32 %v2071, %v2348
        %v2350 = vmul.f32 %v2338, 3.8918573e-05
        %v2351 = vadd.f32 %v2350, 0.001143296
        %v2352 = vmul.f32 %v2338, %v2351
        %v2353 = vadd.f32 %v2352, 0.014752088
        %v2354 = vmul.f32 %v2338, %v2353
        %v2355 = vadd.f32 %v2354, 0.112945676
        %v2356 = vmul.f32 %v2338, %v2355
        %v2357 = vadd.f32 %v2356, 0.4994258
        %v2358 = vmul.f32 %v2338, %v2357
        %v2359 = vadd.f32 %v2358, 1.0
        %v2360 = vrcp.pop %v2359
        %v2361 = vmul.f32 %v2359, %v2360
        %v2362 = vsub.f32 1.0, %v2361
        %v2363 = vmul.f32 %v2360, %v2362
        %v2364 = vadd.f32 %v2360, %v2363
        %vm2365 = vweird.f32 %v2359
        %vm2366 = vweird.f32 %v2360
        %vm2367 = vmor %vm2365, %vm2366
        %v2368 = vsel %vm2367, %v2360, %v2364
        %v2369 = vand.u32 2147483647, %v2359
        %vm2370 = vcmp.eq.f32.partialorder %v2369, 8.507059e+37
        %v2371 = vand.u32 %v2359, 2147483648
        %v2372 = vor.u32 1.1754944e-38, %v2371
        %v2373 = vsel %vm2370, %v2372, %v2368
        %v2374 = vmul.f32 %v2349, %v2373
        %v2375 = vmin.f32 %v2374, 1.0
        %v2376 = vmax.f32 %v2375, -1.0
        %v2377 = vmul.f32 %v2072, %v2072
        %v2378 = vmin.f32 16.0, %v2377
        %v2379 = vmul.f32 %v2378, 2.1237322e-06
        %v2380 = vadd.f32 %v2379, 0.00028619796
        %v2381 = vmul.f32 %v2378, %v2380
        %v2382 = vadd.f32 %v2381, 0.0036580483
        %v2383 = vmul.f32 %v2378, %v2382
        %v2384 = vadd.f32 %v2383, 0.05243302
        %v2385 = vmul.f32 %v2378, %v2384
        %v2386 = vadd.f32 %v2385, 0.18741608
        %v2387 = vmul.f32 %v2378, %v2386
        %v2388 = vadd.f32 %v2387, 1.1283791
        %v2389 = vmul.f32 %v2072, %v2388
        %v2390 = vmul.f32 %v2378, 3.8918573e-05
        %v2391 = vadd.f32 %v2390, 0.001143296
        %v2392 = vmul.f32 %v2378, %v2391
        %v2393 = vadd.f32 %v2392, 0.014752088
        %v2394 = vmul.f32 %v2378, %v2393
        %v2395 = vadd.f32 %v2394, 0.112945676
        %v2396 = vmul.f32 %v2378, %v2395
        %v2397 = vadd.f32 %v2396, 0.4994258
        %v2398 = vmul.f32 %v2378, %v2397
        %v2399 = vadd.f32 %v2398, 1.0
        %v2400 = vrcp.pop %v2399
        %v2401 = vmul.f32 %v2399, %v2400
        %v2402 = vsub.f32 1.0, %v2401
        %v2403 = vmul.f32 %v2400, %v2402
        %v2404 = vadd.f32 %v2400, %v2403
        %vm2405 = vweird.f32 %v2399
        %vm2406 = vweird.f32 %v2400
        %vm2407 = vmor %vm2405, %vm2406
        %v2408 = vsel %vm2407, %v2400, %v2404
        %v2409 = vand.u32 2147483647, %v2399
        %vm2410 = vcmp.eq.f32.partialorder %v2409, 8.507059e+37
        %v2411 = vand.u32 %v2399, 2147483648
        %v2412 = vor.u32 1.1754944e-38, %v2411
        %v2413 = vsel %vm2410, %v2412, %v2408
        %v2414 = vmul.f32 %v2389, %v2413
        %v2415 = vmin.f32 %v2414, 1.0
        %v2416 = vmax.f32 %v2415, -1.0
        %v2417 = vmul.f32 %v2073, %v2073
        %v2418 = vmin.f32 16.0, %v2417
        %v2419 = vmul.f32 %v2418, 2.1237322e-06
        %v2420 = vadd.f32 %v2419, 0.00028619796
        %v2421 = vmul.f32 %v2418, %v2420
        %v2422 = vadd.f32 %v2421, 0.0036580483
        %v2423 = vmul.f32 %v2418, %v2422
        %v2424 = vadd.f32 %v2423, 0.05243302
        %v2425 = vmul.f32 %v2418, %v2424
        %v2426 = vadd.f32 %v2425, 0.18741608
        %v2427 = vmul.f32 %v2418, %v2426
        %v2428 = vadd.f32 %v2427, 1.1283791
        %v2429 = vmul.f32 %v2073, %v2428
        %v2430 = vmul.f32 %v2418, 3.8918573e-05
        %v2431 = vadd.f32 %v2430, 0.001143296
        %v2432 = vmul.f32 %v2418, %v2431
        %v2433 = vadd.f32 %v2432, 0.014752088
        %v2434 = vmul.f32 %v2418, %v2433
        %v2435 = vadd.f32 %v2434, 0.112945676
        %v2436 = vmul.f32 %v2418, %v2435
        %v2437 = vadd.f32 %v2436, 0.4994258
        %v2438 = vmul.f32 %v2418, %v2437
        %v2439 = vadd.f32 %v2438, 1.0
        %v2440 = vrcp.pop %v2439
        %v2441 = vmul.f32 %v2439, %v2440
        %v2442 = vsub.f32 1.0, %v2441
        %v2443 = vmul.f32 %v2440, %v2442
        %v2444 = vadd.f32 %v2440, %v2443
        %vm2445 = vweird.f32 %v2439
        %vm2446 = vweird.f32 %v2440
        %vm2447 = vmor %vm2445, %vm2446
        %v2448 = vsel %vm2447, %v2440, %v2444
        %v2449 = vand.u32 2147483647, %v2439
        %vm2450 = vcmp.eq.f32.partialorder %v2449, 8.507059e+37
        %v2451 = vand.u32 %v2439, 2147483648
        %v2452 = vor.u32 1.1754944e-38, %v2451
        %v2453 = vsel %vm2450, %v2452, %v2448
        %v2454 = vmul.f32 %v2429, %v2453
        %v2455 = vmin.f32 %v2454, 1.0
        %v2456 = vmax.f32 %v2455, -1.0
        %v2457 = vmul.f32 %v2074, %v2074
        %v2458 = vmin.f32 16.0, %v2457
        %v2459 = vmul.f32 %v2458, 2.1237322e-06
        %v2460 = vadd.f32 %v2459, 0.00028619796
        %v2461 = vmul.f32 %v2458, %v2460
        %v2462 = vadd.f32 %v2461, 0.0036580483
        %v2463 = vmul.f32 %v2458, %v2462
        %v2464 = vadd.f32 %v2463, 0.05243302
        %v2465 = vmul.f32 %v2458, %v2464
        %v2466 = vadd.f32 %v2465, 0.18741608
        %v2467 = vmul.f32 %v2458, %v2466
        %v2468 = vadd.f32 %v2467, 1.1283791
        %v2469 = vmul.f32 %v2074, %v2468
        %v2470 = vmul.f32 %v2458, 3.8918573e-05
        %v2471 = vadd.f32 %v2470, 0.001143296
        %v2472 = vmul.f32 %v2458, %v2471
        %v2473 = vadd.f32 %v2472, 0.014752088
        %v2474 = vmul.f32 %v2458, %v2473
        %v2475 = vadd.f32 %v2474, 0.112945676
        %v2476 = vmul.f32 %v2458, %v2475
        %v2477 = vadd.f32 %v2476, 0.4994258
        %v2478 = vmul.f32 %v2458, %v2477
        %v2479 = vadd.f32 %v2478, 1.0
        %v2480 = vrcp.pop %v2479
        %v2481 = vmul.f32 %v2479, %v2480
        %v2482 = vsub.f32 1.0, %v2481
        %v2483 = vmul.f32 %v2480, %v2482
        %v2484 = vadd.f32 %v2480, %v2483
        %vm2485 = vweird.f32 %v2479
        %vm2486 = vweird.f32 %v2480
        %vm2487 = vmor %vm2485, %vm2486
        %v2488 = vsel %vm2487, %v2480, %v2484
        %v2489 = vand.u32 2147483647, %v2479
        %vm2490 = vcmp.eq.f32.partialorder %v2489, 8.507059e+37
        %v2491 = vand.u32 %v2479, 2147483648
        %v2492 = vor.u32 1.1754944e-38, %v2491
        %v2493 = vsel %vm2490, %v2492, %v2488
        %v2494 = vmul.f32 %v2469, %v2493
        %v2495 = vmin.f32 %v2494, 1.0
        %v2496 = vmax.f32 %v2495, -1.0
        %v2497 = vmul.f32 %v2075, %v2075
        %v2498 = vmin.f32 16.0, %v2497
        %v2499 = vmul.f32 %v2498, 2.1237322e-06
        %v2500 = vadd.f32 %v2499, 0.00028619796
        %v2501 = vmul.f32 %v2498, %v2500
        %v2502 = vadd.f32 %v2501, 0.0036580483
        %v2503 = vmul.f32 %v2498, %v2502
        %v2504 = vadd.f32 %v2503, 0.05243302
        %v2505 = vmul.f32 %v2498, %v2504
        %v2506 = vadd.f32 %v2505, 0.18741608
        %v2507 = vmul.f32 %v2498, %v2506
        %v2508 = vadd.f32 %v2507, 1.1283791
        %v2509 = vmul.f32 %v2075, %v2508
        %v2510 = vmul.f32 %v2498, 3.8918573e-05
        %v2511 = vadd.f32 %v2510, 0.001143296
        %v2512 = vmul.f32 %v2498, %v2511
        %v2513 = vadd.f32 %v2512, 0.014752088
        %v2514 = vmul.f32 %v2498, %v2513
        %v2515 = vadd.f32 %v2514, 0.112945676
        %v2516 = vmul.f32 %v2498, %v2515
        %v2517 = vadd.f32 %v2516, 0.4994258
        %v2518 = vmul.f32 %v2498, %v2517
        %v2519 = vadd.f32 %v2518, 1.0
        %v2520 = vrcp.pop %v2519
        %v2521 = vmul.f32 %v2519, %v2520
        %v2522 = vsub.f32 1.0, %v2521
        %v2523 = vmul.f32 %v2520, %v2522
        %v2524 = vadd.f32 %v2520, %v2523
        %vm2525 = vweird.f32 %v2519
        %vm2526 = vweird.f32 %v2520
        %vm2527 = vmor %vm2525, %vm2526
        %v2528 = vsel %vm2527, %v2520, %v2524
        %v2529 = vand.u32 2147483647, %v2519
        %vm2530 = vcmp.eq.f32.partialorder %v2529, 8.507059e+37
        %v2531 = vand.u32 %v2519, 2147483648
        %v2532 = vor.u32 1.1754944e-38, %v2531
        %v2533 = vsel %vm2530, %v2532, %v2528
        %v2534 = vmul.f32 %v2509, %v2533
        %v2535 = vmin.f32 %v2534, 1.0
        %v2536 = vmax.f32 %v2535, -1.0
        %v2537 = vmul.f32 %v2076, %v2076
        %v2538 = vmin.f32 16.0, %v2537
        %v2539 = vmul.f32 %v2538, 2.1237322e-06
        %v2540 = vadd.f32 %v2539, 0.00028619796
        %v2541 = vmul.f32 %v2538, %v2540
        %v2542 = vadd.f32 %v2541, 0.0036580483
        %v2543 = vmul.f32 %v2538, %v2542
        %v2544 = vadd.f32 %v2543, 0.05243302
        %v2545 = vmul.f32 %v2538, %v2544
        %v2546 = vadd.f32 %v2545, 0.18741608
        %v2547 = vmul.f32 %v2538, %v2546
        %v2548 = vadd.f32 %v2547, 1.1283791
        %v2549 = vmul.f32 %v2076, %v2548
        %v2550 = vmul.f32 %v2538, 3.8918573e-05
        %v2551 = vadd.f32 %v2550, 0.001143296
        %v2552 = vmul.f32 %v2538, %v2551
        %v2553 = vadd.f32 %v2552, 0.014752088
        %v2554 = vmul.f32 %v2538, %v2553
        %v2555 = vadd.f32 %v2554, 0.112945676
        %v2556 = vmul.f32 %v2538, %v2555
        %v2557 = vadd.f32 %v2556, 0.4994258
        %v2558 = vmul.f32 %v2538, %v2557
        %v2559 = vadd.f32 %v2558, 1.0
        %v2560 = vrcp.pop %v2559
        %v2561 = vmul.f32 %v2559, %v2560
        %v2562 = vsub.f32 1.0, %v2561
        %v2563 = vmul.f32 %v2560, %v2562
        %v2564 = vadd.f32 %v2560, %v2563
        %vm2565 = vweird.f32 %v2559
        %vm2566 = vweird.f32 %v2560
        %vm2567 = vmor %vm2565, %vm2566
        %v2568 = vsel %vm2567, %v2560, %v2564
        %v2569 = vand.u32 2147483647, %v2559
        %vm2570 = vcmp.eq.f32.partialorder %v2569, 8.507059e+37
        %v2571 = vand.u32 %v2559, 2147483648
        %v2572 = vor.u32 1.1754944e-38, %v2571
        %v2573 = vsel %vm2570, %v2572, %v2568
        %v2574 = vmul.f32 %v2549, %v2573
        %v2575 = vmin.f32 %v2574, 1.0
        %v2576 = vmax.f32 %v2575, -1.0
        %v2577 = vmul.f32 %v2077, %v2077
        %v2578 = vmin.f32 16.0, %v2577
        %v2579 = vmul.f32 %v2578, 2.1237322e-06
        %v2580 = vadd.f32 %v2579, 0.00028619796
        %v2581 = vmul.f32 %v2578, %v2580
        %v2582 = vadd.f32 %v2581, 0.0036580483
        %v2583 = vmul.f32 %v2578, %v2582
        %v2584 = vadd.f32 %v2583, 0.05243302
        %v2585 = vmul.f32 %v2578, %v2584
        %v2586 = vadd.f32 %v2585, 0.18741608
        %v2587 = vmul.f32 %v2578, %v2586
        %v2588 = vadd.f32 %v2587, 1.1283791
        %v2589 = vmul.f32 %v2077, %v2588
        %v2590 = vmul.f32 %v2578, 3.8918573e-05
        %v2591 = vadd.f32 %v2590, 0.001143296
        %v2592 = vmul.f32 %v2578, %v2591
        %v2593 = vadd.f32 %v2592, 0.014752088
        %v2594 = vmul.f32 %v2578, %v2593
        %v2595 = vadd.f32 %v2594, 0.112945676
        %v2596 = vmul.f32 %v2578, %v2595
        %v2597 = vadd.f32 %v2596, 0.4994258
        %v2598 = vmul.f32 %v2578, %v2597
        %v2599 = vadd.f32 %v2598, 1.0
        %v2600 = vrcp.pop %v2599
        %v2601 = vmul.f32 %v2599, %v2600
        %v2602 = vsub.f32 1.0, %v2601
        %v2603 = vmul.f32 %v2600, %v2602
        %v2604 = vadd.f32 %v2600, %v2603
        %vm2605 = vweird.f32 %v2599
        %vm2606 = vweird.f32 %v2600
        %vm2607 = vmor %vm2605, %vm2606
        %v2608 = vsel %vm2607, %v2600, %v2604
        %v2609 = vand.u32 2147483647, %v2599
        %vm2610 = vcmp.eq.f32.partialorder %v2609, 8.507059e+37
        %v2611 = vand.u32 %v2599, 2147483648
        %v2612 = vor.u32 1.1754944e-38, %v2611
        %v2613 = vsel %vm2610, %v2612, %v2608
        %v2614 = vmul.f32 %v2589, %v2613
        %v2615 = vmin.f32 %v2614, 1.0
        %v2616 = vmax.f32 %v2615, -1.0
        %v2617 = vmul.f32 %v2078, %v2078
        %v2618 = vmin.f32 16.0, %v2617
        %v2619 = vmul.f32 %v2618, 2.1237322e-06
        %v2620 = vadd.f32 %v2619, 0.00028619796
        %v2621 = vmul.f32 %v2618, %v2620
        %v2622 = vadd.f32 %v2621, 0.0036580483
        %v2623 = vmul.f32 %v2618, %v2622
        %v2624 = vadd.f32 %v2623, 0.05243302
        %v2625 = vmul.f32 %v2618, %v2624
        %v2626 = vadd.f32 %v2625, 0.18741608
        %v2627 = vmul.f32 %v2618, %v2626
        %v2628 = vadd.f32 %v2627, 1.1283791
        %v2629 = vmul.f32 %v2078, %v2628
        %v2630 = vmul.f32 %v2618, 3.8918573e-05
        %v2631 = vadd.f32 %v2630, 0.001143296
        %v2632 = vmul.f32 %v2618, %v2631
        %v2633 = vadd.f32 %v2632, 0.014752088
        %v2634 = vmul.f32 %v2618, %v2633
        %v2635 = vadd.f32 %v2634, 0.112945676
        %v2636 = vmul.f32 %v2618, %v2635
        %v2637 = vadd.f32 %v2636, 0.4994258
        %v2638 = vmul.f32 %v2618, %v2637
        %v2639 = vadd.f32 %v2638, 1.0
        %v2640 = vrcp.pop %v2639
        %v2641 = vmul.f32 %v2639, %v2640
        %v2642 = vsub.f32 1.0, %v2641
        %v2643 = vmul.f32 %v2640, %v2642
        %v2644 = vadd.f32 %v2640, %v2643
        %vm2645 = vweird.f32 %v2639
        %vm2646 = vweird.f32 %v2640
        %vm2647 = vmor %vm2645, %vm2646
        %v2648 = vsel %vm2647, %v2640, %v2644
        %v2649 = vand.u32 2147483647, %v2639
        %vm2650 = vcmp.eq.f32.partialorder %v2649, 8.507059e+37
        %v2651 = vand.u32 %v2639, 2147483648
        %v2652 = vor.u32 1.1754944e-38, %v2651
        %v2653 = vsel %vm2650, %v2652, %v2648
        %v2654 = vmul.f32 %v2629, %v2653
        %v2655 = vmin.f32 %v2654, 1.0
        %v2656 = vmax.f32 %v2655, -1.0
        %v2657 = vmul.f32 %v2079, %v2079
        %v2658 = vmin.f32 16.0, %v2657
        %v2659 = vmul.f32 %v2658, 2.1237322e-06
        %v2660 = vadd.f32 %v2659, 0.00028619796
        %v2661 = vmul.f32 %v2658, %v2660
        %v2662 = vadd.f32 %v2661, 0.0036580483
        %v2663 = vmul.f32 %v2658, %v2662
        %v2664 = vadd.f32 %v2663, 0.05243302
        %v2665 = vmul.f32 %v2658, %v2664
        %v2666 = vadd.f32 %v2665, 0.18741608
        %v2667 = vmul.f32 %v2658, %v2666
        %v2668 = vadd.f32 %v2667, 1.1283791
        %v2669 = vmul.f32 %v2079, %v2668
        %v2670 = vmul.f32 %v2658, 3.8918573e-05
        %v2671 = vadd.f32 %v2670, 0.001143296
        %v2672 = vmul.f32 %v2658, %v2671
        %v2673 = vadd.f32 %v2672, 0.014752088
        %v2674 = vmul.f32 %v2658, %v2673
        %v2675 = vadd.f32 %v2674, 0.112945676
        %v2676 = vmul.f32 %v2658, %v2675
        %v2677 = vadd.f32 %v2676, 0.4994258
        %v2678 = vmul.f32 %v2658, %v2677
        %v2679 = vadd.f32 %v2678, 1.0
        %v2680 = vrcp.pop %v2679
        %v2681 = vmul.f32 %v2679, %v2680
        %v2682 = vsub.f32 1.0, %v2681
        %v2683 = vmul.f32 %v2680, %v2682
        %v2684 = vadd.f32 %v2680, %v2683
        %vm2685 = vweird.f32 %v2679
        %vm2686 = vweird.f32 %v2680
        %vm2687 = vmor %vm2685, %vm2686
        %v2688 = vsel %vm2687, %v2680, %v2684
        %v2689 = vand.u32 2147483647, %v2679
        %vm2690 = vcmp.eq.f32.partialorder %v2689, 8.507059e+37
        %v2691 = vand.u32 %v2679, 2147483648
        %v2692 = vor.u32 1.1754944e-38, %v2691
        %v2693 = vsel %vm2690, %v2692, %v2688
        %v2694 = vmul.f32 %v2669, %v2693
        %v2695 = vmin.f32 %v2694, 1.0
        %v2696 = vmax.f32 %v2695, -1.0
        %v2697 = vmul.f32 %v2080, %v2080
        %v2698 = vmin.f32 16.0, %v2697
        %v2699 = vmul.f32 %v2698, 2.1237322e-06
        %v2700 = vadd.f32 %v2699, 0.00028619796
        %v2701 = vmul.f32 %v2698, %v2700
        %v2702 = vadd.f32 %v2701, 0.0036580483
        %v2703 = vmul.f32 %v2698, %v2702
        %v2704 = vadd.f32 %v2703, 0.05243302
        %v2705 = vmul.f32 %v2698, %v2704
        %v2706 = vadd.f32 %v2705, 0.18741608
        %v2707 = vmul.f32 %v2698, %v2706
        %v2708 = vadd.f32 %v2707, 1.1283791
        %v2709 = vmul.f32 %v2080, %v2708
        %v2710 = vmul.f32 %v2698, 3.8918573e-05
        %v2711 = vadd.f32 %v2710, 0.001143296
        %v2712 = vmul.f32 %v2698, %v2711
        %v2713 = vadd.f32 %v2712, 0.014752088
        %v2714 = vmul.f32 %v2698, %v2713
        %v2715 = vadd.f32 %v2714, 0.112945676
        %v2716 = vmul.f32 %v2698, %v2715
        %v2717 = vadd.f32 %v2716, 0.4994258
        %v2718 = vmul.f32 %v2698, %v2717
        %v2719 = vadd.f32 %v2718, 1.0
        %v2720 = vrcp.pop %v2719
        %v2721 = vmul.f32 %v2719, %v2720
        %v2722 = vsub.f32 1.0, %v2721
        %v2723 = vmul.f32 %v2720, %v2722
        %v2724 = vadd.f32 %v2720, %v2723
        %vm2725 = vweird.f32 %v2719
        %vm2726 = vweird.f32 %v2720
        %vm2727 = vmor %vm2725, %vm2726
        %v2728 = vsel %vm2727, %v2720, %v2724
        %v2729 = vand.u32 2147483647, %v2719
        %vm2730 = vcmp.eq.f32.partialorder %v2729, 8.507059e+37
        %v2731 = vand.u32 %v2719, 2147483648
        %v2732 = vor.u32 1.1754944e-38, %v2731
        %v2733 = vsel %vm2730, %v2732, %v2728
        %v2734 = vmul.f32 %v2709, %v2733
        %v2735 = vmin.f32 %v2734, 1.0
        %v2736 = vmax.f32 %v2735, -1.0
        %v2737 = vmul.f32 %v2081, %v2081
        %v2738 = vmin.f32 16.0, %v2737
        %v2739 = vmul.f32 %v2738, 2.1237322e-06
        %v2740 = vadd.f32 %v2739, 0.00028619796
        %v2741 = vmul.f32 %v2738, %v2740
        %v2742 = vadd.f32 %v2741, 0.0036580483
        %v2743 = vmul.f32 %v2738, %v2742
        %v2744 = vadd.f32 %v2743, 0.05243302
        %v2745 = vmul.f32 %v2738, %v2744
        %v2746 = vadd.f32 %v2745, 0.18741608
        %v2747 = vmul.f32 %v2738, %v2746
        %v2748 = vadd.f32 %v2747, 1.1283791
        %v2749 = vmul.f32 %v2081, %v2748
        %v2750 = vmul.f32 %v2738, 3.8918573e-05
        %v2751 = vadd.f32 %v2750, 0.001143296
        %v2752 = vmul.f32 %v2738, %v2751
        %v2753 = vadd.f32 %v2752, 0.014752088
        %v2754 = vmul.f32 %v2738, %v2753
        %v2755 = vadd.f32 %v2754, 0.112945676
        %v2756 = vmul.f32 %v2738, %v2755
        %v2757 = vadd.f32 %v2756, 0.4994258
        %v2758 = vmul.f32 %v2738, %v2757
        %v2759 = vadd.f32 %v2758, 1.0
        %v2760 = vrcp.pop %v2759
        %v2761 = vmul.f32 %v2759, %v2760
        %v2762 = vsub.f32 1.0, %v2761
        %v2763 = vmul.f32 %v2760, %v2762
        %v2764 = vadd.f32 %v2760, %v2763
        %vm2765 = vweird.f32 %v2759
        %vm2766 = vweird.f32 %v2760
        %vm2767 = vmor %vm2765, %vm2766
        %v2768 = vsel %vm2767, %v2760, %v2764
        %v2769 = vand.u32 2147483647, %v2759
        %vm2770 = vcmp.eq.f32.partialorder %v2769, 8.507059e+37
        %v2771 = vand.u32 %v2759, 2147483648
        %v2772 = vor.u32 1.1754944e-38, %v2771
        %v2773 = vsel %vm2770, %v2772, %v2768
        %v2774 = vmul.f32 %v2749, %v2773
        %v2775 = vmin.f32 %v2774, 1.0
        %v2776 = vmax.f32 %v2775, -1.0
        %v2777 = vmul.f32 %v2082, %v2082
        %v2778 = vmin.f32 16.0, %v2777
        %v2779 = vmul.f32 %v2778, 2.1237322e-06
        %v2780 = vadd.f32 %v2779, 0.00028619796
        %v2781 = vmul.f32 %v2778, %v2780
        %v2782 = vadd.f32 %v2781, 0.0036580483
        %v2783 = vmul.f32 %v2778, %v2782
        %v2784 = vadd.f32 %v2783, 0.05243302
        %v2785 = vmul.f32 %v2778, %v2784
        %v2786 = vadd.f32 %v2785, 0.18741608
        %v2787 = vmul.f32 %v2778, %v2786
        %v2788 = vadd.f32 %v2787, 1.1283791
        %v2789 = vmul.f32 %v2082, %v2788
        %v2790 = vmul.f32 %v2778, 3.8918573e-05
        %v2791 = vadd.f32 %v2790, 0.001143296
        %v2792 = vmul.f32 %v2778, %v2791
        %v2793 = vadd.f32 %v2792, 0.014752088
        %v2794 = vmul.f32 %v2778, %v2793
        %v2795 = vadd.f32 %v2794, 0.112945676
        %v2796 = vmul.f32 %v2778, %v2795
        %v2797 = vadd.f32 %v2796, 0.4994258
        %v2798 = vmul.f32 %v2778, %v2797
        %v2799 = vadd.f32 %v2798, 1.0
        %v2800 = vrcp.pop %v2799
        %v2801 = vmul.f32 %v2799, %v2800
        %v2802 = vsub.f32 1.0, %v2801
        %v2803 = vmul.f32 %v2800, %v2802
        %v2804 = vadd.f32 %v2800, %v2803
        %vm2805 = vweird.f32 %v2799
        %vm2806 = vweird.f32 %v2800
        %vm2807 = vmor %vm2805, %vm2806
        %v2808 = vsel %vm2807, %v2800, %v2804
        %v2809 = vand.u32 2147483647, %v2799
        %vm2810 = vcmp.eq.f32.partialorder %v2809, 8.507059e+37
        %v2811 = vand.u32 %v2799, 2147483648
        %v2812 = vor.u32 1.1754944e-38, %v2811
        %v2813 = vsel %vm2810, %v2812, %v2808
        %v2814 = vmul.f32 %v2789, %v2813
        %v2815 = vmin.f32 %v2814, 1.0
        %v2816 = vmax.f32 %v2815, -1.0
        %v2817 = vmul.f32 %v2083, %v2083
        %v2818 = vmin.f32 16.0, %v2817
        %v2819 = vmul.f32 %v2818, 2.1237322e-06
        %v2820 = vadd.f32 %v2819, 0.00028619796
        %v2821 = vmul.f32 %v2818, %v2820
        %v2822 = vadd.f32 %v2821, 0.0036580483
        %v2823 = vmul.f32 %v2818, %v2822
        %v2824 = vadd.f32 %v2823, 0.05243302
        %v2825 = vmul.f32 %v2818, %v2824
        %v2826 = vadd.f32 %v2825, 0.18741608
        %v2827 = vmul.f32 %v2818, %v2826
        %v2828 = vadd.f32 %v2827, 1.1283791
        %v2829 = vmul.f32 %v2083, %v2828
        %v2830 = vmul.f32 %v2818, 3.8918573e-05
        %v2831 = vadd.f32 %v2830, 0.001143296
        %v2832 = vmul.f32 %v2818, %v2831
        %v2833 = vadd.f32 %v2832, 0.014752088
        %v2834 = vmul.f32 %v2818, %v2833
        %v2835 = vadd.f32 %v2834, 0.112945676
        %v2836 = vmul.f32 %v2818, %v2835
        %v2837 = vadd.f32 %v2836, 0.4994258
        %v2838 = vmul.f32 %v2818, %v2837
        %v2839 = vadd.f32 %v2838, 1.0
        %v2840 = vrcp.pop %v2839
        %v2841 = vmul.f32 %v2839, %v2840
        %v2842 = vsub.f32 1.0, %v2841
        %v2843 = vmul.f32 %v2840, %v2842
        %v2844 = vadd.f32 %v2840, %v2843
        %vm2845 = vweird.f32 %v2839
        %vm2846 = vweird.f32 %v2840
        %vm2847 = vmor %vm2845, %vm2846
        %v2848 = vsel %vm2847, %v2840, %v2844
        %v2849 = vand.u32 2147483647, %v2839
        %vm2850 = vcmp.eq.f32.partialorder %v2849, 8.507059e+37
        %v2851 = vand.u32 %v2839, 2147483648
        %v2852 = vor.u32 1.1754944e-38, %v2851
        %v2853 = vsel %vm2850, %v2852, %v2848
        %v2854 = vmul.f32 %v2829, %v2853
        %v2855 = vmin.f32 %v2854, 1.0
        %v2856 = vmax.f32 %v2855, -1.0
        %v2857 = vmul.f32 %v2084, %v2084
        %v2858 = vmin.f32 16.0, %v2857
        %v2859 = vmul.f32 %v2858, 2.1237322e-06
        %v2860 = vadd.f32 %v2859, 0.00028619796
        %v2861 = vmul.f32 %v2858, %v2860
        %v2862 = vadd.f32 %v2861, 0.0036580483
        %v2863 = vmul.f32 %v2858, %v2862
        %v2864 = vadd.f32 %v2863, 0.05243302
        %v2865 = vmul.f32 %v2858, %v2864
        %v2866 = vadd.f32 %v2865, 0.18741608
        %v2867 = vmul.f32 %v2858, %v2866
        %v2868 = vadd.f32 %v2867, 1.1283791
        %v2869 = vmul.f32 %v2084, %v2868
        %v2870 = vmul.f32 %v2858, 3.8918573e-05
        %v2871 = vadd.f32 %v2870, 0.001143296
        %v2872 = vmul.f32 %v2858, %v2871
        %v2873 = vadd.f32 %v2872, 0.014752088
        %v2874 = vmul.f32 %v2858, %v2873
        %v2875 = vadd.f32 %v2874, 0.112945676
        %v2876 = vmul.f32 %v2858, %v2875
        %v2877 = vadd.f32 %v2876, 0.4994258
        %v2878 = vmul.f32 %v2858, %v2877
        %v2879 = vadd.f32 %v2878, 1.0
        %v2880 = vrcp.pop %v2879
        %v2881 = vmul.f32 %v2879, %v2880
        %v2882 = vsub.f32 1.0, %v2881
        %v2883 = vmul.f32 %v2880, %v2882
        %v2884 = vadd.f32 %v2880, %v2883
        %vm2885 = vweird.f32 %v2879
        %vm2886 = vweird.f32 %v2880
        %vm2887 = vmor %vm2885, %vm2886
        %v2888 = vsel %vm2887, %v2880, %v2884
        %v2889 = vand.u32 2147483647, %v2879
        %vm2890 = vcmp.eq.f32.partialorder %v2889, 8.507059e+37
        %v2891 = vand.u32 %v2879, 2147483648
        %v2892 = vor.u32 1.1754944e-38, %v2891
        %v2893 = vsel %vm2890, %v2892, %v2888
        %v2894 = vmul.f32 %v2869, %v2893
        %v2895 = vmin.f32 %v2894, 1.0
        %v2896 = vmax.f32 %v2895, -1.0
        %v2897 = vmul.f32 %v2085, %v2085
        %v2898 = vmin.f32 16.0, %v2897
        %v2899 = vmul.f32 %v2898, 2.1237322e-06
        %v2900 = vadd.f32 %v2899, 0.00028619796
        %v2901 = vmul.f32 %v2898, %v2900
        %v2902 = vadd.f32 %v2901, 0.0036580483
        %v2903 = vmul.f32 %v2898, %v2902
        %v2904 = vadd.f32 %v2903, 0.05243302
        %v2905 = vmul.f32 %v2898, %v2904
        %v2906 = vadd.f32 %v2905, 0.18741608
        %v2907 = vmul.f32 %v2898, %v2906
        %v2908 = vadd.f32 %v2907, 1.1283791
        %v2909 = vmul.f32 %v2085, %v2908
        %v2910 = vmul.f32 %v2898, 3.8918573e-05
        %v2911 = vadd.f32 %v2910, 0.001143296
        %v2912 = vmul.f32 %v2898, %v2911
        %v2913 = vadd.f32 %v2912, 0.014752088
        %v2914 = vmul.f32 %v2898, %v2913
        %v2915 = vadd.f32 %v2914, 0.112945676
        %v2916 = vmul.f32 %v2898, %v2915
        %v2917 = vadd.f32 %v2916, 0.4994258
        %v2918 = vmul.f32 %v2898, %v2917
        %v2919 = vadd.f32 %v2918, 1.0
        %v2920 = vrcp.pop %v2919
        %v2921 = vmul.f32 %v2919, %v2920
        %v2922 = vsub.f32 1.0, %v2921
        %v2923 = vmul.f32 %v2920, %v2922
        %v2924 = vadd.f32 %v2920, %v2923
        %vm2925 = vweird.f32 %v2919
        %vm2926 = vweird.f32 %v2920
        %vm2927 = vmor %vm2925, %vm2926
        %v2928 = vsel %vm2927, %v2920, %v2924
        %v2929 = vand.u32 2147483647, %v2919
        %vm2930 = vcmp.eq.f32.partialorder %v2929, 8.507059e+37
        %v2931 = vand.u32 %v2919, 2147483648
        %v2932 = vor.u32 1.1754944e-38, %v2931
        %v2933 = vsel %vm2930, %v2932, %v2928
        %v2934 = vmul.f32 %v2909, %v2933
        %v2935 = vmin.f32 %v2934, 1.0
        %v2936 = vmax.f32 %v2935, -1.0
        %v2937 = vmul.f32 %v2086, %v2086
        %v2938 = vmin.f32 16.0, %v2937
        %v2939 = vmul.f32 %v2938, 2.1237322e-06
        %v2940 = vadd.f32 %v2939, 0.00028619796
        %v2941 = vmul.f32 %v2938, %v2940
        %v2942 = vadd.f32 %v2941, 0.0036580483
        %v2943 = vmul.f32 %v2938, %v2942
        %v2944 = vadd.f32 %v2943, 0.05243302
        %v2945 = vmul.f32 %v2938, %v2944
        %v2946 = vadd.f32 %v2945, 0.18741608
        %v2947 = vmul.f32 %v2938, %v2946
        %v2948 = vadd.f32 %v2947, 1.1283791
        %v2949 = vmul.f32 %v2086, %v2948
        %v2950 = vmul.f32 %v2938, 3.8918573e-05
        %v2951 = vadd.f32 %v2950, 0.001143296
        %v2952 = vmul.f32 %v2938, %v2951
        %v2953 = vadd.f32 %v2952, 0.014752088
        %v2954 = vmul.f32 %v2938, %v2953
        %v2955 = vadd.f32 %v2954, 0.112945676
        %v2956 = vmul.f32 %v2938, %v2955
        %v2957 = vadd.f32 %v2956, 0.4994258
        %v2958 = vmul.f32 %v2938, %v2957
        %v2959 = vadd.f32 %v2958, 1.0
        %v2960 = vrcp.pop %v2959
        %v2961 = vmul.f32 %v2959, %v2960
        %v2962 = vsub.f32 1.0, %v2961
        %v2963 = vmul.f32 %v2960, %v2962
        %v2964 = vadd.f32 %v2960, %v2963
        %vm2965 = vweird.f32 %v2959
        %vm2966 = vweird.f32 %v2960
        %vm2967 = vmor %vm2965, %vm2966
        %v2968 = vsel %vm2967, %v2960, %v2964
        %v2969 = vand.u32 2147483647, %v2959
        %vm2970 = vcmp.eq.f32.partialorder %v2969, 8.507059e+37
        %v2971 = vand.u32 %v2959, 2147483648
        %v2972 = vor.u32 1.1754944e-38, %v2971
        %v2973 = vsel %vm2970, %v2972, %v2968
        %v2974 = vmul.f32 %v2949, %v2973
        %v2975 = vmin.f32 %v2974, 1.0
        %v2976 = vmax.f32 %v2975, -1.0
        %v2977 = vmul.f32 %v2087, %v2087
        %v2978 = vmin.f32 16.0, %v2977
        %v2979 = vmul.f32 %v2978, 2.1237322e-06
        %v2980 = vadd.f32 %v2979, 0.00028619796
        %v2981 = vmul.f32 %v2978, %v2980
        %v2982 = vadd.f32 %v2981, 0.0036580483
        %v2983 = vmul.f32 %v2978, %v2982
        %v2984 = vadd.f32 %v2983, 0.05243302
        %v2985 = vmul.f32 %v2978, %v2984
        %v2986 = vadd.f32 %v2985, 0.18741608
        %v2987 = vmul.f32 %v2978, %v2986
        %v2988 = vadd.f32 %v2987, 1.1283791
        %v2989 = vmul.f32 %v2087, %v2988
        %v2990 = vmul.f32 %v2978, 3.8918573e-05
        %v2991 = vadd.f32 %v2990, 0.001143296
        %v2992 = vmul.f32 %v2978, %v2991
        %v2993 = vadd.f32 %v2992, 0.014752088
        %v2994 = vmul.f32 %v2978, %v2993
        %v2995 = vadd.f32 %v2994, 0.112945676
        %v2996 = vmul.f32 %v2978, %v2995
        %v2997 = vadd.f32 %v2996, 0.4994258
        %v2998 = vmul.f32 %v2978, %v2997
        %v2999 = vadd.f32 %v2998, 1.0
        %v3000 = vrcp.pop %v2999
        %v3001 = vmul.f32 %v2999, %v3000
        %v3002 = vsub.f32 1.0, %v3001
        %v3003 = vmul.f32 %v3000, %v3002
        %v3004 = vadd.f32 %v3000, %v3003
        %vm3005 = vweird.f32 %v2999
        %vm3006 = vweird.f32 %v3000
        %vm3007 = vmor %vm3005, %vm3006
        %v3008 = vsel %vm3007, %v3000, %v3004
        %v3009 = vand.u32 2147483647, %v2999
        %vm3010 = vcmp.eq.f32.partialorder %v3009, 8.507059e+37
        %v3011 = vand.u32 %v2999, 2147483648
        %v3012 = vor.u32 1.1754944e-38, %v3011
        %v3013 = vsel %vm3010, %v3012, %v3008
        %v3014 = vmul.f32 %v2989, %v3013
        %v3015 = vmin.f32 %v3014, 1.0
        %v3016 = vmax.f32 %v3015, -1.0
        %v3017 = vmul.f32 %v2088, %v2088
        %v3018 = vmin.f32 16.0, %v3017
        %v3019 = vmul.f32 %v3018, 2.1237322e-06
        %v3020 = vadd.f32 %v3019, 0.00028619796
        %v3021 = vmul.f32 %v3018, %v3020
        %v3022 = vadd.f32 %v3021, 0.0036580483
        %v3023 = vmul.f32 %v3018, %v3022
        %v3024 = vadd.f32 %v3023, 0.05243302
        %v3025 = vmul.f32 %v3018, %v3024
        %v3026 = vadd.f32 %v3025, 0.18741608
        %v3027 = vmul.f32 %v3018, %v3026
        %v3028 = vadd.f32 %v3027, 1.1283791
        %v3029 = vmul.f32 %v2088, %v3028
        %v3030 = vmul.f32 %v3018, 3.8918573e-05
        %v3031 = vadd.f32 %v3030, 0.001143296
        %v3032 = vmul.f32 %v3018, %v3031
        %v3033 = vadd.f32 %v3032, 0.014752088
        %v3034 = vmul.f32 %v3018, %v3033
        %v3035 = vadd.f32 %v3034, 0.112945676
        %v3036 = vmul.f32 %v3018, %v3035
        %v3037 = vadd.f32 %v3036, 0.4994258
        %v3038 = vmul.f32 %v3018, %v3037
        %v3039 = vadd.f32 %v3038, 1.0
        %v3040 = vrcp.pop %v3039
        %v3041 = vmul.f32 %v3039, %v3040
        %v3042 = vsub.f32 1.0, %v3041
        %v3043 = vmul.f32 %v3040, %v3042
        %v3044 = vadd.f32 %v3040, %v3043
        %vm3045 = vweird.f32 %v3039
        %vm3046 = vweird.f32 %v3040
        %vm3047 = vmor %vm3045, %vm3046
        %v3048 = vsel %vm3047, %v3040, %v3044
        %v3049 = vand.u32 2147483647, %v3039
        %vm3050 = vcmp.eq.f32.partialorder %v3049, 8.507059e+37
        %v3051 = vand.u32 %v3039, 2147483648
        %v3052 = vor.u32 1.1754944e-38, %v3051
        %v3053 = vsel %vm3050, %v3052, %v3048
        %v3054 = vmul.f32 %v3029, %v3053
        %v3055 = vmin.f32 %v3054, 1.0
        %v3056 = vmax.f32 %v3055, -1.0
        %v3057 = vmul.f32 %v2089, %v2089
        %v3058 = vmin.f32 16.0, %v3057
        %v3059 = vmul.f32 %v3058, 2.1237322e-06
        %v3060 = vadd.f32 %v3059, 0.00028619796
        %v3061 = vmul.f32 %v3058, %v3060
        %v3062 = vadd.f32 %v3061, 0.0036580483
        %v3063 = vmul.f32 %v3058, %v3062
        %v3064 = vadd.f32 %v3063, 0.05243302
        %v3065 = vmul.f32 %v3058, %v3064
        %v3066 = vadd.f32 %v3065, 0.18741608
        %v3067 = vmul.f32 %v3058, %v3066
        %v3068 = vadd.f32 %v3067, 1.1283791
        %v3069 = vmul.f32 %v2089, %v3068
        %v3070 = vmul.f32 %v3058, 3.8918573e-05
        %v3071 = vadd.f32 %v3070, 0.001143296
        %v3072 = vmul.f32 %v3058, %v3071
        %v3073 = vadd.f32 %v3072, 0.014752088
        %v3074 = vmul.f32 %v3058, %v3073
        %v3075 = vadd.f32 %v3074, 0.112945676
        %v3076 = vmul.f32 %v3058, %v3075
        %v3077 = vadd.f32 %v3076, 0.4994258
        %v3078 = vmul.f32 %v3058, %v3077
        %v3079 = vadd.f32 %v3078, 1.0
        %v3080 = vrcp.pop %v3079
        %v3081 = vmul.f32 %v3079, %v3080
        %v3082 = vsub.f32 1.0, %v3081
        %v3083 = vmul.f32 %v3080, %v3082
        %v3084 = vadd.f32 %v3080, %v3083
        %vm3085 = vweird.f32 %v3079
        %vm3086 = vweird.f32 %v3080
        %vm3087 = vmor %vm3085, %vm3086
        %v3088 = vsel %vm3087, %v3080, %v3084
        %v3089 = vand.u32 2147483647, %v3079
        %vm3090 = vcmp.eq.f32.partialorder %v3089, 8.507059e+37
        %v3091 = vand.u32 %v3079, 2147483648
        %v3092 = vor.u32 1.1754944e-38, %v3091
        %v3093 = vsel %vm3090, %v3092, %v3088
        %v3094 = vmul.f32 %v3069, %v3093
        %v3095 = vmin.f32 %v3094, 1.0
        %v3096 = vmax.f32 %v3095, -1.0
        %v3097 = vmul.f32 %v2090, %v2090
        %v3098 = vmin.f32 16.0, %v3097
        %v3099 = vmul.f32 %v3098, 2.1237322e-06
        %v3100 = vadd.f32 %v3099, 0.00028619796
        %v3101 = vmul.f32 %v3098, %v3100
        %v3102 = vadd.f32 %v3101, 0.0036580483
        %v3103 = vmul.f32 %v3098, %v3102
        %v3104 = vadd.f32 %v3103, 0.05243302
        %v3105 = vmul.f32 %v3098, %v3104
        %v3106 = vadd.f32 %v3105, 0.18741608
        %v3107 = vmul.f32 %v3098, %v3106
        %v3108 = vadd.f32 %v3107, 1.1283791
        %v3109 = vmul.f32 %v2090, %v3108
        %v3110 = vmul.f32 %v3098, 3.8918573e-05
        %v3111 = vadd.f32 %v3110, 0.001143296
        %v3112 = vmul.f32 %v3098, %v3111
        %v3113 = vadd.f32 %v3112, 0.014752088
        %v3114 = vmul.f32 %v3098, %v3113
        %v3115 = vadd.f32 %v3114, 0.112945676
        %v3116 = vmul.f32 %v3098, %v3115
        %v3117 = vadd.f32 %v3116, 0.4994258
        %v3118 = vmul.f32 %v3098, %v3117
        %v3119 = vadd.f32 %v3118, 1.0
        %v3120 = vrcp.pop %v3119
        %v3121 = vmul.f32 %v3119, %v3120
        %v3122 = vsub.f32 1.0, %v3121
        %v3123 = vmul.f32 %v3120, %v3122
        %v3124 = vadd.f32 %v3120, %v3123
        %vm3125 = vweird.f32 %v3119
        %vm3126 = vweird.f32 %v3120
        %vm3127 = vmor %vm3125, %vm3126
        %v3128 = vsel %vm3127, %v3120, %v3124
        %v3129 = vand.u32 2147483647, %v3119
        %vm3130 = vcmp.eq.f32.partialorder %v3129, 8.507059e+37
        %v3131 = vand.u32 %v3119, 2147483648
        %v3132 = vor.u32 1.1754944e-38, %v3131
        %v3133 = vsel %vm3130, %v3132, %v3128
        %v3134 = vmul.f32 %v3109, %v3133
        %v3135 = vmin.f32 %v3134, 1.0
        %v3136 = vmax.f32 %v3135, -1.0
        %v3137 = vmul.f32 %v2091, %v2091
        %v3138 = vmin.f32 16.0, %v3137
        %v3139 = vmul.f32 %v3138, 2.1237322e-06
        %v3140 = vadd.f32 %v3139, 0.00028619796
        %v3141 = vmul.f32 %v3138, %v3140
        %v3142 = vadd.f32 %v3141, 0.0036580483
        %v3143 = vmul.f32 %v3138, %v3142
        %v3144 = vadd.f32 %v3143, 0.05243302
        %v3145 = vmul.f32 %v3138, %v3144
        %v3146 = vadd.f32 %v3145, 0.18741608
        %v3147 = vmul.f32 %v3138, %v3146
        %v3148 = vadd.f32 %v3147, 1.1283791
        %v3149 = vmul.f32 %v2091, %v3148
        %v3150 = vmul.f32 %v3138, 3.8918573e-05
        %v3151 = vadd.f32 %v3150, 0.001143296
        %v3152 = vmul.f32 %v3138, %v3151
        %v3153 = vadd.f32 %v3152, 0.014752088
        %v3154 = vmul.f32 %v3138, %v3153
        %v3155 = vadd.f32 %v3154, 0.112945676
        %v3156 = vmul.f32 %v3138, %v3155
        %v3157 = vadd.f32 %v3156, 0.4994258
        %v3158 = vmul.f32 %v3138, %v3157
        %v3159 = vadd.f32 %v3158, 1.0
        %v3160 = vrcp.pop %v3159
        %v3161 = vmul.f32 %v3159, %v3160
        %v3162 = vsub.f32 1.0, %v3161
        %v3163 = vmul.f32 %v3160, %v3162
        %v3164 = vadd.f32 %v3160, %v3163
        %vm3165 = vweird.f32 %v3159
        %vm3166 = vweird.f32 %v3160
        %vm3167 = vmor %vm3165, %vm3166
        %v3168 = vsel %vm3167, %v3160, %v3164
        %v3169 = vand.u32 2147483647, %v3159
        %vm3170 = vcmp.eq.f32.partialorder %v3169, 8.507059e+37
        %v3171 = vand.u32 %v3159, 2147483648
        %v3172 = vor.u32 1.1754944e-38, %v3171
        %v3173 = vsel %vm3170, %v3172, %v3168
        %v3174 = vmul.f32 %v3149, %v3173
        %v3175 = vmin.f32 %v3174, 1.0
        %v3176 = vmax.f32 %v3175, -1.0
        %v3177 = vmul.f32 %v2092, %v2092
        %v3178 = vmin.f32 16.0, %v3177
        %v3179 = vmul.f32 %v3178, 2.1237322e-06
        %v3180 = vadd.f32 %v3179, 0.00028619796
        %v3181 = vmul.f32 %v3178, %v3180
        %v3182 = vadd.f32 %v3181, 0.0036580483
        %v3183 = vmul.f32 %v3178, %v3182
        %v3184 = vadd.f32 %v3183, 0.05243302
        %v3185 = vmul.f32 %v3178, %v3184
        %v3186 = vadd.f32 %v3185, 0.18741608
        %v3187 = vmul.f32 %v3178, %v3186
        %v3188 = vadd.f32 %v3187, 1.1283791
        %v3189 = vmul.f32 %v2092, %v3188
        %v3190 = vmul.f32 %v3178, 3.8918573e-05
        %v3191 = vadd.f32 %v3190, 0.001143296
        %v3192 = vmul.f32 %v3178, %v3191
        %v3193 = vadd.f32 %v3192, 0.014752088
        %v3194 = vmul.f32 %v3178, %v3193
        %v3195 = vadd.f32 %v3194, 0.112945676
        %v3196 = vmul.f32 %v3178, %v3195
        %v3197 = vadd.f32 %v3196, 0.4994258
        %v3198 = vmul.f32 %v3178, %v3197
        %v3199 = vadd.f32 %v3198, 1.0
        %v3200 = vrcp.pop %v3199
        %v3201 = vmul.f32 %v3199, %v3200
        %v3202 = vsub.f32 1.0, %v3201
        %v3203 = vmul.f32 %v3200, %v3202
        %v3204 = vadd.f32 %v3200, %v3203
        %vm3205 = vweird.f32 %v3199
        %vm3206 = vweird.f32 %v3200
        %vm3207 = vmor %vm3205, %vm3206
        %v3208 = vsel %vm3207, %v3200, %v3204
        %v3209 = vand.u32 2147483647, %v3199
        %vm3210 = vcmp.eq.f32.partialorder %v3209, 8.507059e+37
        %v3211 = vand.u32 %v3199, 2147483648
        %v3212 = vor.u32 1.1754944e-38, %v3211
        %v3213 = vsel %vm3210, %v3212, %v3208
        %v3214 = vmul.f32 %v3189, %v3213
        %v3215 = vmin.f32 %v3214, 1.0
        %v3216 = vmax.f32 %v3215, -1.0
        %v3217 = vmul.f32 %v2093, %v2093
        %v3218 = vmin.f32 16.0, %v3217
        %v3219 = vmul.f32 %v3218, 2.1237322e-06
        %v3220 = vadd.f32 %v3219, 0.00028619796
        %v3221 = vmul.f32 %v3218, %v3220
        %v3222 = vadd.f32 %v3221, 0.0036580483
        %v3223 = vmul.f32 %v3218, %v3222
        %v3224 = vadd.f32 %v3223, 0.05243302
        %v3225 = vmul.f32 %v3218, %v3224
        %v3226 = vadd.f32 %v3225, 0.18741608
        %v3227 = vmul.f32 %v3218, %v3226
        %v3228 = vadd.f32 %v3227, 1.1283791
        %v3229 = vmul.f32 %v2093, %v3228
        %v3230 = vmul.f32 %v3218, 3.8918573e-05
        %v3231 = vadd.f32 %v3230, 0.001143296
        %v3232 = vmul.f32 %v3218, %v3231
        %v3233 = vadd.f32 %v3232, 0.014752088
        %v3234 = vmul.f32 %v3218, %v3233
        %v3235 = vadd.f32 %v3234, 0.112945676
        %v3236 = vmul.f32 %v3218, %v3235
        %v3237 = vadd.f32 %v3236, 0.4994258
        %v3238 = vmul.f32 %v3218, %v3237
        %v3239 = vadd.f32 %v3238, 1.0
        %v3240 = vrcp.pop %v3239
        %v3241 = vmul.f32 %v3239, %v3240
        %v3242 = vsub.f32 1.0, %v3241
        %v3243 = vmul.f32 %v3240, %v3242
        %v3244 = vadd.f32 %v3240, %v3243
        %vm3245 = vweird.f32 %v3239
        %vm3246 = vweird.f32 %v3240
        %vm3247 = vmor %vm3245, %vm3246
        %v3248 = vsel %vm3247, %v3240, %v3244
        %v3249 = vand.u32 2147483647, %v3239
        %vm3250 = vcmp.eq.f32.partialorder %v3249, 8.507059e+37
        %v3251 = vand.u32 %v3239, 2147483648
        %v3252 = vor.u32 1.1754944e-38, %v3251
        %v3253 = vsel %vm3250, %v3252, %v3248
        %v3254 = vmul.f32 %v3229, %v3253
        %v3255 = vmin.f32 %v3254, 1.0
        %v3256 = vmax.f32 %v3255, -1.0
        %v3257 = vmul.f32 %v2094, %v2094
        %v3258 = vmin.f32 16.0, %v3257
        %v3259 = vmul.f32 %v3258, 2.1237322e-06
        %v3260 = vadd.f32 %v3259, 0.00028619796
        %v3261 = vmul.f32 %v3258, %v3260
        %v3262 = vadd.f32 %v3261, 0.0036580483
        %v3263 = vmul.f32 %v3258, %v3262
        %v3264 = vadd.f32 %v3263, 0.05243302
        %v3265 = vmul.f32 %v3258, %v3264
        %v3266 = vadd.f32 %v3265, 0.18741608
        %v3267 = vmul.f32 %v3258, %v3266
        %v3268 = vadd.f32 %v3267, 1.1283791
        %v3269 = vmul.f32 %v2094, %v3268
        %v3270 = vmul.f32 %v3258, 3.8918573e-05
        %v3271 = vadd.f32 %v3270, 0.001143296
        %v3272 = vmul.f32 %v3258, %v3271
        %v3273 = vadd.f32 %v3272, 0.014752088
        %v3274 = vmul.f32 %v3258, %v3273
        %v3275 = vadd.f32 %v3274, 0.112945676
        %v3276 = vmul.f32 %v3258, %v3275
        %v3277 = vadd.f32 %v3276, 0.4994258
        %v3278 = vmul.f32 %v3258, %v3277
        %v3279 = vadd.f32 %v3278, 1.0
        %v3280 = vrcp.pop %v3279
        %v3281 = vmul.f32 %v3279, %v3280
        %v3282 = vsub.f32 1.0, %v3281
        %v3283 = vmul.f32 %v3280, %v3282
        %v3284 = vadd.f32 %v3280, %v3283
        %vm3285 = vweird.f32 %v3279
        %vm3286 = vweird.f32 %v3280
        %vm3287 = vmor %vm3285, %vm3286
        %v3288 = vsel %vm3287, %v3280, %v3284
        %v3289 = vand.u32 2147483647, %v3279
        %vm3290 = vcmp.eq.f32.partialorder %v3289, 8.507059e+37
        %v3291 = vand.u32 %v3279, 2147483648
        %v3292 = vor.u32 1.1754944e-38, %v3291
        %v3293 = vsel %vm3290, %v3292, %v3288
        %v3294 = vmul.f32 %v3269, %v3293
        %v3295 = vmin.f32 %v3294, 1.0
        %v3296 = vmax.f32 %v3295, -1.0
        %v3297 = vmul.f32 %v2095, %v2095
        %v3298 = vmin.f32 16.0, %v3297
        %v3299 = vmul.f32 %v3298, 2.1237322e-06
        %v3300 = vadd.f32 %v3299, 0.00028619796
        %v3301 = vmul.f32 %v3298, %v3300
        %v3302 = vadd.f32 %v3301, 0.0036580483
        %v3303 = vmul.f32 %v3298, %v3302
        %v3304 = vadd.f32 %v3303, 0.05243302
        %v3305 = vmul.f32 %v3298, %v3304
        %v3306 = vadd.f32 %v3305, 0.18741608
        %v3307 = vmul.f32 %v3298, %v3306
        %v3308 = vadd.f32 %v3307, 1.1283791
        %v3309 = vmul.f32 %v2095, %v3308
        %v3310 = vmul.f32 %v3298, 3.8918573e-05
        %v3311 = vadd.f32 %v3310, 0.001143296
        %v3312 = vmul.f32 %v3298, %v3311
        %v3313 = vadd.f32 %v3312, 0.014752088
        %v3314 = vmul.f32 %v3298, %v3313
        %v3315 = vadd.f32 %v3314, 0.112945676
        %v3316 = vmul.f32 %v3298, %v3315
        %v3317 = vadd.f32 %v3316, 0.4994258
        %v3318 = vmul.f32 %v3298, %v3317
        %v3319 = vadd.f32 %v3318, 1.0
        %v3320 = vrcp.pop %v3319
        %v3321 = vmul.f32 %v3319, %v3320
        %v3322 = vsub.f32 1.0, %v3321
        %v3323 = vmul.f32 %v3320, %v3322
        %v3324 = vadd.f32 %v3320, %v3323
        %vm3325 = vweird.f32 %v3319
        %vm3326 = vweird.f32 %v3320
        %vm3327 = vmor %vm3325, %vm3326
        %v3328 = vsel %vm3327, %v3320, %v3324
        %v3329 = vand.u32 2147483647, %v3319
        %vm3330 = vcmp.eq.f32.partialorder %v3329, 8.507059e+37
        %v3331 = vand.u32 %v3319, 2147483648
        %v3332 = vor.u32 1.1754944e-38, %v3331
        %v3333 = vsel %vm3330, %v3332, %v3328
        %v3334 = vmul.f32 %v3309, %v3333
        %v3335 = vmin.f32 %v3334, 1.0
        %v3336 = vmax.f32 %v3335, -1.0
        %v3337 = vmul.f32 %v2096, %v2096
        %v3338 = vmin.f32 16.0, %v3337
        %v3339 = vmul.f32 %v3338, 2.1237322e-06
        %v3340 = vadd.f32 %v3339, 0.00028619796
        %v3341 = vmul.f32 %v3338, %v3340
        %v3342 = vadd.f32 %v3341, 0.0036580483
        %v3343 = vmul.f32 %v3338, %v3342
        %v3344 = vadd.f32 %v3343, 0.05243302
        %v3345 = vmul.f32 %v3338, %v3344
        %v3346 = vadd.f32 %v3345, 0.18741608
        %v3347 = vmul.f32 %v3338, %v3346
        %v3348 = vadd.f32 %v3347, 1.1283791
        %v3349 = vmul.f32 %v2096, %v3348
        %v3350 = vmul.f32 %v3338, 3.8918573e-05
        %v3351 = vadd.f32 %v3350, 0.001143296
        %v3352 = vmul.f32 %v3338, %v3351
        %v3353 = vadd.f32 %v3352, 0.014752088
        %v3354 = vmul.f32 %v3338, %v3353
        %v3355 = vadd.f32 %v3354, 0.112945676
        %v3356 = vmul.f32 %v3338, %v3355
        %v3357 = vadd.f32 %v3356, 0.4994258
        %v3358 = vmul.f32 %v3338, %v3357
        %v3359 = vadd.f32 %v3358, 1.0
        %v3360 = vrcp.pop %v3359
        %v3361 = vmul.f32 %v3359, %v3360
        %v3362 = vsub.f32 1.0, %v3361
        %v3363 = vmul.f32 %v3360, %v3362
        %v3364 = vadd.f32 %v3360, %v3363
        %vm3365 = vweird.f32 %v3359
        %vm3366 = vweird.f32 %v3360
        %vm3367 = vmor %vm3365, %vm3366
        %v3368 = vsel %vm3367, %v3360, %v3364
        %v3369 = vand.u32 2147483647, %v3359
        %vm3370 = vcmp.eq.f32.partialorder %v3369, 8.507059e+37
        %v3371 = vand.u32 %v3359, 2147483648
        %v3372 = vor.u32 1.1754944e-38, %v3371
        %v3373 = vsel %vm3370, %v3372, %v3368
        %v3374 = vmul.f32 %v3349, %v3373
        %v3375 = vmin.f32 %v3374, 1.0
        %v3376 = vmax.f32 %v3375, -1.0
        %v3377 = vadd.f32 %v2136, 1.0
        %v3378 = vadd.f32 %v2176, 1.0
        %v3379 = vadd.f32 %v2216, 1.0
        %v3380 = vadd.f32 %v2256, 1.0
        %v3381 = vadd.f32 %v2296, 1.0
        %v3382 = vadd.f32 %v2336, 1.0
        %v3383 = vadd.f32 %v2376, 1.0
        %v3384 = vadd.f32 %v2416, 1.0
        %v3385 = vadd.f32 %v2456, 1.0
        %v3386 = vadd.f32 %v2496, 1.0
        %v3387 = vadd.f32 %v2536, 1.0
        %v3388 = vadd.f32 %v2576, 1.0
        %v3389 = vadd.f32 %v2616, 1.0
        %v3390 = vadd.f32 %v2656, 1.0
        %v3391 = vadd.f32 %v2696, 1.0
        %v3392 = vadd.f32 %v2736, 1.0
        %v3393 = vadd.f32 %v2776, 1.0
        %v3394 = vadd.f32 %v2816, 1.0
        %v3395 = vadd.f32 %v2856, 1.0
        %v3396 = vadd.f32 %v2896, 1.0
        %v3397 = vadd.f32 %v2936, 1.0
        %v3398 = vadd.f32 %v2976, 1.0
        %v3399 = vadd.f32 %v3016, 1.0
        %v3400 = vadd.f32 %v3056, 1.0
        %v3401 = vadd.f32 %v3096, 1.0
        %v3402 = vadd.f32 %v3136, 1.0
        %v3403 = vadd.f32 %v3176, 1.0
        %v3404 = vadd.f32 %v3216, 1.0
        %v3405 = vadd.f32 %v3256, 1.0
        %v3406 = vadd.f32 %v3296, 1.0
        %v3407 = vadd.f32 %v3336, 1.0
        %v3408 = vadd.f32 %v3376, 1.0
        %v3409 = vmul.f32 %v2033, %v3377
        %v3410 = vmul.f32 %v2034, %v3378
        %v3411 = vmul.f32 %v2035, %v3379
        %v3412 = vmul.f32 %v2036, %v3380
        %v3413 = vmul.f32 %v2037, %v3381
        %v3414 = vmul.f32 %v2038, %v3382
        %v3415 = vmul.f32 %v2039, %v3383
        %v3416 = vmul.f32 %v2040, %v3384
        %v3417 = vmul.f32 %v2041, %v3385
        %v3418 = vmul.f32 %v2042, %v3386
        %v3419 = vmul.f32 %v2043, %v3387
        %v3420 = vmul.f32 %v2044, %v3388
        %v3421 = vmul.f32 %v2045, %v3389
        %v3422 = vmul.f32 %v2046, %v3390
        %v3423 = vmul.f32 %v2047, %v3391
        %v3424 = vmul.f32 %v2048, %v3392
        %v3425 = vmul.f32 %v2049, %v3393
        %v3426 = vmul.f32 %v2050, %v3394
        %v3427 = vmul.f32 %v2051, %v3395
        %v3428 = vmul.f32 %v2052, %v3396
        %v3429 = vmul.f32 %v2053, %v3397
        %v3430 = vmul.f32 %v2054, %v3398
        %v3431 = vmul.f32 %v2055, %v3399
        %v3432 = vmul.f32 %v2056, %v3400
        %v3433 = vmul.f32 %v2057, %v3401
        %v3434 = vmul.f32 %v2058, %v3402
        %v3435 = vmul.f32 %v2059, %v3403
        %v3436 = vmul.f32 %v2060, %v3404
        %v3437 = vmul.f32 %v2061, %v3405
        %v3438 = vmul.f32 %v2062, %v3406
        %v3439 = vmul.f32 %v2063, %v3407
        %v3440 = vmul.f32 %v2064, %v3408
        %v3441 = vperm.slane %v182, 2
        %v3442 = vmul.f32 %v3409, %v3441
        %v3443 = vmul.f32 %v3410, %v3441
        %v3444 = vmul.f32 %v3411, %v3441
        %v3445 = vmul.f32 %v3412, %v3441
        %v3446 = vmul.f32 %v3413, %v3441
        %v3447 = vmul.f32 %v3414, %v3441
        %v3448 = vmul.f32 %v3415, %v3441
        %v3449 = vmul.f32 %v3416, %v3441
        %v3450 = vmul.f32 %v3417, %v3441
        %v3451 = vmul.f32 %v3418, %v3441
        %v3452 = vmul.f32 %v3419, %v3441
        %v3453 = vmul.f32 %v3420, %v3441
        %v3454 = vmul.f32 %v3421, %v3441
        %v3455 = vmul.f32 %v3422, %v3441
        %v3456 = vmul.f32 %v3423, %v3441
        %v3457 = vmul.f32 %v3424, %v3441
        %v3458 = vmul.f32 %v3425, %v3441
        %v3459 = vmul.f32 %v3426, %v3441
        %v3460 = vmul.f32 %v3427, %v3441
        %v3461 = vmul.f32 %v3428, %v3441
        %v3462 = vmul.f32 %v3429, %v3441
        %v3463 = vmul.f32 %v3430, %v3441
        %v3464 = vmul.f32 %v3431, %v3441
        %v3465 = vmul.f32 %v3432, %v3441
        %v3466 = vmul.f32 %v3433, %v3441
        %v3467 = vmul.f32 %v3434, %v3441
        %v3468 = vmul.f32 %v3435, %v3441
        %v3469 = vmul.f32 %v3436, %v3441
        %v3470 = vmul.f32 %v3437, %v3441
        %v3471 = vmul.f32 %v3438, %v3441
        %v3472 = vmul.f32 %v3439, %v3441
        %v3473 = vmul.f32 %v3440, %v3441
        %v3474 = vperm.slane %v182, 3
        %v3475 = vadd.f32 %v3442, %v3474
        %v3476 = vadd.f32 %v3443, %v3474
        %v3477 = vadd.f32 %v3444, %v3474
        %v3478 = vadd.f32 %v3445, %v3474
        %v3479 = vadd.f32 %v3446, %v3474
        %v3480 = vadd.f32 %v3447, %v3474
        %v3481 = vadd.f32 %v3448, %v3474
        %v3482 = vadd.f32 %v3449, %v3474
        %v3483 = vadd.f32 %v3450, %v3474
        %v3484 = vadd.f32 %v3451, %v3474
        %v3485 = vadd.f32 %v3452, %v3474
        %v3486 = vadd.f32 %v3453, %v3474
        %v3487 = vadd.f32 %v3454, %v3474
        %v3488 = vadd.f32 %v3455, %v3474
        %v3489 = vadd.f32 %v3456, %v3474
        %v3490 = vadd.f32 %v3457, %v3474
        %v3491 = vadd.f32 %v3458, %v3474
        %v3492 = vadd.f32 %v3459, %v3474
        %v3493 = vadd.f32 %v3460, %v3474
        %v3494 = vadd.f32 %v3461, %v3474
        %v3495 = vadd.f32 %v3462, %v3474
        %v3496 = vadd.f32 %v3463, %v3474
        %v3497 = vadd.f32 %v3464, %v3474
        %v3498 = vadd.f32 %v3465, %v3474
        %v3499 = vadd.f32 %v3466, %v3474
        %v3500 = vadd.f32 %v3467, %v3474
        %v3501 = vadd.f32 %v3468, %v3474
        %v3502 = vadd.f32 %v3469, %v3474
        %v3503 = vadd.f32 %v3470, %v3474
        %v3504 = vadd.f32 %v3471, %v3474
        %v3505 = vadd.f32 %v3472, %v3474
        %v3506 = vadd.f32 %v3473, %v3474
        %3507 = vst [vmem:[%s270 + $0x1] sm:$0xff] %v3475
        %3508 = vst [vmem:[%s270 + $0x9] sm:$0xff] %v3476
        %3509 = vst [vmem:[%s270 + $0x19] sm:$0xff] %v3477
        %3510 = vst [vmem:[%s270 + $0x21] sm:$0xff] %v3478
        %3511 = vst [vmem:[%s270 + $0x31] sm:$0xff] %v3479
        %3512 = vst [vmem:[%s270 + $0x39] sm:$0xff] %v3480
        %3513 = vst [vmem:[%s270 + $0x49] sm:$0xff] %v3481
        %3514 = vst [vmem:[%s270 + $0x51] sm:$0xff] %v3482
        %3515 = vst [vmem:[%s270 + $0x61] sm:$0xff] %v3483
        %3516 = vst [vmem:[%s270 + $0x69] sm:$0xff] %v3484
        %3517 = vst [vmem:[%s270 + $0x79] sm:$0xff] %v3485
        %3518 = vst [vmem:[%s270 + $0x81] sm:$0xff] %v3486
        %3519 = vst [vmem:[%s270 + $0x91] sm:$0xff] %v3487
        %3520 = vst [vmem:[%s270 + $0x99] sm:$0xff] %v3488
        %3521 = vst [vmem:[%s270 + $0xa9] sm:$0xff] %v3489
        %3522 = vst [vmem:[%s270 + $0xb1] sm:$0xff] %v3490
        %3523 = vst [vmem:[%s270 + $0xc1] sm:$0xff] %v3491
        %3524 = vst [vmem:[%s270 + $0xc9] sm:$0xff] %v3492
        %3525 = vst [vmem:[%s270 + $0xd9] sm:$0xff] %v3493
        %3526 = vst [vmem:[%s270 + $0xe1] sm:$0xff] %v3494
        %3527 = vst [vmem:[%s270 + $0xf1] sm:$0xff] %v3495
        %3528 = vst [vmem:[%s270 + $0xf9] sm:$0xff] %v3496
        %3529 = vst [vmem:[%s270 + $0x109] sm:$0xff] %v3497
        %3530 = vst [vmem:[%s270 + $0x111] sm:$0xff] %v3498
        %3531 = vst [vmem:[%s270 + $0x121] sm:$0xff] %v3499
        %3532 = vst [vmem:[%s270 + $0x129] sm:$0xff] %v3500
        %3533 = vst [vmem:[%s270 + $0x139] sm:$0xff] %v3501
        %3534 = vst [vmem:[%s270 + $0x141] sm:$0xff] %v3502
        %3535 = vst [vmem:[%s270 + $0x151] sm:$0xff] %v3503
        %3536 = vst [vmem:[%s270 + $0x159] sm:$0xff] %v3504
        %3537 = vst [vmem:[%s270 + $0x169] sm:$0xff] %v3505
        %3538 = vst [vmem:[%s270 + $0x171] sm:$0xff] %v3506
        %v3539 = vld [vmem:[#allocation2] sm:$0xff]
        %v3540 = vld [vmem:[#allocation2 + $0x8] sm:$0xff]
        %v3541 = vld [vmem:[#allocation2 + $0x10] sm:$0x3]
        %v3542 = vld [vmem:[#allocation2 + $0x18] sm:$0xff]
        %v3543 = vld [vmem:[#allocation2 + $0x20] sm:$0xff]
        %v3544 = vld [vmem:[#allocation2 + $0x28] sm:$0x3]
        %v3545 = vld [vmem:[#allocation2 + $0x30] sm:$0xff]
        %v3546 = vld [vmem:[#allocation2 + $0x38] sm:$0xff]
        %v3547 = vld [vmem:[#allocation2 + $0x40] sm:$0x3]
        %v3548 = vld [vmem:[#allocation2 + $0x48] sm:$0xff]
        %v3549 = vld [vmem:[#allocation2 + $0x50] sm:$0xff]
        %v3550 = vld [vmem:[#allocation2 + $0x58] sm:$0x3]
        %v3551 = vld [vmem:[#allocation2 + $0x60] sm:$0xff]
        %v3552 = vld [vmem:[#allocation2 + $0x68] sm:$0xff]
        %v3553 = vld [vmem:[#allocation2 + $0x70] sm:$0x3]
        %v3554 = vld [vmem:[#allocation2 + $0x78] sm:$0xff]
        %v3555 = vld [vmem:[#allocation2 + $0x80] sm:$0xff]
        %v3556 = vld [vmem:[#allocation2 + $0x88] sm:$0x3]
        %v3557 = vld [vmem:[#allocation2 + $0x90] sm:$0xff]
        %v3558 = vld [vmem:[#allocation2 + $0x98] sm:$0xff]
        %v3559 = vld [vmem:[#allocation2 + $0xa0] sm:$0x3]
        %v3560 = vld [vmem:[#allocation2 + $0xa8] sm:$0xff]
        %v3561 = vld [vmem:[#allocation2 + $0xb0] sm:$0xff]
        %v3562 = vld [vmem:[#allocation2 + $0xb8] sm:$0x3]
        %v3563 = vld [vmem:[#allocation2 + $0xc0] sm:$0xff]
        %v3564 = vld [vmem:[#allocation2 + $0xc8] sm:$0xff]
        %v3565 = vld [vmem:[#allocation2 + $0xd0] sm:$0x3]
        %v3566 = vld [vmem:[#allocation2 + $0xd8] sm:$0xff]
        %v3567 = vld [vmem:[#allocation2 + $0xe0] sm:$0xff]
        %v3568 = vld [vmem:[#allocation2 + $0xe8] sm:$0x3]
        %v3569 = vld [vmem:[#allocation2 + $0xf0] sm:$0xff]
        %v3570 = vld [vmem:[#allocation2 + $0xf8] sm:$0xff]
        %v3571 = vld [vmem:[#allocation2 + $0x100] sm:$0x3]
        %v3572 = vld [vmem:[#allocation2 + $0x108] sm:$0xff]
        %v3573 = vld [vmem:[#allocation2 + $0x110] sm:$0xff]
        %v3574 = vld [vmem:[#allocation2 + $0x118] sm:$0x3]
        %v3575 = vld [vmem:[#allocation2 + $0x120] sm:$0xff]
        %v3576 = vld [vmem:[#allocation2 + $0x128] sm:$0xff]
        %v3577 = vld [vmem:[#allocation2 + $0x130] sm:$0x3]
        %v3578 = vld [vmem:[#allocation2 + $0x138] sm:$0xff]
        %v3579 = vld [vmem:[#allocation2 + $0x140] sm:$0xff]
        %v3580 = vld [vmem:[#allocation2 + $0x148] sm:$0x3]
        %v3581 = vld [vmem:[#allocation2 + $0x150] sm:$0xff]
        %v3582 = vld [vmem:[#allocation2 + $0x158] sm:$0xff]
        %v3583 = vld [vmem:[#allocation2 + $0x160] sm:$0x3]
        %v3584 = vld [vmem:[#allocation2 + $0x168] sm:$0xff]
        %v3585 = vld [vmem:[#allocation2 + $0x170] sm:$0xff]
        %v3586 = vld [vmem:[#allocation2 + $0x178] sm:$0x3]
        %v3587 = vld [vmem:[#allocation2 + $0x180] sm:$0xff]
        %v3588 = vld [vmem:[#allocation2 + $0x188] sm:$0xff]
        %v3589 = vld [vmem:[#allocation2 + $0x190] sm:$0x3]
        %v3590 = vld [vmem:[#allocation2 + $0x198] sm:$0xff]
        %v3591 = vld [vmem:[#allocation2 + $0x1a0] sm:$0xff]
        %v3592 = vld [vmem:[#allocation2 + $0x1a8] sm:$0x3]
        %v3593 = vperm.slane %v182, 4
        %v3594 = vmul.f32 %v3539, %v3593
        %v3595 = vmul.f32 %v3540, %v3593
        %v3596 = vmul.f32 %v3542, %v3593
        %v3597 = vmul.f32 %v3543, %v3593
        %v3598 = vmul.f32 %v3545, %v3593
        %v3599 = vmul.f32 %v3546, %v3593
        %v3600 = vmul.f32 %v3548, %v3593
        %v3601 = vmul.f32 %v3549, %v3593
        %v3602 = vmul.f32 %v3551, %v3593
        %v3603 = vmul.f32 %v3552, %v3593
        %v3604 = vmul.f32 %v3554, %v3593
        %v3605 = vmul.f32 %v3555, %v3593
        %v3606 = vmul.f32 %v3557, %v3593
        %v3607 = vmul.f32 %v3558, %v3593
        %v3608 = vmul.f32 %v3560, %v3593
        %v3609 = vmul.f32 %v3561, %v3593
        %v3610 = vmul.f32 %v3563, %v3593
        %v3611 = vmul.f32 %v3564, %v3593
        %v3612 = vmul.f32 %v3566, %v3593
        %v3613 = vmul.f32 %v3567, %v3593
        %v3614 = vmul.f32 %v3569, %v3593
        %v3615 = vmul.f32 %v3570, %v3593
        %v3616 = vmul.f32 %v3572, %v3593
        %v3617 = vmul.f32 %v3573, %v3593
        %v3618 = vmul.f32 %v3575, %v3593
        %v3619 = vmul.f32 %v3576, %v3593
        %v3620 = vmul.f32 %v3578, %v3593
        %v3621 = vmul.f32 %v3579, %v3593
        %v3622 = vmul.f32 %v3581, %v3593
        %v3623 = vmul.f32 %v3582, %v3593
        %v3624 = vmul.f32 %v3584, %v3593
        %v3625 = vmul.f32 %v3585, %v3593
        %v3626 = vadd.f32 %v3594, 0.0
        %v3627 = vadd.f32 %v3595, 0.0
        %v3628 = vadd.f32 %v3596, 0.0
        %v3629 = vadd.f32 %v3597, 0.0
        %v3630 = vadd.f32 %v3598, 0.0
        %v3631 = vadd.f32 %v3599, 0.0
        %v3632 = vadd.f32 %v3600, 0.0
        %v3633 = vadd.f32 %v3601, 0.0
        %v3634 = vadd.f32 %v3602, 0.0
        %v3635 = vadd.f32 %v3603, 0.0
        %v3636 = vadd.f32 %v3604, 0.0
        %v3637 = vadd.f32 %v3605, 0.0
        %v3638 = vadd.f32 %v3606, 0.0
        %v3639 = vadd.f32 %v3607, 0.0
        %v3640 = vadd.f32 %v3608, 0.0
        %v3641 = vadd.f32 %v3609, 0.0
        %v3642 = vadd.f32 %v3610, 0.0
        %v3643 = vadd.f32 %v3611, 0.0
        %v3644 = vadd.f32 %v3612, 0.0
        %v3645 = vadd.f32 %v3613, 0.0
        %v3646 = vadd.f32 %v3614, 0.0
        %v3647 = vadd.f32 %v3615, 0.0
        %v3648 = vadd.f32 %v3616, 0.0
        %v3649 = vadd.f32 %v3617, 0.0
        %v3650 = vadd.f32 %v3618, 0.0
        %v3651 = vadd.f32 %v3619, 0.0
        %v3652 = vadd.f32 %v3620, 0.0
        %v3653 = vadd.f32 %v3621, 0.0
        %v3654 = vadd.f32 %v3622, 0.0
        %v3655 = vadd.f32 %v3623, 0.0
        %v3656 = vadd.f32 %v3624, 0.0
        %v3657 = vadd.f32 %v3625, 0.0
        %v3658 = vperm.slane %v182, 5
        %v3659 = vmul.f32 %v3539, %v3658
        %v3660 = vmul.f32 %v3540, %v3658
        %v3661 = vmul.f32 %v3541, %v3658
        %v3662 = vmul.f32 %v3542, %v3658
        %v3663 = vmul.f32 %v3543, %v3658
        %v3664 = vmul.f32 %v3544, %v3658
        %v3665 = vmul.f32 %v3545, %v3658
        %v3666 = vmul.f32 %v3546, %v3658
        %v3667 = vmul.f32 %v3547, %v3658
        %v3668 = vmul.f32 %v3548, %v3658
        %v3669 = vmul.f32 %v3549, %v3658
        %v3670 = vmul.f32 %v3550, %v3658
        %v3671 = vmul.f32 %v3551, %v3658
        %v3672 = vmul.f32 %v3552, %v3658
        %v3673 = vmul.f32 %v3553, %v3658
        %v3674 = vmul.f32 %v3554, %v3658
        %v3675 = vmul.f32 %v3555, %v3658
        %v3676 = vmul.f32 %v3556, %v3658
        %v3677 = vmul.f32 %v3557, %v3658
        %v3678 = vmul.f32 %v3558, %v3658
        %v3679 = vmul.f32 %v3559, %v3658
        %v3680 = vmul.f32 %v3560, %v3658
        %v3681 = vmul.f32 %v3561, %v3658
        %v3682 = vmul.f32 %v3562, %v3658
        %v3683 = vmul.f32 %v3563, %v3658
        %v3684 = vmul.f32 %v3564, %v3658
        %v3685 = vmul.f32 %v3565, %v3658
        %v3686 = vmul.f32 %v3566, %v3658
        %v3687 = vmul.f32 %v3567, %v3658
        %v3688 = vmul.f32 %v3568, %v3658
        %v3689 = vmul.f32 %v3569, %v3658
        %v3690 = vmul.f32 %v3570, %v3658
        %v3691 = vmul.f32 %v3571, %v3658
        %v3692 = vmul.f32 %v3572, %v3658
        %v3693 = vmul.f32 %v3573, %v3658
        %v3694 = vmul.f32 %v3574, %v3658
        %v3695 = vmul.f32 %v3575, %v3658
        %v3696 = vmul.f32 %v3576, %v3658
        %v3697 = vmul.f32 %v3577, %v3658
        %v3698 = vmul.f32 %v3578, %v3658
        %v3699 = vmul.f32 %v3579, %v3658
        %v3700 = vmul.f32 %v3580, %v3658
        %v3701 = vmul.f32 %v3581, %v3658
        %v3702 = vmul.f32 %v3582, %v3658
        %v3703 = vmul.f32 %v3583, %v3658
        %v3704 = vmul.f32 %v3584, %v3658
        %v3705 = vmul.f32 %v3585, %v3658
        %v3706 = vmul.f32 %v3586, %v3658
        %v3755 = vrot.slane %v3659, 1
        %v3756 = vrot.slane %v3660, 1
        %v3757 = vsel %vm519, %v3755, %v3756
        %v3758 = vrot.slane %v3661, 1
        %v3759 = vsel %vm519, %v3756, %v3758
        %v3760 = vrot.slane %v3662, 1
        %v3761 = vrot.slane %v3663, 1
        %v3762 = vsel %vm519, %v3760, %v3761
        %v3763 = vrot.slane %v3664, 1
        %v3764 = vsel %vm519, %v3761, %v3763
        %v3765 = vrot.slane %v3665, 1
        %v3766 = vrot.slane %v3666, 1
        %v3767 = vsel %vm519, %v3765, %v3766
        %v3768 = vrot.slane %v3667, 1
        %v3769 = vsel %vm519, %v3766, %v3768
        %v3770 = vrot.slane %v3668, 1
        %v3771 = vrot.slane %v3669, 1
        %v3772 = vsel %vm519, %v3770, %v3771
        %v3773 = vrot.slane %v3670, 1
        %v3774 = vsel %vm519, %v3771, %v3773
        %v3775 = vrot.slane %v3671, 1
        %v3776 = vrot.slane %v3672, 1
        %v3777 = vsel %vm519, %v3775, %v3776
        %v3778 = vrot.slane %v3673, 1
        %v3779 = vsel %vm519, %v3776, %v3778
        %v3780 = vrot.slane %v3674, 1
        %v3781 = vrot.slane %v3675, 1
        %v3782 = vsel %vm519, %v3780, %v3781
        %v3783 = vrot.slane %v3676, 1
        %v3784 = vsel %vm519, %v3781, %v3783
        %v3785 = vrot.slane %v3677, 1
        %v3786 = vrot.slane %v3678, 1
        %v3787 = vsel %vm519, %v3785, %v3786
        %v3788 = vrot.slane %v3679, 1
        %v3789 = vsel %vm519, %v3786, %v3788
        %v3790 = vrot.slane %v3680, 1
        %v3791 = vrot.slane %v3681, 1
        %v3792 = vsel %vm519, %v3790, %v3791
        %v3793 = vrot.slane %v3682, 1
        %v3794 = vsel %vm519, %v3791, %v3793
        %v3795 = vrot.slane %v3683, 1
        %v3796 = vrot.slane %v3684, 1
        %v3797 = vsel %vm519, %v3795, %v3796
        %v3798 = vrot.slane %v3685, 1
        %v3799 = vsel %vm519, %v3796, %v3798
        %v3800 = vrot.slane %v3686, 1
        %v3801 = vrot.slane %v3687, 1
        %v3802 = vsel %vm519, %v3800, %v3801
        %v3803 = vrot.slane %v3688, 1
        %v3804 = vsel %vm519, %v3801, %v3803
        %v3805 = vrot.slane %v3689, 1
        %v3806 = vrot.slane %v3690, 1
        %v3807 = vsel %vm519, %v3805, %v3806
        %v3808 = vrot.slane %v3691, 1
        %v3809 = vsel %vm519, %v3806, %v3808
        %v3810 = vrot.slane %v3692, 1
        %v3811 = vrot.slane %v3693, 1
        %v3812 = vsel %vm519, %v3810, %v3811
        %v3813 = vrot.slane %v3694, 1
        %v3814 = vsel %vm519, %v3811, %v3813
        %v3815 = vrot.slane %v3695, 1
        %v3816 = vrot.slane %v3696, 1
        %v3817 = vsel %vm519, %v3815, %v3816
        %v3818 = vrot.slane %v3697, 1
        %v3819 = vsel %vm519, %v3816, %v3818
        %v3820 = vrot.slane %v3698, 1
        %v3821 = vrot.slane %v3699, 1
        %v3822 = vsel %vm519, %v3820, %v3821
        %v3823 = vrot.slane %v3700, 1
        %v3824 = vsel %vm519, %v3821, %v3823
        %v3825 = vrot.slane %v3701, 1
        %v3826 = vrot.slane %v3702, 1
        %v3827 = vsel %vm519, %v3825, %v3826
        %v3828 = vrot.slane %v3703, 1
        %v3829 = vsel %vm519, %v3826, %v3828
        %v3830 = vrot.slane %v3704, 1
        %v3831 = vrot.slane %v3705, 1
        %v3832 = vsel %vm519, %v3830, %v3831
        %v3833 = vrot.slane %v3706, 1
        %v3834 = vsel %vm519, %v3831, %v3833
        %v3867 = vadd.f32 %v3626, %v3757
        %v3868 = vadd.f32 %v3627, %v3759
        %v3869 = vadd.f32 %v3628, %v3762
        %v3870 = vadd.f32 %v3629, %v3764
        %v3871 = vadd.f32 %v3630, %v3767
        %v3872 = vadd.f32 %v3631, %v3769
        %v3873 = vadd.f32 %v3632, %v3772
        %v3874 = vadd.f32 %v3633, %v3774
        %v3875 = vadd.f32 %v3634, %v3777
        %v3876 = vadd.f32 %v3635, %v3779
        %v3877 = vadd.f32 %v3636, %v3782
        %v3878 = vadd.f32 %v3637, %v3784
        %v3879 = vadd.f32 %v3638, %v3787
        %v3880 = vadd.f32 %v3639, %v3789
        %v3881 = vadd.f32 %v3640, %v3792
        %v3882 = vadd.f32 %v3641, %v3794
        %v3883 = vadd.f32 %v3642, %v3797
        %v3884 = vadd.f32 %v3643, %v3799
        %v3885 = vadd.f32 %v3644, %v3802
        %v3886 = vadd.f32 %v3645, %v3804
        %v3887 = vadd.f32 %v3646, %v3807
        %v3888 = vadd.f32 %v3647, %v3809
        %v3889 = vadd.f32 %v3648, %v3812
        %v3890 = vadd.f32 %v3649, %v3814
        %v3891 = vadd.f32 %v3650, %v3817
        %v3892 = vadd.f32 %v3651, %v3819
        %v3893 = vadd.f32 %v3652, %v3822
        %v3894 = vadd.f32 %v3653, %v3824
        %v3895 = vadd.f32 %v3654, %v3827
        %v3896 = vadd.f32 %v3655, %v3829
        %v3897 = vadd.f32 %v3656, %v3832
        %v3898 = vadd.f32 %v3657, %v3834
        %v3899 = vperm.slane %v182, 6
        %v3900 = vmul.f32 %v3539, %v3899
        %v3901 = vmul.f32 %v3540, %v3899
        %v3902 = vmul.f32 %v3541, %v3899
        %v3903 = vmul.f32 %v3542, %v3899
        %v3904 = vmul.f32 %v3543, %v3899
        %v3905 = vmul.f32 %v3544, %v3899
        %v3906 = vmul.f32 %v3545, %v3899
        %v3907 = vmul.f32 %v3546, %v3899
        %v3908 = vmul.f32 %v3547, %v3899
        %v3909 = vmul.f32 %v3548, %v3899
        %v3910 = vmul.f32 %v3549, %v3899
        %v3911 = vmul.f32 %v3550, %v3899
        %v3912 = vmul.f32 %v3551, %v3899
        %v3913 = vmul.f32 %v3552, %v3899
        %v3914 = vmul.f32 %v3553, %v3899
        %v3915 = vmul.f32 %v3554, %v3899
        %v3916 = vmul.f32 %v3555, %v3899
        %v3917 = vmul.f32 %v3556, %v3899
        %v3918 = vmul.f32 %v3557, %v3899
        %v3919 = vmul.f32 %v3558, %v3899
        %v3920 = vmul.f32 %v3559, %v3899
        %v3921 = vmul.f32 %v3560, %v3899
        %v3922 = vmul.f32 %v3561, %v3899
        %v3923 = vmul.f32 %v3562, %v3899
        %v3924 = vmul.f32 %v3563, %v3899
        %v3925 = vmul.f32 %v3564, %v3899
        %v3926 = vmul.f32 %v3565, %v3899
        %v3927 = vmul.f32 %v3566, %v3899
        %v3928 = vmul.f32 %v3567, %v3899
        %v3929 = vmul.f32 %v3568, %v3899
        %v3930 = vmul.f32 %v3569, %v3899
        %v3931 = vmul.f32 %v3570, %v3899
        %v3932 = vmul.f32 %v3571, %v3899
        %v3933 = vmul.f32 %v3572, %v3899
        %v3934 = vmul.f32 %v3573, %v3899
        %v3935 = vmul.f32 %v3574, %v3899
        %v3936 = vmul.f32 %v3575, %v3899
        %v3937 = vmul.f32 %v3576, %v3899
        %v3938 = vmul.f32 %v3577, %v3899
        %v3939 = vmul.f32 %v3578, %v3899
        %v3940 = vmul.f32 %v3579, %v3899
        %v3941 = vmul.f32 %v3580, %v3899
        %v3942 = vmul.f32 %v3581, %v3899
        %v3943 = vmul.f32 %v3582, %v3899
        %v3944 = vmul.f32 %v3583, %v3899
        %v3945 = vmul.f32 %v3584, %v3899
        %v3946 = vmul.f32 %v3585, %v3899
        %v3947 = vmul.f32 %v3586, %v3899
        %v3996 = vrot.slane %v3900, 2
        %v3997 = vrot.slane %v3901, 2
        %v3998 = vsel %vm761, %v3996, %v3997
        %v3999 = vrot.slane %v3902, 2
        %v4000 = vsel %vm761, %v3997, %v3999
        %v4001 = vrot.slane %v3903, 2
        %v4002 = vrot.slane %v3904, 2
        %v4003 = vsel %vm761, %v4001, %v4002
        %v4004 = vrot.slane %v3905, 2
        %v4005 = vsel %vm761, %v4002, %v4004
        %v4006 = vrot.slane %v3906, 2
        %v4007 = vrot.slane %v3907, 2
        %v4008 = vsel %vm761, %v4006, %v4007
        %v4009 = vrot.slane %v3908, 2
        %v4010 = vsel %vm761, %v4007, %v4009
        %v4011 = vrot.slane %v3909, 2
        %v4012 = vrot.slane %v3910, 2
        %v4013 = vsel %vm761, %v4011, %v4012
        %v4014 = vrot.slane %v3911, 2
        %v4015 = vsel %vm761, %v4012, %v4014
        %v4016 = vrot.slane %v3912, 2
        %v4017 = vrot.slane %v3913, 2
        %v4018 = vsel %vm761, %v4016, %v4017
        %v4019 = vrot.slane %v3914, 2
        %v4020 = vsel %vm761, %v4017, %v4019
        %v4021 = vrot.slane %v3915, 2
        %v4022 = vrot.slane %v3916, 2
        %v4023 = vsel %vm761, %v4021, %v4022
        %v4024 = vrot.slane %v3917, 2
        %v4025 = vsel %vm761, %v4022, %v4024
        %v4026 = vrot.slane %v3918, 2
        %v4027 = vrot.slane %v3919, 2
        %v4028 = vsel %vm761, %v4026, %v4027
        %v4029 = vrot.slane %v3920, 2
        %v4030 = vsel %vm761, %v4027, %v4029
        %v4031 = vrot.slane %v3921, 2
        %v4032 = vrot.slane %v3922, 2
        %v4033 = vsel %vm761, %v4031, %v4032
        %v4034 = vrot.slane %v3923, 2
        %v4035 = vsel %vm761, %v4032, %v4034
        %v4036 = vrot.slane %v3924, 2
        %v4037 = vrot.slane %v3925, 2
        %v4038 = vsel %vm761, %v4036, %v4037
        %v4039 = vrot.slane %v3926, 2
        %v4040 = vsel %vm761, %v4037, %v4039
        %v4041 = vrot.slane %v3927, 2
        %v4042 = vrot.slane %v3928, 2
        %v4043 = vsel %vm761, %v4041, %v4042
        %v4044 = vrot.slane %v3929, 2
        %v4045 = vsel %vm761, %v4042, %v4044
        %v4046 = vrot.slane %v3930, 2
        %v4047 = vrot.slane %v3931, 2
        %v4048 = vsel %vm761, %v4046, %v4047
        %v4049 = vrot.slane %v3932, 2
        %v4050 = vsel %vm761, %v4047, %v4049
        %v4051 = vrot.slane %v3933, 2
        %v4052 = vrot.slane %v3934, 2
        %v4053 = vsel %vm761, %v4051, %v4052
        %v4054 = vrot.slane %v3935, 2
        %v4055 = vsel %vm761, %v4052, %v4054
        %v4056 = vrot.slane %v3936, 2
        %v4057 = vrot.slane %v3937, 2
        %v4058 = vsel %vm761, %v4056, %v4057
        %v4059 = vrot.slane %v3938, 2
        %v4060 = vsel %vm761, %v4057, %v4059
        %v4061 = vrot.slane %v3939, 2
        %v4062 = vrot.slane %v3940, 2
        %v4063 = vsel %vm761, %v4061, %v4062
        %v4064 = vrot.slane %v3941, 2
        %v4065 = vsel %vm761, %v4062, %v4064
        %v4066 = vrot.slane %v3942, 2
        %v4067 = vrot.slane %v3943, 2
        %v4068 = vsel %vm761, %v4066, %v4067
        %v4069 = vrot.slane %v3944, 2
        %v4070 = vsel %vm761, %v4067, %v4069
        %v4071 = vrot.slane %v3945, 2
        %v4072 = vrot.slane %v3946, 2
        %v4073 = vsel %vm761, %v4071, %v4072
        %v4074 = vrot.slane %v3947, 2
        %v4075 = vsel %vm761, %v4072, %v4074
        %v4108 = vadd.f32 %v3867, %v3998
        %v4109 = vadd.f32 %v3868, %v4000
        %v4110 = vadd.f32 %v3869, %v4003
        %v4111 = vadd.f32 %v3870, %v4005
        %v4112 = vadd.f32 %v3871, %v4008
        %v4113 = vadd.f32 %v3872, %v4010
        %v4114 = vadd.f32 %v3873, %v4013
        %v4115 = vadd.f32 %v3874, %v4015
        %v4116 = vadd.f32 %v3875, %v4018
        %v4117 = vadd.f32 %v3876, %v4020
        %v4118 = vadd.f32 %v3877, %v4023
        %v4119 = vadd.f32 %v3878, %v4025
        %v4120 = vadd.f32 %v3879, %v4028
        %v4121 = vadd.f32 %v3880, %v4030
        %v4122 = vadd.f32 %v3881, %v4033
        %v4123 = vadd.f32 %v3882, %v4035
        %v4124 = vadd.f32 %v3883, %v4038
        %v4125 = vadd.f32 %v3884, %v4040
        %v4126 = vadd.f32 %v3885, %v4043
        %v4127 = vadd.f32 %v3886, %v4045
        %v4128 = vadd.f32 %v3887, %v4048
        %v4129 = vadd.f32 %v3888, %v4050
        %v4130 = vadd.f32 %v3889, %v4053
        %v4131 = vadd.f32 %v3890, %v4055
        %v4132 = vadd.f32 %v3891, %v4058
        %v4133 = vadd.f32 %v3892, %v4060
        %v4134 = vadd.f32 %v3893, %v4063
        %v4135 = vadd.f32 %v3894, %v4065
        %v4136 = vadd.f32 %v3895, %v4068
        %v4137 = vadd.f32 %v3896, %v4070
        %v4138 = vadd.f32 %v3897, %v4073
        %v4139 = vadd.f32 %v3898, %v4075
        %v4140 = vperm.slane %v182, 7
        %v4141 = vmul.f32 %v3542, %v4140
        %v4142 = vmul.f32 %v3543, %v4140
        %v4143 = vmul.f32 %v3545, %v4140
        %v4144 = vmul.f32 %v3546, %v4140
        %v4145 = vmul.f32 %v3548, %v4140
        %v4146 = vmul.f32 %v3549, %v4140
        %v4147 = vmul.f32 %v3551, %v4140
        %v4148 = vmul.f32 %v3552, %v4140
        %v4149 = vmul.f32 %v3554, %v4140
        %v4150 = vmul.f32 %v3555, %v4140
        %v4151 = vmul.f32 %v3557, %v4140
        %v4152 = vmul.f32 %v3558, %v4140
        %v4153 = vmul.f32 %v3560, %v4140
        %v4154 = vmul.f32 %v3561, %v4140
        %v4155 = vmul.f32 %v3563, %v4140
        %v4156 = vmul.f32 %v3564, %v4140
        %v4157 = vmul.f32 %v3566, %v4140
        %v4158 = vmul.f32 %v3567, %v4140
        %v4159 = vmul.f32 %v3569, %v4140
        %v4160 = vmul.f32 %v3570, %v4140
        %v4161 = vmul.f32 %v3572, %v4140
        %v4162 = vmul.f32 %v3573, %v4140
        %v4163 = vmul.f32 %v3575, %v4140
        %v4164 = vmul.f32 %v3576, %v4140
        %v4165 = vmul.f32 %v3578, %v4140
        %v4166 = vmul.f32 %v3579, %v4140
        %v4167 = vmul.f32 %v3581, %v4140
        %v4168 = vmul.f32 %v3582, %v4140
        %v4169 = vmul.f32 %v3584, %v4140
        %v4170 = vmul.f32 %v3585, %v4140
        %v4171 = vmul.f32 %v3587, %v4140
        %v4172 = vmul.f32 %v3588, %v4140
        %v4173 = vadd.f32 %v4108, %v4141
        %v4174 = vadd.f32 %v4109, %v4142
        %v4175 = vadd.f32 %v4110, %v4143
        %v4176 = vadd.f32 %v4111, %v4144
        %v4177 = vadd.f32 %v4112, %v4145
        %v4178 = vadd.f32 %v4113, %v4146
        %v4179 = vadd.f32 %v4114, %v4147
        %v4180 = vadd.f32 %v4115, %v4148
        %v4181 = vadd.f32 %v4116, %v4149
        %v4182 = vadd.f32 %v4117, %v4150
        %v4183 = vadd.f32 %v4118, %v4151
        %v4184 = vadd.f32 %v4119, %v4152
        %v4185 = vadd.f32 %v4120, %v4153
        %v4186 = vadd.f32 %v4121, %v4154
        %v4187 = vadd.f32 %v4122, %v4155
        %v4188 = vadd.f32 %v4123, %v4156
        %v4189 = vadd.f32 %v4124, %v4157
        %v4190 = vadd.f32 %v4125, %v4158
        %v4191 = vadd.f32 %v4126, %v4159
        %v4192 = vadd.f32 %v4127, %v4160
        %v4193 = vadd.f32 %v4128, %v4161
        %v4194 = vadd.f32 %v4129, %v4162
        %v4195 = vadd.f32 %v4130, %v4163
        %v4196 = vadd.f32 %v4131, %v4164
        %v4197 = vadd.f32 %v4132, %v4165
        %v4198 = vadd.f32 %v4133, %v4166
        %v4199 = vadd.f32 %v4134, %v4167
        %v4200 = vadd.f32 %v4135, %v4168
        %v4201 = vadd.f32 %v4136, %v4169
        %v4202 = vadd.f32 %v4137, %v4170
        %v4203 = vadd.f32 %v4138, %v4171
        %v4204 = vadd.f32 %v4139, %v4172
        %v4205 = vperm.slane %v183, 0
        %v4206 = vmul.f32 %v3542, %v4205
        %v4207 = vmul.f32 %v3543, %v4205
        %v4208 = vmul.f32 %v3544, %v4205
        %v4209 = vmul.f32 %v3545, %v4205
        %v4210 = vmul.f32 %v3546, %v4205
        %v4211 = vmul.f32 %v3547, %v4205
        %v4212 = vmul.f32 %v3548, %v4205
        %v4213 = vmul.f32 %v3549, %v4205
        %v4214 = vmul.f32 %v3550, %v4205
        %v4215 = vmul.f32 %v3551, %v4205
        %v4216 = vmul.f32 %v3552, %v4205
        %v4217 = vmul.f32 %v3553, %v4205
        %v4218 = vmul.f32 %v3554, %v4205
        %v4219 = vmul.f32 %v3555, %v4205
        %v4220 = vmul.f32 %v3556, %v4205
        %v4221 = vmul.f32 %v3557, %v4205
        %v4222 = vmul.f32 %v3558, %v4205
        %v4223 = vmul.f32 %v3559, %v4205
        %v4224 = vmul.f32 %v3560, %v4205
        %v4225 = vmul.f32 %v3561, %v4205
        %v4226 = vmul.f32 %v3562, %v4205
        %v4227 = vmul.f32 %v3563, %v4205
        %v4228 = vmul.f32 %v3564, %v4205
        %v4229 = vmul.f32 %v3565, %v4205
        %v4230 = vmul.f32 %v3566, %v4205
        %v4231 = vmul.f32 %v3567, %v4205
        %v4232 = vmul.f32 %v3568, %v4205
        %v4233 = vmul.f32 %v3569, %v4205
        %v4234 = vmul.f32 %v3570, %v4205
        %v4235 = vmul.f32 %v3571, %v4205
        %v4236 = vmul.f32 %v3572, %v4205
        %v4237 = vmul.f32 %v3573, %v4205
        %v4238 = vmul.f32 %v3574, %v4205
        %v4239 = vmul.f32 %v3575, %v4205
        %v4240 = vmul.f32 %v3576, %v4205
        %v4241 = vmul.f32 %v3577, %v4205
        %v4242 = vmul.f32 %v3578, %v4205
        %v4243 = vmul.f32 %v3579, %v4205
        %v4244 = vmul.f32 %v3580, %v4205
        %v4245 = vmul.f32 %v3581, %v4205
        %v4246 = vmul.f32 %v3582, %v4205
        %v4247 = vmul.f32 %v3583, %v4205
        %v4248 = vmul.f32 %v3584, %v4205
        %v4249 = vmul.f32 %v3585, %v4205
        %v4250 = vmul.f32 %v3586, %v4205
        %v4251 = vmul.f32 %v3587, %v4205
        %v4252 = vmul.f32 %v3588, %v4205
        %v4253 = vmul.f32 %v3589, %v4205
        %v4302 = vrot.slane %v4206, 1
        %v4303 = vrot.slane %v4207, 1
        %v4304 = vsel %vm519, %v4302, %v4303
        %v4305 = vrot.slane %v4208, 1
        %v4306 = vsel %vm519, %v4303, %v4305
        %v4307 = vrot.slane %v4209, 1
        %v4308 = vrot.slane %v4210, 1
        %v4309 = vsel %vm519, %v4307, %v4308
        %v4310 = vrot.slane %v4211, 1
        %v4311 = vsel %vm519, %v4308, %v4310
        %v4312 = vrot.slane %v4212, 1
        %v4313 = vrot.slane %v4213, 1
        %v4314 = vsel %vm519, %v4312, %v4313
        %v4315 = vrot.slane %v4214, 1
        %v4316 = vsel %vm519, %v4313, %v4315
        %v4317 = vrot.slane %v4215, 1
        %v4318 = vrot.slane %v4216, 1
        %v4319 = vsel %vm519, %v4317, %v4318
        %v4320 = vrot.slane %v4217, 1
        %v4321 = vsel %vm519, %v4318, %v4320
        %v4322 = vrot.slane %v4218, 1
        %v4323 = vrot.slane %v4219, 1
        %v4324 = vsel %vm519, %v4322, %v4323
        %v4325 = vrot.slane %v4220, 1
        %v4326 = vsel %vm519, %v4323, %v4325
        %v4327 = vrot.slane %v4221, 1
        %v4328 = vrot.slane %v4222, 1
        %v4329 = vsel %vm519, %v4327, %v4328
        %v4330 = vrot.slane %v4223, 1
        %v4331 = vsel %vm519, %v4328, %v4330
        %v4332 = vrot.slane %v4224, 1
        %v4333 = vrot.slane %v4225, 1
        %v4334 = vsel %vm519, %v4332, %v4333
        %v4335 = vrot.slane %v4226, 1
        %v4336 = vsel %vm519, %v4333, %v4335
        %v4337 = vrot.slane %v4227, 1
        %v4338 = vrot.slane %v4228, 1
        %v4339 = vsel %vm519, %v4337, %v4338
        %v4340 = vrot.slane %v4229, 1
        %v4341 = vsel %vm519, %v4338, %v4340
        %v4342 = vrot.slane %v4230, 1
        %v4343 = vrot.slane %v4231, 1
        %v4344 = vsel %vm519, %v4342, %v4343
        %v4345 = vrot.slane %v4232, 1
        %v4346 = vsel %vm519, %v4343, %v4345
        %v4347 = vrot.slane %v4233, 1
        %v4348 = vrot.slane %v4234, 1
        %v4349 = vsel %vm519, %v4347, %v4348
        %v4350 = vrot.slane %v4235, 1
        %v4351 = vsel %vm519, %v4348, %v4350
        %v4352 = vrot.slane %v4236, 1
        %v4353 = vrot.slane %v4237, 1
        %v4354 = vsel %vm519, %v4352, %v4353
        %v4355 = vrot.slane %v4238, 1
        %v4356 = vsel %vm519, %v4353, %v4355
        %v4357 = vrot.slane %v4239, 1
        %v4358 = vrot.slane %v4240, 1
        %v4359 = vsel %vm519, %v4357, %v4358
        %v4360 = vrot.slane %v4241, 1
        %v4361 = vsel %vm519, %v4358, %v4360
        %v4362 = vrot.slane %v4242, 1
        %v4363 = vrot.slane %v4243, 1
        %v4364 = vsel %vm519, %v4362, %v4363
        %v4365 = vrot.slane %v4244, 1
        %v4366 = vsel %vm519, %v4363, %v4365
        %v4367 = vrot.slane %v4245, 1
        %v4368 = vrot.slane %v4246, 1
        %v4369 = vsel %vm519, %v4367, %v4368
        %v4370 = vrot.slane %v4247, 1
        %v4371 = vsel %vm519, %v4368, %v4370
        %v4372 = vrot.slane %v4248, 1
        %v4373 = vrot.slane %v4249, 1
        %v4374 = vsel %vm519, %v4372, %v4373
        %v4375 = vrot.slane %v4250, 1
        %v4376 = vsel %vm519, %v4373, %v4375
        %v4377 = vrot.slane %v4251, 1
        %v4378 = vrot.slane %v4252, 1
        %v4379 = vsel %vm519, %v4377, %v4378
        %v4380 = vrot.slane %v4253, 1
        %v4381 = vsel %vm519, %v4378, %v4380
        %v4414 = vadd.f32 %v4173, %v4304
        %v4415 = vadd.f32 %v4174, %v4306
        %v4416 = vadd.f32 %v4175, %v4309
        %v4417 = vadd.f32 %v4176, %v4311
        %v4418 = vadd.f32 %v4177, %v4314
        %v4419 = vadd.f32 %v4178, %v4316
        %v4420 = vadd.f32 %v4179, %v4319
        %v4421 = vadd.f32 %v4180, %v4321
        %v4422 = vadd.f32 %v4181, %v4324
        %v4423 = vadd.f32 %v4182, %v4326
        %v4424 = vadd.f32 %v4183, %v4329
        %v4425 = vadd.f32 %v4184, %v4331
        %v4426 = vadd.f32 %v4185, %v4334
        %v4427 = vadd.f32 %v4186, %v4336
        %v4428 = vadd.f32 %v4187, %v4339
        %v4429 = vadd.f32 %v4188, %v4341
        %v4430 = vadd.f32 %v4189, %v4344
        %v4431 = vadd.f32 %v4190, %v4346
        %v4432 = vadd.f32 %v4191, %v4349
        %v4433 = vadd.f32 %v4192, %v4351
        %v4434 = vadd.f32 %v4193, %v4354
        %v4435 = vadd.f32 %v4194, %v4356
        %v4436 = vadd.f32 %v4195, %v4359
        %v4437 = vadd.f32 %v4196, %v4361
        %v4438 = vadd.f32 %v4197, %v4364
        %v4439 = vadd.f32 %v4198, %v4366
        %v4440 = vadd.f32 %v4199, %v4369
        %v4441 = vadd.f32 %v4200, %v4371
        %v4442 = vadd.f32 %v4201, %v4374
        %v4443 = vadd.f32 %v4202, %v4376
        %v4444 = vadd.f32 %v4203, %v4379
        %v4445 = vadd.f32 %v4204, %v4381
        %v4446 = vperm.slane %v183, 1
        %v4447 = vmul.f32 %v3542, %v4446
        %v4448 = vmul.f32 %v3543, %v4446
        %v4449 = vmul.f32 %v3544, %v4446
        %v4450 = vmul.f32 %v3545, %v4446
        %v4451 = vmul.f32 %v3546, %v4446
        %v4452 = vmul.f32 %v3547, %v4446
        %v4453 = vmul.f32 %v3548, %v4446
        %v4454 = vmul.f32 %v3549, %v4446
        %v4455 = vmul.f32 %v3550, %v4446
        %v4456 = vmul.f32 %v3551, %v4446
        %v4457 = vmul.f32 %v3552, %v4446
        %v4458 = vmul.f32 %v3553, %v4446
        %v4459 = vmul.f32 %v3554, %v4446
        %v4460 = vmul.f32 %v3555, %v4446
        %v4461 = vmul.f32 %v3556, %v4446
        %v4462 = vmul.f32 %v3557, %v4446
        %v4463 = vmul.f32 %v3558, %v4446
        %v4464 = vmul.f32 %v3559, %v4446
        %v4465 = vmul.f32 %v3560, %v4446
        %v4466 = vmul.f32 %v3561, %v4446
        %v4467 = vmul.f32 %v3562, %v4446
        %v4468 = vmul.f32 %v3563, %v4446
        %v4469 = vmul.f32 %v3564, %v4446
        %v4470 = vmul.f32 %v3565, %v4446
        %v4471 = vmul.f32 %v3566, %v4446
        %v4472 = vmul.f32 %v3567, %v4446
        %v4473 = vmul.f32 %v3568, %v4446
        %v4474 = vmul.f32 %v3569, %v4446
        %v4475 = vmul.f32 %v3570, %v4446
        %v4476 = vmul.f32 %v3571, %v4446
        %v4477 = vmul.f32 %v3572, %v4446
        %v4478 = vmul.f32 %v3573, %v4446
        %v4479 = vmul.f32 %v3574, %v4446
        %v4480 = vmul.f32 %v3575, %v4446
        %v4481 = vmul.f32 %v3576, %v4446
        %v4482 = vmul.f32 %v3577, %v4446
        %v4483 = vmul.f32 %v3578, %v4446
        %v4484 = vmul.f32 %v3579, %v4446
        %v4485 = vmul.f32 %v3580, %v4446
        %v4486 = vmul.f32 %v3581, %v4446
        %v4487 = vmul.f32 %v3582, %v4446
        %v4488 = vmul.f32 %v3583, %v4446
        %v4489 = vmul.f32 %v3584, %v4446
        %v4490 = vmul.f32 %v3585, %v4446
        %v4491 = vmul.f32 %v3586, %v4446
        %v4492 = vmul.f32 %v3587, %v4446
        %v4493 = vmul.f32 %v3588, %v4446
        %v4494 = vmul.f32 %v3589, %v4446
        %v4543 = vrot.slane %v4447, 2
        %v4544 = vrot.slane %v4448, 2
        %v4545 = vsel %vm761, %v4543, %v4544
        %v4546 = vrot.slane %v4449, 2
        %v4547 = vsel %vm761, %v4544, %v4546
        %v4548 = vrot.slane %v4450, 2
        %v4549 = vrot.slane %v4451, 2
        %v4550 = vsel %vm761, %v4548, %v4549
        %v4551 = vrot.slane %v4452, 2
        %v4552 = vsel %vm761, %v4549, %v4551
        %v4553 = vrot.slane %v4453, 2
        %v4554 = vrot.slane %v4454, 2
        %v4555 = vsel %vm761, %v4553, %v4554
        %v4556 = vrot.slane %v4455, 2
        %v4557 = vsel %vm761, %v4554, %v4556
        %v4558 = vrot.slane %v4456, 2
        %v4559 = vrot.slane %v4457, 2
        %v4560 = vsel %vm761, %v4558, %v4559
        %v4561 = vrot.slane %v4458, 2
        %v4562 = vsel %vm761, %v4559, %v4561
        %v4563 = vrot.slane %v4459, 2
        %v4564 = vrot.slane %v4460, 2
        %v4565 = vsel %vm761, %v4563, %v4564
        %v4566 = vrot.slane %v4461, 2
        %v4567 = vsel %vm761, %v4564, %v4566
        %v4568 = vrot.slane %v4462, 2
        %v4569 = vrot.slane %v4463, 2
        %v4570 = vsel %vm761, %v4568, %v4569
        %v4571 = vrot.slane %v4464, 2
        %v4572 = vsel %vm761, %v4569, %v4571
        %v4573 = vrot.slane %v4465, 2
        %v4574 = vrot.slane %v4466, 2
        %v4575 = vsel %vm761, %v4573, %v4574
        %v4576 = vrot.slane %v4467, 2
        %v4577 = vsel %vm761, %v4574, %v4576
        %v4578 = vrot.slane %v4468, 2
        %v4579 = vrot.slane %v4469, 2
        %v4580 = vsel %vm761, %v4578, %v4579
        %v4581 = vrot.slane %v4470, 2
        %v4582 = vsel %vm761, %v4579, %v4581
        %v4583 = vrot.slane %v4471, 2
        %v4584 = vrot.slane %v4472, 2
        %v4585 = vsel %vm761, %v4583, %v4584
        %v4586 = vrot.slane %v4473, 2
        %v4587 = vsel %vm761, %v4584, %v4586
        %v4588 = vrot.slane %v4474, 2
        %v4589 = vrot.slane %v4475, 2
        %v4590 = vsel %vm761, %v4588, %v4589
        %v4591 = vrot.slane %v4476, 2
        %v4592 = vsel %vm761, %v4589, %v4591
        %v4593 = vrot.slane %v4477, 2
        %v4594 = vrot.slane %v4478, 2
        %v4595 = vsel %vm761, %v4593, %v4594
        %v4596 = vrot.slane %v4479, 2
        %v4597 = vsel %vm761, %v4594, %v4596
        %v4598 = vrot.slane %v4480, 2
        %v4599 = vrot.slane %v4481, 2
        %v4600 = vsel %vm761, %v4598, %v4599
        %v4601 = vrot.slane %v4482, 2
        %v4602 = vsel %vm761, %v4599, %v4601
        %v4603 = vrot.slane %v4483, 2
        %v4604 = vrot.slane %v4484, 2
        %v4605 = vsel %vm761, %v4603, %v4604
        %v4606 = vrot.slane %v4485, 2
        %v4607 = vsel %vm761, %v4604, %v4606
        %v4608 = vrot.slane %v4486, 2
        %v4609 = vrot.slane %v4487, 2
        %v4610 = vsel %vm761, %v4608, %v4609
        %v4611 = vrot.slane %v4488, 2
        %v4612 = vsel %vm761, %v4609, %v4611
        %v4613 = vrot.slane %v4489, 2
        %v4614 = vrot.slane %v4490, 2
        %v4615 = vsel %vm761, %v4613, %v4614
        %v4616 = vrot.slane %v4491, 2
        %v4617 = vsel %vm761, %v4614, %v4616
        %v4618 = vrot.slane %v4492, 2
        %v4619 = vrot.slane %v4493, 2
        %v4620 = vsel %vm761, %v4618, %v4619
        %v4621 = vrot.slane %v4494, 2
        %v4622 = vsel %vm761, %v4619, %v4621
        %v4655 = vadd.f32 %v4414, %v4545
        %v4656 = vadd.f32 %v4415, %v4547
        %v4657 = vadd.f32 %v4416, %v4550
        %v4658 = vadd.f32 %v4417, %v4552
        %v4659 = vadd.f32 %v4418, %v4555
        %v4660 = vadd.f32 %v4419, %v4557
        %v4661 = vadd.f32 %v4420, %v4560
        %v4662 = vadd.f32 %v4421, %v4562
        %v4663 = vadd.f32 %v4422, %v4565
        %v4664 = vadd.f32 %v4423, %v4567
        %v4665 = vadd.f32 %v4424, %v4570
        %v4666 = vadd.f32 %v4425, %v4572
        %v4667 = vadd.f32 %v4426, %v4575
        %v4668 = vadd.f32 %v4427, %v4577
        %v4669 = vadd.f32 %v4428, %v4580
        %v4670 = vadd.f32 %v4429, %v4582
        %v4671 = vadd.f32 %v4430, %v4585
        %v4672 = vadd.f32 %v4431, %v4587
        %v4673 = vadd.f32 %v4432, %v4590
        %v4674 = vadd.f32 %v4433, %v4592
        %v4675 = vadd.f32 %v4434, %v4595
        %v4676 = vadd.f32 %v4435, %v4597
        %v4677 = vadd.f32 %v4436, %v4600
        %v4678 = vadd.f32 %v4437, %v4602
        %v4679 = vadd.f32 %v4438, %v4605
        %v4680 = vadd.f32 %v4439, %v4607
        %v4681 = vadd.f32 %v4440, %v4610
        %v4682 = vadd.f32 %v4441, %v4612
        %v4683 = vadd.f32 %v4442, %v4615
        %v4684 = vadd.f32 %v4443, %v4617
        %v4685 = vadd.f32 %v4444, %v4620
        %v4686 = vadd.f32 %v4445, %v4622
        %v4687 = vperm.slane %v183, 2
        %v4688 = vmul.f32 %v3545, %v4687
        %v4689 = vmul.f32 %v3546, %v4687
        %v4690 = vmul.f32 %v3548, %v4687
        %v4691 = vmul.f32 %v3549, %v4687
        %v4692 = vmul.f32 %v3551, %v4687
        %v4693 = vmul.f32 %v3552, %v4687
        %v4694 = vmul.f32 %v3554, %v4687
        %v4695 = vmul.f32 %v3555, %v4687
        %v4696 = vmul.f32 %v3557, %v4687
        %v4697 = vmul.f32 %v3558, %v4687
        %v4698 = vmul.f32 %v3560, %v4687
        %v4699 = vmul.f32 %v3561, %v4687
        %v4700 = vmul.f32 %v3563, %v4687
        %v4701 = vmul.f32 %v3564, %v4687
        %v4702 = vmul.f32 %v3566, %v4687
        %v4703 = vmul.f32 %v3567, %v4687
        %v4704 = vmul.f32 %v3569, %v4687
        %v4705 = vmul.f32 %v3570, %v4687
        %v4706 = vmul.f32 %v3572, %v4687
        %v4707 = vmul.f32 %v3573, %v4687
        %v4708 = vmul.f32 %v3575, %v4687
        %v4709 = vmul.f32 %v3576, %v4687
        %v4710 = vmul.f32 %v3578, %v4687
        %v4711 = vmul.f32 %v3579, %v4687
        %v4712 = vmul.f32 %v3581, %v4687
        %v4713 = vmul.f32 %v3582, %v4687
        %v4714 = vmul.f32 %v3584, %v4687
        %v4715 = vmul.f32 %v3585, %v4687
        %v4716 = vmul.f32 %v3587, %v4687
        %v4717 = vmul.f32 %v3588, %v4687
        %v4718 = vmul.f32 %v3590, %v4687
        %v4719 = vmul.f32 %v3591, %v4687
        %v4720 = vadd.f32 %v4655, %v4688
        %v4721 = vadd.f32 %v4656, %v4689
        %v4722 = vadd.f32 %v4657, %v4690
        %v4723 = vadd.f32 %v4658, %v4691
        %v4724 = vadd.f32 %v4659, %v4692
        %v4725 = vadd.f32 %v4660, %v4693
        %v4726 = vadd.f32 %v4661, %v4694
        %v4727 = vadd.f32 %v4662, %v4695
        %v4728 = vadd.f32 %v4663, %v4696
        %v4729 = vadd.f32 %v4664, %v4697
        %v4730 = vadd.f32 %v4665, %v4698
        %v4731 = vadd.f32 %v4666, %v4699
        %v4732 = vadd.f32 %v4667, %v4700
        %v4733 = vadd.f32 %v4668, %v4701
        %v4734 = vadd.f32 %v4669, %v4702
        %v4735 = vadd.f32 %v4670, %v4703
        %v4736 = vadd.f32 %v4671, %v4704
        %v4737 = vadd.f32 %v4672, %v4705
        %v4738 = vadd.f32 %v4673, %v4706
        %v4739 = vadd.f32 %v4674, %v4707
        %v4740 = vadd.f32 %v4675, %v4708
        %v4741 = vadd.f32 %v4676, %v4709
        %v4742 = vadd.f32 %v4677, %v4710
        %v4743 = vadd.f32 %v4678, %v4711
        %v4744 = vadd.f32 %v4679, %v4712
        %v4745 = vadd.f32 %v4680, %v4713
        %v4746 = vadd.f32 %v4681, %v4714
        %v4747 = vadd.f32 %v4682, %v4715
        %v4748 = vadd.f32 %v4683, %v4716
        %v4749 = vadd.f32 %v4684, %v4717
        %v4750 = vadd.f32 %v4685, %v4718
        %v4751 = vadd.f32 %v4686, %v4719
        %v4752 = vperm.slane %v183, 3
        %v4753 = vmul.f32 %v3545, %v4752
        %v4754 = vmul.f32 %v3546, %v4752
        %v4755 = vmul.f32 %v3547, %v4752
        %v4756 = vmul.f32 %v3548, %v4752
        %v4757 = vmul.f32 %v3549, %v4752
        %v4758 = vmul.f32 %v3550, %v4752
        %v4759 = vmul.f32 %v3551, %v4752
        %v4760 = vmul.f32 %v3552, %v4752
        %v4761 = vmul.f32 %v3553, %v4752
        %v4762 = vmul.f32 %v3554, %v4752
        %v4763 = vmul.f32 %v3555, %v4752
        %v4764 = vmul.f32 %v3556, %v4752
        %v4765 = vmul.f32 %v3557, %v4752
        %v4766 = vmul.f32 %v3558, %v4752
        %v4767 = vmul.f32 %v3559, %v4752
        %v4768 = vmul.f32 %v3560, %v4752
        %v4769 = vmul.f32 %v3561, %v4752
        %v4770 = vmul.f32 %v3562, %v4752
        %v4771 = vmul.f32 %v3563, %v4752
        %v4772 = vmul.f32 %v3564, %v4752
        %v4773 = vmul.f32 %v3565, %v4752
        %v4774 = vmul.f32 %v3566, %v4752
        %v4775 = vmul.f32 %v3567, %v4752
        %v4776 = vmul.f32 %v3568, %v4752
        %v4777 = vmul.f32 %v3569, %v4752
        %v4778 = vmul.f32 %v3570, %v4752
        %v4779 = vmul.f32 %v3571, %v4752
        %v4780 = vmul.f32 %v3572, %v4752
        %v4781 = vmul.f32 %v3573, %v4752
        %v4782 = vmul.f32 %v3574, %v4752
        %v4783 = vmul.f32 %v3575, %v4752
        %v4784 = vmul.f32 %v3576, %v4752
        %v4785 = vmul.f32 %v3577, %v4752
        %v4786 = vmul.f32 %v3578, %v4752
        %v4787 = vmul.f32 %v3579, %v4752
        %v4788 = vmul.f32 %v3580, %v4752
        %v4789 = vmul.f32 %v3581, %v4752
        %v4790 = vmul.f32 %v3582, %v4752
        %v4791 = vmul.f32 %v3583, %v4752
        %v4792 = vmul.f32 %v3584, %v4752
        %v4793 = vmul.f32 %v3585, %v4752
        %v4794 = vmul.f32 %v3586, %v4752
        %v4795 = vmul.f32 %v3587, %v4752
        %v4796 = vmul.f32 %v3588, %v4752
        %v4797 = vmul.f32 %v3589, %v4752
        %v4798 = vmul.f32 %v3590, %v4752
        %v4799 = vmul.f32 %v3591, %v4752
        %v4800 = vmul.f32 %v3592, %v4752
        %v4849 = vrot.slane %v4753, 1
        %v4850 = vrot.slane %v4754, 1
        %v4851 = vsel %vm519, %v4849, %v4850
        %v4852 = vrot.slane %v4755, 1
        %v4853 = vsel %vm519, %v4850, %v4852
        %v4854 = vrot.slane %v4756, 1
        %v4855 = vrot.slane %v4757, 1
        %v4856 = vsel %vm519, %v4854, %v4855
        %v4857 = vrot.slane %v4758, 1
        %v4858 = vsel %vm519, %v4855, %v4857
        %v4859 = vrot.slane %v4759, 1
        %v4860 = vrot.slane %v4760, 1
        %v4861 = vsel %vm519, %v4859, %v4860
        %v4862 = vrot.slane %v4761, 1
        %v4863 = vsel %vm519, %v4860, %v4862
        %v4864 = vrot.slane %v4762, 1
        %v4865 = vrot.slane %v4763, 1
        %v4866 = vsel %vm519, %v4864, %v4865
        %v4867 = vrot.slane %v4764, 1
        %v4868 = vsel %vm519, %v4865, %v4867
        %v4869 = vrot.slane %v4765, 1
        %v4870 = vrot.slane %v4766, 1
        %v4871 = vsel %vm519, %v4869, %v4870
        %v4872 = vrot.slane %v4767, 1
        %v4873 = vsel %vm519, %v4870, %v4872
        %v4874 = vrot.slane %v4768, 1
        %v4875 = vrot.slane %v4769, 1
        %v4876 = vsel %vm519, %v4874, %v4875
        %v4877 = vrot.slane %v4770, 1
        %v4878 = vsel %vm519, %v4875, %v4877
        %v4879 = vrot.slane %v4771, 1
        %v4880 = vrot.slane %v4772, 1
        %v4881 = vsel %vm519, %v4879, %v4880
        %v4882 = vrot.slane %v4773, 1
        %v4883 = vsel %vm519, %v4880, %v4882
        %v4884 = vrot.slane %v4774, 1
        %v4885 = vrot.slane %v4775, 1
        %v4886 = vsel %vm519, %v4884, %v4885
        %v4887 = vrot.slane %v4776, 1
        %v4888 = vsel %vm519, %v4885, %v4887
        %v4889 = vrot.slane %v4777, 1
        %v4890 = vrot.slane %v4778, 1
        %v4891 = vsel %vm519, %v4889, %v4890
        %v4892 = vrot.slane %v4779, 1
        %v4893 = vsel %vm519, %v4890, %v4892
        %v4894 = vrot.slane %v4780, 1
        %v4895 = vrot.slane %v4781, 1
        %v4896 = vsel %vm519, %v4894, %v4895
        %v4897 = vrot.slane %v4782, 1
        %v4898 = vsel %vm519, %v4895, %v4897
        %v4899 = vrot.slane %v4783, 1
        %v4900 = vrot.slane %v4784, 1
        %v4901 = vsel %vm519, %v4899, %v4900
        %v4902 = vrot.slane %v4785, 1
        %v4903 = vsel %vm519, %v4900, %v4902
        %v4904 = vrot.slane %v4786, 1
        %v4905 = vrot.slane %v4787, 1
        %v4906 = vsel %vm519, %v4904, %v4905
        %v4907 = vrot.slane %v4788, 1
        %v4908 = vsel %vm519, %v4905, %v4907
        %v4909 = vrot.slane %v4789, 1
        %v4910 = vrot.slane %v4790, 1
        %v4911 = vsel %vm519, %v4909, %v4910
        %v4912 = vrot.slane %v4791, 1
        %v4913 = vsel %vm519, %v4910, %v4912
        %v4914 = vrot.slane %v4792, 1
        %v4915 = vrot.slane %v4793, 1
        %v4916 = vsel %vm519, %v4914, %v4915
        %v4917 = vrot.slane %v4794, 1
        %v4918 = vsel %vm519, %v4915, %v4917
        %v4919 = vrot.slane %v4795, 1
        %v4920 = vrot.slane %v4796, 1
        %v4921 = vsel %vm519, %v4919, %v4920
        %v4922 = vrot.slane %v4797, 1
        %v4923 = vsel %vm519, %v4920, %v4922
        %v4924 = vrot.slane %v4798, 1
        %v4925 = vrot.slane %v4799, 1
        %v4926 = vsel %vm519, %v4924, %v4925
        %v4927 = vrot.slane %v4800, 1
        %v4928 = vsel %vm519, %v4925, %v4927
        %v4961 = vadd.f32 %v4720, %v4851
        %v4962 = vadd.f32 %v4721, %v4853
        %v4963 = vadd.f32 %v4722, %v4856
        %v4964 = vadd.f32 %v4723, %v4858
        %v4965 = vadd.f32 %v4724, %v4861
        %v4966 = vadd.f32 %v4725, %v4863
        %v4967 = vadd.f32 %v4726, %v4866
        %v4968 = vadd.f32 %v4727, %v4868
        %v4969 = vadd.f32 %v4728, %v4871
        %v4970 = vadd.f32 %v4729, %v4873
        %v4971 = vadd.f32 %v4730, %v4876
        %v4972 = vadd.f32 %v4731, %v4878
        %v4973 = vadd.f32 %v4732, %v4881
        %v4974 = vadd.f32 %v4733, %v4883
        %v4975 = vadd.f32 %v4734, %v4886
        %v4976 = vadd.f32 %v4735, %v4888
        %v4977 = vadd.f32 %v4736, %v4891
        %v4978 = vadd.f32 %v4737, %v4893
        %v4979 = vadd.f32 %v4738, %v4896
        %v4980 = vadd.f32 %v4739, %v4898
        %v4981 = vadd.f32 %v4740, %v4901
        %v4982 = vadd.f32 %v4741, %v4903
        %v4983 = vadd.f32 %v4742, %v4906
        %v4984 = vadd.f32 %v4743, %v4908
        %v4985 = vadd.f32 %v4744, %v4911
        %v4986 = vadd.f32 %v4745, %v4913
        %v4987 = vadd.f32 %v4746, %v4916
        %v4988 = vadd.f32 %v4747, %v4918
        %v4989 = vadd.f32 %v4748, %v4921
        %v4990 = vadd.f32 %v4749, %v4923
        %v4991 = vadd.f32 %v4750, %v4926
        %v4992 = vadd.f32 %v4751, %v4928
        %v4993 = vperm.slane %v183, 4
        %v4994 = vmul.f32 %v3545, %v4993
        %v4995 = vmul.f32 %v3546, %v4993
        %v4996 = vmul.f32 %v3547, %v4993
        %v4997 = vmul.f32 %v3548, %v4993
        %v4998 = vmul.f32 %v3549, %v4993
        %v4999 = vmul.f32 %v3550, %v4993
        %v5000 = vmul.f32 %v3551, %v4993
        %v5001 = vmul.f32 %v3552, %v4993
        %v5002 = vmul.f32 %v3553, %v4993
        %v5003 = vmul.f32 %v3554, %v4993
        %v5004 = vmul.f32 %v3555, %v4993
        %v5005 = vmul.f32 %v3556, %v4993
        %v5006 = vmul.f32 %v3557, %v4993
        %v5007 = vmul.f32 %v3558, %v4993
        %v5008 = vmul.f32 %v3559, %v4993
        %v5009 = vmul.f32 %v3560, %v4993
        %v5010 = vmul.f32 %v3561, %v4993
        %v5011 = vmul.f32 %v3562, %v4993
        %v5012 = vmul.f32 %v3563, %v4993
        %v5013 = vmul.f32 %v3564, %v4993
        %v5014 = vmul.f32 %v3565, %v4993
        %v5015 = vmul.f32 %v3566, %v4993
        %v5016 = vmul.f32 %v3567, %v4993
        %v5017 = vmul.f32 %v3568, %v4993
        %v5018 = vmul.f32 %v3569, %v4993
        %v5019 = vmul.f32 %v3570, %v4993
        %v5020 = vmul.f32 %v3571, %v4993
        %v5021 = vmul.f32 %v3572, %v4993
        %v5022 = vmul.f32 %v3573, %v4993
        %v5023 = vmul.f32 %v3574, %v4993
        %v5024 = vmul.f32 %v3575, %v4993
        %v5025 = vmul.f32 %v3576, %v4993
        %v5026 = vmul.f32 %v3577, %v4993
        %v5027 = vmul.f32 %v3578, %v4993
        %v5028 = vmul.f32 %v3579, %v4993
        %v5029 = vmul.f32 %v3580, %v4993
        %v5030 = vmul.f32 %v3581, %v4993
        %v5031 = vmul.f32 %v3582, %v4993
        %v5032 = vmul.f32 %v3583, %v4993
        %v5033 = vmul.f32 %v3584, %v4993
        %v5034 = vmul.f32 %v3585, %v4993
        %v5035 = vmul.f32 %v3586, %v4993
        %v5036 = vmul.f32 %v3587, %v4993
        %v5037 = vmul.f32 %v3588, %v4993
        %v5038 = vmul.f32 %v3589, %v4993
        %v5039 = vmul.f32 %v3590, %v4993
        %v5040 = vmul.f32 %v3591, %v4993
        %v5041 = vmul.f32 %v3592, %v4993
        %v5090 = vrot.slane %v4994, 2
        %v5091 = vrot.slane %v4995, 2
        %v5092 = vsel %vm761, %v5090, %v5091
        %v5093 = vrot.slane %v4996, 2
        %v5094 = vsel %vm761, %v5091, %v5093
        %v5095 = vrot.slane %v4997, 2
        %v5096 = vrot.slane %v4998, 2
        %v5097 = vsel %vm761, %v5095, %v5096
        %v5098 = vrot.slane %v4999, 2
        %v5099 = vsel %vm761, %v5096, %v5098
        %v5100 = vrot.slane %v5000, 2
        %v5101 = vrot.slane %v5001, 2
        %v5102 = vsel %vm761, %v5100, %v5101
        %v5103 = vrot.slane %v5002, 2
        %v5104 = vsel %vm761, %v5101, %v5103
        %v5105 = vrot.slane %v5003, 2
        %v5106 = vrot.slane %v5004, 2
        %v5107 = vsel %vm761, %v5105, %v5106
        %v5108 = vrot.slane %v5005, 2
        %v5109 = vsel %vm761, %v5106, %v5108
        %v5110 = vrot.slane %v5006, 2
        %v5111 = vrot.slane %v5007, 2
        %v5112 = vsel %vm761, %v5110, %v5111
        %v5113 = vrot.slane %v5008, 2
        %v5114 = vsel %vm761, %v5111, %v5113
        %v5115 = vrot.slane %v5009, 2
        %v5116 = vrot.slane %v5010, 2
        %v5117 = vsel %vm761, %v5115, %v5116
        %v5118 = vrot.slane %v5011, 2
        %v5119 = vsel %vm761, %v5116, %v5118
        %v5120 = vrot.slane %v5012, 2
        %v5121 = vrot.slane %v5013, 2
        %v5122 = vsel %vm761, %v5120, %v5121
        %v5123 = vrot.slane %v5014, 2
        %v5124 = vsel %vm761, %v5121, %v5123
        %v5125 = vrot.slane %v5015, 2
        %v5126 = vrot.slane %v5016, 2
        %v5127 = vsel %vm761, %v5125, %v5126
        %v5128 = vrot.slane %v5017, 2
        %v5129 = vsel %vm761, %v5126, %v5128
        %v5130 = vrot.slane %v5018, 2
        %v5131 = vrot.slane %v5019, 2
        %v5132 = vsel %vm761, %v5130, %v5131
        %v5133 = vrot.slane %v5020, 2
        %v5134 = vsel %vm761, %v5131, %v5133
        %v5135 = vrot.slane %v5021, 2
        %v5136 = vrot.slane %v5022, 2
        %v5137 = vsel %vm761, %v5135, %v5136
        %v5138 = vrot.slane %v5023, 2
        %v5139 = vsel %vm761, %v5136, %v5138
        %v5140 = vrot.slane %v5024, 2
        %v5141 = vrot.slane %v5025, 2
        %v5142 = vsel %vm761, %v5140, %v5141
        %v5143 = vrot.slane %v5026, 2
        %v5144 = vsel %vm761, %v5141, %v5143
        %v5145 = vrot.slane %v5027, 2
        %v5146 = vrot.slane %v5028, 2
        %v5147 = vsel %vm761, %v5145, %v5146
        %v5148 = vrot.slane %v5029, 2
        %v5149 = vsel %vm761, %v5146, %v5148
        %v5150 = vrot.slane %v5030, 2
        %v5151 = vrot.slane %v5031, 2
        %v5152 = vsel %vm761, %v5150, %v5151
        %v5153 = vrot.slane %v5032, 2
        %v5154 = vsel %vm761, %v5151, %v5153
        %v5155 = vrot.slane %v5033, 2
        %v5156 = vrot.slane %v5034, 2
        %v5157 = vsel %vm761, %v5155, %v5156
        %v5158 = vrot.slane %v5035, 2
        %v5159 = vsel %vm761, %v5156, %v5158
        %v5160 = vrot.slane %v5036, 2
        %v5161 = vrot.slane %v5037, 2
        %v5162 = vsel %vm761, %v5160, %v5161
        %v5163 = vrot.slane %v5038, 2
        %v5164 = vsel %vm761, %v5161, %v5163
        %v5165 = vrot.slane %v5039, 2
        %v5166 = vrot.slane %v5040, 2
        %v5167 = vsel %vm761, %v5165, %v5166
        %v5168 = vrot.slane %v5041, 2
        %v5169 = vsel %vm761, %v5166, %v5168
        %v5202 = vadd.f32 %v4961, %v5092
        %v5203 = vadd.f32 %v4962, %v5094
        %v5204 = vadd.f32 %v4963, %v5097
        %v5205 = vadd.f32 %v4964, %v5099
        %v5206 = vadd.f32 %v4965, %v5102
        %v5207 = vadd.f32 %v4966, %v5104
        %v5208 = vadd.f32 %v4967, %v5107
        %v5209 = vadd.f32 %v4968, %v5109
        %v5210 = vadd.f32 %v4969, %v5112
        %v5211 = vadd.f32 %v4970, %v5114
        %v5212 = vadd.f32 %v4971, %v5117
        %v5213 = vadd.f32 %v4972, %v5119
        %v5214 = vadd.f32 %v4973, %v5122
        %v5215 = vadd.f32 %v4974, %v5124
        %v5216 = vadd.f32 %v4975, %v5127
        %v5217 = vadd.f32 %v4976, %v5129
        %v5218 = vadd.f32 %v4977, %v5132
        %v5219 = vadd.f32 %v4978, %v5134
        %v5220 = vadd.f32 %v4979, %v5137
        %v5221 = vadd.f32 %v4980, %v5139
        %v5222 = vadd.f32 %v4981, %v5142
        %v5223 = vadd.f32 %v4982, %v5144
        %v5224 = vadd.f32 %v4983, %v5147
        %v5225 = vadd.f32 %v4984, %v5149
        %v5226 = vadd.f32 %v4985, %v5152
        %v5227 = vadd.f32 %v4986, %v5154
        %v5228 = vadd.f32 %v4987, %v5157
        %v5229 = vadd.f32 %v4988, %v5159
        %v5230 = vadd.f32 %v4989, %v5162
        %v5231 = vadd.f32 %v4990, %v5164
        %v5232 = vadd.f32 %v4991, %v5167
        %v5233 = vadd.f32 %v4992, %v5169
        %v5234 = vperm.slane %v183, 5
        %v5235 = vadd.f32 %v5202, %v5234
        %v5236 = vadd.f32 %v5203, %v5234
        %v5237 = vadd.f32 %v5204, %v5234
        %v5238 = vadd.f32 %v5205, %v5234
        %v5239 = vadd.f32 %v5206, %v5234
        %v5240 = vadd.f32 %v5207, %v5234
        %v5241 = vadd.f32 %v5208, %v5234
        %v5242 = vadd.f32 %v5209, %v5234
        %v5243 = vadd.f32 %v5210, %v5234
        %v5244 = vadd.f32 %v5211, %v5234
        %v5245 = vadd.f32 %v5212, %v5234
        %v5246 = vadd.f32 %v5213, %v5234
        %v5247 = vadd.f32 %v5214, %v5234
        %v5248 = vadd.f32 %v5215, %v5234
        %v5249 = vadd.f32 %v5216, %v5234
        %v5250 = vadd.f32 %v5217, %v5234
        %v5251 = vadd.f32 %v5218, %v5234
        %v5252 = vadd.f32 %v5219, %v5234
        %v5253 = vadd.f32 %v5220, %v5234
        %v5254 = vadd.f32 %v5221, %v5234
        %v5255 = vadd.f32 %v5222, %v5234
        %v5256 = vadd.f32 %v5223, %v5234
        %v5257 = vadd.f32 %v5224, %v5234
        %v5258 = vadd.f32 %v5225, %v5234
        %v5259 = vadd.f32 %v5226, %v5234
        %v5260 = vadd.f32 %v5227, %v5234
        %v5261 = vadd.f32 %v5228, %v5234
        %v5262 = vadd.f32 %v5229, %v5234
        %v5263 = vadd.f32 %v5230, %v5234
        %v5264 = vadd.f32 %v5231, %v5234
        %v5265 = vadd.f32 %v5232, %v5234
        %v5266 = vadd.f32 %v5233, %v5234
        %5267 = vst [vmem:[%s180] sm:$0xff] %v5235
        %5268 = vst [vmem:[%s180 + $0x8] sm:$0xff] %v5236
        %5269 = vst [vmem:[%s180 + $0x10] sm:$0xff] %v5237
        %5270 = vst [vmem:[%s180 + $0x18] sm:$0xff] %v5238
        %5271 = vst [vmem:[%s180 + $0x20] sm:$0xff] %v5239
        %5272 = vst [vmem:[%s180 + $0x28] sm:$0xff] %v5240
        %5273 = vst [vmem:[%s180 + $0x30] sm:$0xff] %v5241
        %5274 = vst [vmem:[%s180 + $0x38] sm:$0xff] %v5242
        %5275 = vst [vmem:[%s180 + $0x40] sm:$0xff] %v5243
        %5276 = vst [vmem:[%s180 + $0x48] sm:$0xff] %v5244
        %5277 = vst [vmem:[%s180 + $0x50] sm:$0xff] %v5245
        %5278 = vst [vmem:[%s180 + $0x58] sm:$0xff] %v5246
        %5279 = vst [vmem:[%s180 + $0x60] sm:$0xff] %v5247
        %5280 = vst [vmem:[%s180 + $0x68] sm:$0xff] %v5248
        %5281 = vst [vmem:[%s180 + $0x70] sm:$0xff] %v5249
        %5282 = vst [vmem:[%s180 + $0x78] sm:$0xff] %v5250
        %5283 = vst [vmem:[%s180 + $0x80] sm:$0xff] %v5251
        %5284 = vst [vmem:[%s180 + $0x88] sm:$0xff] %v5252
        %5285 = vst [vmem:[%s180 + $0x90] sm:$0xff] %v5253
        %5286 = vst [vmem:[%s180 + $0x98] sm:$0xff] %v5254
        %5287 = vst [vmem:[%s180 + $0xa0] sm:$0xff] %v5255
        %5288 = vst [vmem:[%s180 + $0xa8] sm:$0xff] %v5256
        %5289 = vst [vmem:[%s180 + $0xb0] sm:$0xff] %v5257
        %5290 = vst [vmem:[%s180 + $0xb8] sm:$0xff] %v5258
        %5291 = vst [vmem:[%s180 + $0xc0] sm:$0xff] %v5259
        %5292 = vst [vmem:[%s180 + $0xc8] sm:$0xff] %v5260
        %5293 = vst [vmem:[%s180 + $0xd0] sm:$0xff] %v5261
        %5294 = vst [vmem:[%s180 + $0xd8] sm:$0xff] %v5262
        %5295 = vst [vmem:[%s180 + $0xe0] sm:$0xff] %v5263
        %5296 = vst [vmem:[%s180 + $0xe8] sm:$0xff] %v5264
        %5297 = vst [vmem:[%s180 + $0xf0] sm:$0xff] %v5265
        %5298 = vst [vmem:[%s180 + $0xf8] sm:$0xff] %v5266
        %s5299 = sand.u32 %s75, 1
        %s5300 = scalar_lea.sflag [#allocation5], %s5299
        %s5301 = sand.u32 %s75, 1
        %s5302 = smul.addr %s5301, 256
        %s5303 = scalar_lea.vmem [#allocation8], %s5302
        // Predicated region
        $region37: #{tpu_custom_call.1} parent=27 // pred_check
          %p5304 = pneg %p85
        $region38: #{tpu_custom_call.1} parent=27 // pred_check_branch
          %5306 = sbr.rel (%p5304) target = $region40
        $region39: #{tpu_custom_call.1} parent=27 // pred_region
          %5308 = vsyncadd %s5300, 0
          %s5309 = smul.addr %s20, 32
          %s5310 = smul.addr %s5309, 8
          %s5311 = scalar_lea.hbm %s2, %s5310
          %s5312 = sshll.u32 %s5303, 4
          %s5313 = int_to_ptr.vmem [resolvable:$true] %s5312
          %s5314 = sshll.u32 %s5311, 4
          %s5315 = int_to_ptr.hbm [resolvable:$true] %s5314
          %5320 = dma.vmem_to_hbm [thread:$0]  %s5313, 4096, %s5315, %s5300, 128, 128, 8
        $region40: #{tpu_custom_call.1} parent=27 // pred_fallthru
          _
      $region28: #{tpu_custom_call.1} parent=5 // pred_fallthru
        _
      %p5321 = scmp.le.s32.totalorder 2, %s15
      // Predicated region
      $region41: #{tpu_custom_call.1} parent=5 // pred_check
        %p5322 = pneg %p5321
      $region42: #{tpu_custom_call.1} parent=5 // pred_check_branch
        %5324 = sbr.rel (%p5322) target = $region44
      $region43: #{tpu_custom_call.1} parent=5 // pred_region
        %s5325 = ssub.s32 %s15, 2
        // Predicated region
        $region45: #{tpu_custom_call.1} parent=43 // pred_check
          %p5326 = pneg %p91
        $region46: #{tpu_custom_call.1} parent=43 // pred_check_branch
          %5328 = sbr.rel (%p5326) target = $region48
        $region47: #{tpu_custom_call.1} parent=43 // pred_region
          %s5329 = sand.u32 %s76, 1
          %s5330 = scalar_lea.sflag [#allocation5], %s5329
          %s5331 = sand.u32 %s76, 1
          %s5332 = smul.addr %s5331, 256
          %s5333 = scalar_lea.vmem [#allocation8], %s5332
          %5335 = dma.done %s5330, 4096
        $region48: #{tpu_custom_call.1} parent=43 // pred_fallthru
          _
      $region44: #{tpu_custom_call.1} parent=5 // pred_fallthru
        _
    $region6: #{tpu_custom_call.1} parent=1 // loop_footer
      %s19 = sadd.s32 1, %s15
    $region7: #{tpu_custom_call.1} parent=1 // loop_footer_branch
      %14 = sbr.rel target = $region3
    $region8: #{tpu_custom_call.1} parent=1 // loop_exit
      _
    %5336 = vsyncpa [#allocation4], 1
    %s5337 = scalar_lea.sflag [#allocation4], 1
    %5338 = vsyncpa %s5337, 1
    %5339 = vsyncpa [#allocation7], 1
    %5340 = vsyncpa [#allocation5], 1
    %s5341 = scalar_lea.sflag [#allocation5], 1
    %5342 = vsyncpa %s5341, 1

</llo_original>
